<compile_context>
chip_gen: v6e
topology: v6e:2x2x1
jax: 0.10.0
libtpu: 0.0.40
codegen_flags: <defaults>
</compile_context>

<pallas_src>
import functools

import jax
import jax.numpy as jnp
from jax.experimental import pallas as pl
from jax.experimental.pallas import tpu as pltpu


def _round_up(x, m):
    return (x + m - 1) // m * m


def _conv_block_kernel(x_ref, w1_ref, b1_ref, w2_ref, b2_ref, m1_ref, *rest,
                       wp, s_mid, apply_dropout):
    """One image: y = drop(relu(conv2(drop(relu(conv1(x)+b1)))+b2)).

    x_ref  : (1, C_in_p, S_in)    halo-padded input, flat raster shifted by wp+1
    w*_ref : (9, C_out_p, C_in_p) one (C_out, C_in) slab per tap t = di*3+dj
    b*_ref : (C_p, 1)
    m1_ref : (1, {1|C_mid_p}, s_mid)  validity (and dropout) scale for the mid act
    m2_ref : (1, C_out_p, l_pad)      dropout scale for the output (training only)
    o_ref  : (1, C_out_p, l_pad)      wide raster, l = H * (W + 2)
    """
    if apply_dropout:
        m2_ref, o_ref = rest
    else:
        (o_ref,) = rest
        m2_ref = None

    c_mid_p = w1_ref.shape[1]
    c_out_p = o_ref.shape[1]
    l_pad = o_ref.shape[2]

    x = x_ref[0]                                           # (C_in_p, S_in)

    # conv1: produced directly in the halo-padded flat layout of the mid act.
    acc1 = jnp.zeros((c_mid_p, s_mid), jnp.float32)
    for di in range(3):
        for dj in range(3):
            off = di * wp + dj                             # static lane shift
            acc1 = acc1 + jnp.dot(w1_ref[di * 3 + dj], x[:, off:off + s_mid],
                                  preferred_element_type=jnp.float32)
    # bias + ReLU, then zero the halo/junk positions (and apply dropout in
    # training) via one fused multiply -> valid zero-padded input for conv2.
    mid = jnp.maximum(acc1 + b1_ref[...], 0.0) * m1_ref[0]
    mid = mid.astype(x.dtype)

    # conv2: wide raster output (junk columns sliced off by the wrapper).
    acc2 = jnp.zeros((c_out_p, l_pad), jnp.float32)
    for di in range(3):
        for dj in range(3):
            off = di * wp + dj
            acc2 = acc2 + jnp.dot(w2_ref[di * 3 + dj], mid[:, off:off + l_pad],
                                  preferred_element_type=jnp.float32)
    y = jnp.maximum(acc2 + b2_ref[...], 0.0)
    if apply_dropout:
        y = y * m2_ref[0]
    o_ref[0] = y.astype(o_ref.dtype)


def conv_block_forward(x, w1, b1, w2, b2, *, dropout_rate=0.5, training=False,
                       seed=0):
    """Forward of conv_block_: (Conv3x3 s1 p1 + bias -> ReLU -> Dropout) x 2, NCHW."""
    n, c_in, h, w = x.shape
    c_mid = w1.shape[0]
    c_out = w2.shape[0]
    assert w1.shape == (c_mid, c_in, 3, 3)
    assert w2.shape == (c_out, c_mid, 3, 3)

    wp, hp = w + 2, h + 2
    c_in_p = _round_up(c_in, 8)
    c_mid_p = _round_up(c_mid, 8)
    c_out_p = _round_up(c_out, 8)

    l = h * wp                                   # wide-raster output length
    l_pad = _round_up(l, 128)                    # lane-dense output width
    s_mid = _round_up(l_pad + 2 * wp + 2, 128)   # mid act (padded-flat layout)
    s_in = _round_up(s_mid + 2 * wp + 2, 128)    # input (front-shifted by wp+1)

    dtype = x.dtype

    # Glue: halo pad + channel pad + flatten + front shift of wp+1 lanes.
    x_p = jnp.pad(x, ((0, 0), (0, c_in_p - c_in), (1, 1), (1, 1)))
    x_flat = x_p.reshape(n, c_in_p, hp * wp)
    x_ext = jnp.pad(x_flat, ((0, 0), (0, 0), (wp + 1, s_in - hp * wp - (wp + 1))))

    # (C_out, C_in, 3, 3) -> (9, C_out_p, C_in_p), tap index t = di*3 + dj.
    def taps(wgt, co, ci, co_p, ci_p):
        t = jnp.transpose(wgt, (2, 3, 0, 1)).reshape(9, co, ci)
        return jnp.pad(t, ((0, 0), (0, co_p - co), (0, ci_p - ci)))

    w1_taps = taps(w1, c_mid, c_in, c_mid_p, c_in_p)
    w2_taps = taps(w2, c_out, c_mid, c_out_p, c_mid_p)
    b1_col = jnp.pad(b1, (0, c_mid_p - c_mid)).reshape(c_mid_p, 1)
    b2_col = jnp.pad(b2, (0, c_out_p - c_out)).reshape(c_out_p, 1)

    # Validity mask for the mid activation (zeros at halo / padding positions).
    k = jnp.arange(s_mid)
    r, c = k // wp, k % wp
    valid = ((r >= 1) & (r <= h) & (c >= 1) & (c <= w)).astype(dtype)

    apply_dropout = bool(training) and float(dropout_rate) > 0.0
    rate = float(dropout_rate)

    if apply_dropout:
        # TODO(synk): dropout masks are drawn with jax.random (not PyTorch's RNG
        # stream), so training mode cannot bit-match torch; semantics match.
        key1, key2 = jax.random.split(jax.random.PRNGKey(seed))
        scale = jnp.asarray(1.0 / (1.0 - rate), dtype)
        keep1 = jax.random.bernoulli(key1, 1.0 - rate, (n, c_mid_p, s_mid))
        keep2 = jax.random.bernoulli(key2, 1.0 - rate, (n, c_out_p, l_pad))
        m1 = valid[None, None, :] * keep1.astype(dtype) * scale
        m2 = keep2.astype(dtype) * scale
        mask_inputs = (m1, m2)
        mask_specs = [
            pl.BlockSpec((1, c_mid_p, s_mid), lambda i: (i, 0, 0)),
            pl.BlockSpec((1, c_out_p, l_pad), lambda i: (i, 0, 0)),
        ]
    else:
        m1 = valid.reshape(1, 1, s_mid)
        mask_inputs = (m1,)
        mask_specs = [pl.BlockSpec((1, 1, s_mid), lambda i: (0, 0, 0))]

    kernel = functools.partial(_conv_block_kernel, wp=wp, s_mid=s_mid,
                               apply_dropout=apply_dropout)

    flops = 2 * n * 9 * (s_mid * c_mid_p * c_in_p + l_pad * c_out_p * c_mid_p)
    bytes_accessed = 4 * (n * c_in_p * s_in + n * c_out_p * l_pad
                          + 9 * (c_mid_p * c_in_p + c_out_p * c_mid_p)
                          + c_mid_p + c_out_p
                          + sum(int(m.size) for m in mask_inputs))

    y_wide = pl.pallas_call(
        kernel,
        out_shape=jax.ShapeDtypeStruct((n, c_out_p, l_pad), dtype),
        grid=(n,),
        in_specs=[
            pl.BlockSpec((1, c_in_p, s_in), lambda i: (i, 0, 0)),
            pl.BlockSpec((9, c_mid_p, c_in_p), lambda i: (0, 0, 0)),
            pl.BlockSpec((c_mid_p, 1), lambda i: (0, 0)),
            pl.BlockSpec((9, c_out_p, c_mid_p), lambda i: (0, 0, 0)),
            pl.BlockSpec((c_out_p, 1), lambda i: (0, 0)),
            *mask_specs,
        ],
        out_specs=pl.BlockSpec((1, c_out_p, l_pad), lambda i: (i, 0, 0)),
        compiler_params=pltpu.CompilerParams(
            dimension_semantics=("parallel",)),
        cost_estimate=pl.CostEstimate(flops=flops, transcendentals=0,
                                      bytes_accessed=bytes_accessed),
    )(x_ext, w1_taps, b1_col, w2_taps, b2_col, *mask_inputs)

    # Glue: drop channel / lane padding and the 2 junk columns per raster row.
    y = y_wide[:, :c_out, :l].reshape(n, c_out, h, wp)[:, :, :, :w]
    return y


def conv_block_reference(x, w1, b1, w2, b2):
    """Pure-jnp reference of the eval-mode forward (dropout == identity)."""
    def conv_relu(x, w, b):
        n, c, h, wd = x.shape
        xp = jnp.pad(x, ((0, 0), (0, 0), (1, 1), (1, 1)))
        y = jnp.zeros((n, w.shape[0], h, wd), jnp.float32)
        for di in range(3):
            for dj in range(3):
                y = y + jnp.einsum('nchw,oc->nohw',
                                   xp[:, :, di:di + h, dj:dj + wd],
                                   w[:, :, di, dj])
        return jnp.maximum(y + b[None, :, None, None], 0.0)
    return conv_relu(conv_relu(x, w1, b1), w2, b2)


if __name__ == "__main__":
    key = jax.random.PRNGKey(0)
    k_x, k_w1, k_b1, k_w2, k_b2 = jax.random.split(key, 5)

    N, in_ch, out_ch, H, W = 2, 4, 8, 16, 16

    x = jax.random.normal(k_x, (N, in_ch, H, W), dtype=jnp.float32)
    bound1 = 1.0 / (in_ch * 9) ** 0.5
    w1 = jax.random.uniform(k_w1, (out_ch, in_ch, 3, 3),
                            minval=-bound1, maxval=bound1, dtype=jnp.float32)
    b1 = jax.random.uniform(k_b1, (out_ch,),
                            minval=-bound1, maxval=bound1, dtype=jnp.float32)
    bound2 = 1.0 / (out_ch * 9) ** 0.5
    w2 = jax.random.uniform(k_w2, (out_ch, out_ch, 3, 3),
                            minval=-bound2, maxval=bound2, dtype=jnp.float32)
    b2 = jax.random.uniform(k_b2, (out_ch,),
                            minval=-bound2, maxval=bound2, dtype=jnp.float32)

    # Eval-mode forward (dropout = identity) — exact check vs reference.
    out = conv_block_forward(x, w1, b1, w2, b2, dropout_rate=0.5, training=False)
    out = jax.block_until_ready(out)
    ref = conv_block_reference(x, w1, b1, w2, b2)
    assert out.shape == (N, out_ch, H, W), out.shape
    assert jnp.allclose(out, ref, atol=1e-4, rtol=1e-4), "mismatch vs reference"

    # Training-mode forward exercising fused inverted dropout (stochastic, so
    # only shape / finiteness are checked).
    out_tr = conv_block_forward(x, w1, b1, w2, b2, dropout_rate=0.5,
                                training=True, seed=123)
    out_tr = jax.block_until_ready(out_tr)
    assert out_tr.shape == (N, out_ch, H, W), out_tr.shape
    assert bool(jnp.all(jnp.isfinite(out_tr)))

    print("KERNEL_OK")
</pallas_src>

<mosaic_0001>
module attributes {stable_mosaic.version = 11 : i64} {
  func.func @_conv_block_kernel(%arg0: i32, %arg1: memref<1x8x640xf32, #tpu.memory_space<vmem>>, %arg2: memref<9x8x8xf32, #tpu.memory_space<vmem>>, %arg3: memref<8x1xf32, #tpu.memory_space<vmem>>, %arg4: memref<9x8x8xf32, #tpu.memory_space<vmem>>, %arg5: memref<8x1xf32, #tpu.memory_space<vmem>>, %arg6: memref<1x1x512xf32, #tpu.memory_space<vmem>>, %arg7: memref<1x8x384xf32, #tpu.memory_space<vmem>>) attributes {dimension_semantics = [#tpu.dimension_semantics<parallel>], iteration_bounds = array<i64: 2>, scalar_prefetch = 0 : i64, scratch_operands = 0 : i64, tpu.core_type = #tpu.core_type<tc>, window_params = [{transform_indices = @transform_0, window_bounds = array<i64: 1, 8, 640>}, {pipeline_mode = #tpu.pipeline_mode<synchronous>, transform_indices = @transform_1, window_bounds = array<i64: 9, 8, 8>}, {pipeline_mode = #tpu.pipeline_mode<synchronous>, transform_indices = @transform_2, window_bounds = array<i64: 8, 1>}, {pipeline_mode = #tpu.pipeline_mode<synchronous>, transform_indices = @transform_3, window_bounds = array<i64: 9, 8, 8>}, {pipeline_mode = #tpu.pipeline_mode<synchronous>, transform_indices = @transform_4, window_bounds = array<i64: 8, 1>}, {pipeline_mode = #tpu.pipeline_mode<synchronous>, transform_indices = @transform_5, window_bounds = array<i64: 1, 1, 512>}, {transform_indices = @transform_6, window_bounds = array<i64: 1, 8, 384>}]} {
    %c0 = arith.constant 0 : index
    %c0_0 = arith.constant 0 : index
    %c0_1 = arith.constant 0 : index
    %0 = vector.load %arg1[%c0, %c0_0, %c0_1] : memref<1x8x640xf32, #tpu.memory_space<vmem>>, vector<1x8x640xf32>
    %1 = vector.shape_cast %0 : vector<1x8x640xf32> to vector<8x640xf32>
    %cst = arith.constant 0.000000e+00 : f32
    %2 = vector.broadcast %cst : f32 to vector<8x512xf32>
    %c0_2 = arith.constant 0 : index
    %c0_3 = arith.constant 0 : index
    %c0_4 = arith.constant 0 : index
    %3 = vector.load %arg2[%c0_2, %c0_3, %c0_4] : memref<9x8x8xf32, #tpu.memory_space<vmem>>, vector<1x8x8xf32>
    %4 = vector.shape_cast %3 : vector<1x8x8xf32> to vector<8x8xf32>
    %5 = vector.extract_strided_slice %1 {offsets = [0, 0], sizes = [8, 512], strides = [1, 1]} : vector<8x640xf32> to vector<8x512xf32>
    %cst_5 = arith.constant dense<0.000000e+00> : vector<8x512xf32>
    %6 = tpu.matmul %4, %5, %cst_5 {dimension_numbers = #tpu.dot_dimension_numbers<[1], [0], [0], [1], [0, 0, 1, 1], [], []>} : vector<8x8xf32>, vector<8x512xf32>, vector<8x512xf32> -> vector<8x512xf32>
    %7 = arith.addf %2, %6 : vector<8x512xf32>
    %c1 = arith.constant 1 : index
    %c0_6 = arith.constant 0 : index
    %c0_7 = arith.constant 0 : index
    %8 = vector.load %arg2[%c1, %c0_6, %c0_7] : memref<9x8x8xf32, #tpu.memory_space<vmem>>, vector<1x8x8xf32>
    %9 = vector.shape_cast %8 : vector<1x8x8xf32> to vector<8x8xf32>
    %10 = vector.extract_strided_slice %1 {offsets = [0, 1], sizes = [8, 512], strides = [1, 1]} : vector<8x640xf32> to vector<8x512xf32>
    %cst_8 = arith.constant dense<0.000000e+00> : vector<8x512xf32>
    %11 = tpu.matmul %9, %10, %cst_8 {dimension_numbers = #tpu.dot_dimension_numbers<[1], [0], [0], [1], [0, 0, 1, 1], [], []>} : vector<8x8xf32>, vector<8x512xf32>, vector<8x512xf32> -> vector<8x512xf32>
    %12 = arith.addf %7, %11 : vector<8x512xf32>
    %c2 = arith.constant 2 : index
    %c0_9 = arith.constant 0 : index
    %c0_10 = arith.constant 0 : index
    %13 = vector.load %arg2[%c2, %c0_9, %c0_10] : memref<9x8x8xf32, #tpu.memory_space<vmem>>, vector<1x8x8xf32>
    %14 = vector.shape_cast %13 : vector<1x8x8xf32> to vector<8x8xf32>
    %15 = vector.extract_strided_slice %1 {offsets = [0, 2], sizes = [8, 512], strides = [1, 1]} : vector<8x640xf32> to vector<8x512xf32>
    %cst_11 = arith.constant dense<0.000000e+00> : vector<8x512xf32>
    %16 = tpu.matmul %14, %15, %cst_11 {dimension_numbers = #tpu.dot_dimension_numbers<[1], [0], [0], [1], [0, 0, 1, 1], [], []>} : vector<8x8xf32>, vector<8x512xf32>, vector<8x512xf32> -> vector<8x512xf32>
    %17 = arith.addf %12, %16 : vector<8x512xf32>
    %c3 = arith.constant 3 : index
    %c0_12 = arith.constant 0 : index
    %c0_13 = arith.constant 0 : index
    %18 = vector.load %arg2[%c3, %c0_12, %c0_13] : memref<9x8x8xf32, #tpu.memory_space<vmem>>, vector<1x8x8xf32>
    %19 = vector.shape_cast %18 : vector<1x8x8xf32> to vector<8x8xf32>
    %20 = vector.extract_strided_slice %1 {offsets = [0, 18], sizes = [8, 512], strides = [1, 1]} : vector<8x640xf32> to vector<8x512xf32>
    %cst_14 = arith.constant dense<0.000000e+00> : vector<8x512xf32>
    %21 = tpu.matmul %19, %20, %cst_14 {dimension_numbers = #tpu.dot_dimension_numbers<[1], [0], [0], [1], [0, 0, 1, 1], [], []>} : vector<8x8xf32>, vector<8x512xf32>, vector<8x512xf32> -> vector<8x512xf32>
    %22 = arith.addf %17, %21 : vector<8x512xf32>
    %c4 = arith.constant 4 : index
    %c0_15 = arith.constant 0 : index
    %c0_16 = arith.constant 0 : index
    %23 = vector.load %arg2[%c4, %c0_15, %c0_16] : memref<9x8x8xf32, #tpu.memory_space<vmem>>, vector<1x8x8xf32>
    %24 = vector.shape_cast %23 : vector<1x8x8xf32> to vector<8x8xf32>
    %25 = vector.extract_strided_slice %1 {offsets = [0, 19], sizes = [8, 512], strides = [1, 1]} : vector<8x640xf32> to vector<8x512xf32>
    %cst_17 = arith.constant dense<0.000000e+00> : vector<8x512xf32>
    %26 = tpu.matmul %24, %25, %cst_17 {dimension_numbers = #tpu.dot_dimension_numbers<[1], [0], [0], [1], [0, 0, 1, 1], [], []>} : vector<8x8xf32>, vector<8x512xf32>, vector<8x512xf32> -> vector<8x512xf32>
    %27 = arith.addf %22, %26 : vector<8x512xf32>
    %c5 = arith.constant 5 : index
    %c0_18 = arith.constant 0 : index
    %c0_19 = arith.constant 0 : index
    %28 = vector.load %arg2[%c5, %c0_18, %c0_19] : memref<9x8x8xf32, #tpu.memory_space<vmem>>, vector<1x8x8xf32>
    %29 = vector.shape_cast %28 : vector<1x8x8xf32> to vector<8x8xf32>
    %30 = vector.extract_strided_slice %1 {offsets = [0, 20], sizes = [8, 512], strides = [1, 1]} : vector<8x640xf32> to vector<8x512xf32>
    %cst_20 = arith.constant dense<0.000000e+00> : vector<8x512xf32>
    %31 = tpu.matmul %29, %30, %cst_20 {dimension_numbers = #tpu.dot_dimension_numbers<[1], [0], [0], [1], [0, 0, 1, 1], [], []>} : vector<8x8xf32>, vector<8x512xf32>, vector<8x512xf32> -> vector<8x512xf32>
    %32 = arith.addf %27, %31 : vector<8x512xf32>
    %c6 = arith.constant 6 : index
    %c0_21 = arith.constant 0 : index
    %c0_22 = arith.constant 0 : index
    %33 = vector.load %arg2[%c6, %c0_21, %c0_22] : memref<9x8x8xf32, #tpu.memory_space<vmem>>, vector<1x8x8xf32>
    %34 = vector.shape_cast %33 : vector<1x8x8xf32> to vector<8x8xf32>
    %35 = vector.extract_strided_slice %1 {offsets = [0, 36], sizes = [8, 512], strides = [1, 1]} : vector<8x640xf32> to vector<8x512xf32>
    %cst_23 = arith.constant dense<0.000000e+00> : vector<8x512xf32>
    %36 = tpu.matmul %34, %35, %cst_23 {dimension_numbers = #tpu.dot_dimension_numbers<[1], [0], [0], [1], [0, 0, 1, 1], [], []>} : vector<8x8xf32>, vector<8x512xf32>, vector<8x512xf32> -> vector<8x512xf32>
    %37 = arith.addf %32, %36 : vector<8x512xf32>
    %c7 = arith.constant 7 : index
    %c0_24 = arith.constant 0 : index
    %c0_25 = arith.constant 0 : index
    %38 = vector.load %arg2[%c7, %c0_24, %c0_25] : memref<9x8x8xf32, #tpu.memory_space<vmem>>, vector<1x8x8xf32>
    %39 = vector.shape_cast %38 : vector<1x8x8xf32> to vector<8x8xf32>
    %40 = vector.extract_strided_slice %1 {offsets = [0, 37], sizes = [8, 512], strides = [1, 1]} : vector<8x640xf32> to vector<8x512xf32>
    %cst_26 = arith.constant dense<0.000000e+00> : vector<8x512xf32>
    %41 = tpu.matmul %39, %40, %cst_26 {dimension_numbers = #tpu.dot_dimension_numbers<[1], [0], [0], [1], [0, 0, 1, 1], [], []>} : vector<8x8xf32>, vector<8x512xf32>, vector<8x512xf32> -> vector<8x512xf32>
    %42 = arith.addf %37, %41 : vector<8x512xf32>
    %c8 = arith.constant 8 : index
    %c0_27 = arith.constant 0 : index
    %c0_28 = arith.constant 0 : index
    %43 = vector.load %arg2[%c8, %c0_27, %c0_28] : memref<9x8x8xf32, #tpu.memory_space<vmem>>, vector<1x8x8xf32>
    %44 = vector.shape_cast %43 : vector<1x8x8xf32> to vector<8x8xf32>
    %45 = vector.extract_strided_slice %1 {offsets = [0, 38], sizes = [8, 512], strides = [1, 1]} : vector<8x640xf32> to vector<8x512xf32>
    %cst_29 = arith.constant dense<0.000000e+00> : vector<8x512xf32>
    %46 = tpu.matmul %44, %45, %cst_29 {dimension_numbers = #tpu.dot_dimension_numbers<[1], [0], [0], [1], [0, 0, 1, 1], [], []>} : vector<8x8xf32>, vector<8x512xf32>, vector<8x512xf32> -> vector<8x512xf32>
    %47 = arith.addf %42, %46 : vector<8x512xf32>
    %c0_30 = arith.constant 0 : index
    %c0_31 = arith.constant 0 : index
    %48 = vector.load %arg3[%c0_30, %c0_31] : memref<8x1xf32, #tpu.memory_space<vmem>>, vector<8x1xf32>
    %49 = vector.broadcast %48 : vector<8x1xf32> to vector<8x512xf32>
    %50 = arith.addf %47, %49 : vector<8x512xf32>
    %cst_32 = arith.constant 0.000000e+00 : f32
    %51 = vector.broadcast %cst_32 : f32 to vector<8x512xf32>
    %52 = arith.maximumf %50, %51 : vector<8x512xf32>
    %c0_33 = arith.constant 0 : index
    %c0_34 = arith.constant 0 : index
    %c0_35 = arith.constant 0 : index
    %53 = vector.load %arg6[%c0_33, %c0_34, %c0_35] : memref<1x1x512xf32, #tpu.memory_space<vmem>>, vector<1x1x512xf32>
    %54 = vector.shape_cast %53 : vector<1x1x512xf32> to vector<1x512xf32>
    %55 = vector.broadcast %54 : vector<1x512xf32> to vector<8x512xf32>
    %56 = arith.mulf %52, %55 : vector<8x512xf32>
    %cst_36 = arith.constant 0.000000e+00 : f32
    %57 = vector.broadcast %cst_36 : f32 to vector<8x384xf32>
    %c0_37 = arith.constant 0 : index
    %c0_38 = arith.constant 0 : index
    %c0_39 = arith.constant 0 : index
    %58 = vector.load %arg4[%c0_37, %c0_38, %c0_39] : memref<9x8x8xf32, #tpu.memory_space<vmem>>, vector<1x8x8xf32>
    %59 = vector.shape_cast %58 : vector<1x8x8xf32> to vector<8x8xf32>
    %60 = vector.extract_strided_slice %56 {offsets = [0, 0], sizes = [8, 384], strides = [1, 1]} : vector<8x512xf32> to vector<8x384xf32>
    %cst_40 = arith.constant dense<0.000000e+00> : vector<8x384xf32>
    %61 = tpu.matmul %59, %60, %cst_40 {dimension_numbers = #tpu.dot_dimension_numbers<[1], [0], [0], [1], [0, 0, 1, 1], [], []>} : vector<8x8xf32>, vector<8x384xf32>, vector<8x384xf32> -> vector<8x384xf32>
    %62 = arith.addf %57, %61 : vector<8x384xf32>
    %c1_41 = arith.constant 1 : index
    %c0_42 = arith.constant 0 : index
    %c0_43 = arith.constant 0 : index
    %63 = vector.load %arg4[%c1_41, %c0_42, %c0_43] : memref<9x8x8xf32, #tpu.memory_space<vmem>>, vector<1x8x8xf32>
    %64 = vector.shape_cast %63 : vector<1x8x8xf32> to vector<8x8xf32>
    %65 = vector.extract_strided_slice %56 {offsets = [0, 1], sizes = [8, 384], strides = [1, 1]} : vector<8x512xf32> to vector<8x384xf32>
    %cst_44 = arith.constant dense<0.000000e+00> : vector<8x384xf32>
    %66 = tpu.matmul %64, %65, %cst_44 {dimension_numbers = #tpu.dot_dimension_numbers<[1], [0], [0], [1], [0, 0, 1, 1], [], []>} : vector<8x8xf32>, vector<8x384xf32>, vector<8x384xf32> -> vector<8x384xf32>
    %67 = arith.addf %62, %66 : vector<8x384xf32>
    %c2_45 = arith.constant 2 : index
    %c0_46 = arith.constant 0 : index
    %c0_47 = arith.constant 0 : index
    %68 = vector.load %arg4[%c2_45, %c0_46, %c0_47] : memref<9x8x8xf32, #tpu.memory_space<vmem>>, vector<1x8x8xf32>
    %69 = vector.shape_cast %68 : vector<1x8x8xf32> to vector<8x8xf32>
    %70 = vector.extract_strided_slice %56 {offsets = [0, 2], sizes = [8, 384], strides = [1, 1]} : vector<8x512xf32> to vector<8x384xf32>
    %cst_48 = arith.constant dense<0.000000e+00> : vector<8x384xf32>
    %71 = tpu.matmul %69, %70, %cst_48 {dimension_numbers = #tpu.dot_dimension_numbers<[1], [0], [0], [1], [0, 0, 1, 1], [], []>} : vector<8x8xf32>, vector<8x384xf32>, vector<8x384xf32> -> vector<8x384xf32>
    %72 = arith.addf %67, %71 : vector<8x384xf32>
    %c3_49 = arith.constant 3 : index
    %c0_50 = arith.constant 0 : index
    %c0_51 = arith.constant 0 : index
    %73 = vector.load %arg4[%c3_49, %c0_50, %c0_51] : memref<9x8x8xf32, #tpu.memory_space<vmem>>, vector<1x8x8xf32>
    %74 = vector.shape_cast %73 : vector<1x8x8xf32> to vector<8x8xf32>
    %75 = vector.extract_strided_slice %56 {offsets = [0, 18], sizes = [8, 384], strides = [1, 1]} : vector<8x512xf32> to vector<8x384xf32>
    %cst_52 = arith.constant dense<0.000000e+00> : vector<8x384xf32>
    %76 = tpu.matmul %74, %75, %cst_52 {dimension_numbers = #tpu.dot_dimension_numbers<[1], [0], [0], [1], [0, 0, 1, 1], [], []>} : vector<8x8xf32>, vector<8x384xf32>, vector<8x384xf32> -> vector<8x384xf32>
    %77 = arith.addf %72, %76 : vector<8x384xf32>
    %c4_53 = arith.constant 4 : index
    %c0_54 = arith.constant 0 : index
    %c0_55 = arith.constant 0 : index
    %78 = vector.load %arg4[%c4_53, %c0_54, %c0_55] : memref<9x8x8xf32, #tpu.memory_space<vmem>>, vector<1x8x8xf32>
    %79 = vector.shape_cast %78 : vector<1x8x8xf32> to vector<8x8xf32>
    %80 = vector.extract_strided_slice %56 {offsets = [0, 19], sizes = [8, 384], strides = [1, 1]} : vector<8x512xf32> to vector<8x384xf32>
    %cst_56 = arith.constant dense<0.000000e+00> : vector<8x384xf32>
    %81 = tpu.matmul %79, %80, %cst_56 {dimension_numbers = #tpu.dot_dimension_numbers<[1], [0], [0], [1], [0, 0, 1, 1], [], []>} : vector<8x8xf32>, vector<8x384xf32>, vector<8x384xf32> -> vector<8x384xf32>
    %82 = arith.addf %77, %81 : vector<8x384xf32>
    %c5_57 = arith.constant 5 : index
    %c0_58 = arith.constant 0 : index
    %c0_59 = arith.constant 0 : index
    %83 = vector.load %arg4[%c5_57, %c0_58, %c0_59] : memref<9x8x8xf32, #tpu.memory_space<vmem>>, vector<1x8x8xf32>
    %84 = vector.shape_cast %83 : vector<1x8x8xf32> to vector<8x8xf32>
    %85 = vector.extract_strided_slice %56 {offsets = [0, 20], sizes = [8, 384], strides = [1, 1]} : vector<8x512xf32> to vector<8x384xf32>
    %cst_60 = arith.constant dense<0.000000e+00> : vector<8x384xf32>
    %86 = tpu.matmul %84, %85, %cst_60 {dimension_numbers = #tpu.dot_dimension_numbers<[1], [0], [0], [1], [0, 0, 1, 1], [], []>} : vector<8x8xf32>, vector<8x384xf32>, vector<8x384xf32> -> vector<8x384xf32>
    %87 = arith.addf %82, %86 : vector<8x384xf32>
    %c6_61 = arith.constant 6 : index
    %c0_62 = arith.constant 0 : index
    %c0_63 = arith.constant 0 : index
    %88 = vector.load %arg4[%c6_61, %c0_62, %c0_63] : memref<9x8x8xf32, #tpu.memory_space<vmem>>, vector<1x8x8xf32>
    %89 = vector.shape_cast %88 : vector<1x8x8xf32> to vector<8x8xf32>
    %90 = vector.extract_strided_slice %56 {offsets = [0, 36], sizes = [8, 384], strides = [1, 1]} : vector<8x512xf32> to vector<8x384xf32>
    %cst_64 = arith.constant dense<0.000000e+00> : vector<8x384xf32>
    %91 = tpu.matmul %89, %90, %cst_64 {dimension_numbers = #tpu.dot_dimension_numbers<[1], [0], [0], [1], [0, 0, 1, 1], [], []>} : vector<8x8xf32>, vector<8x384xf32>, vector<8x384xf32> -> vector<8x384xf32>
    %92 = arith.addf %87, %91 : vector<8x384xf32>
    %c7_65 = arith.constant 7 : index
    %c0_66 = arith.constant 0 : index
    %c0_67 = arith.constant 0 : index
    %93 = vector.load %arg4[%c7_65, %c0_66, %c0_67] : memref<9x8x8xf32, #tpu.memory_space<vmem>>, vector<1x8x8xf32>
    %94 = vector.shape_cast %93 : vector<1x8x8xf32> to vector<8x8xf32>
    %95 = vector.extract_strided_slice %56 {offsets = [0, 37], sizes = [8, 384], strides = [1, 1]} : vector<8x512xf32> to vector<8x384xf32>
    %cst_68 = arith.constant dense<0.000000e+00> : vector<8x384xf32>
    %96 = tpu.matmul %94, %95, %cst_68 {dimension_numbers = #tpu.dot_dimension_numbers<[1], [0], [0], [1], [0, 0, 1, 1], [], []>} : vector<8x8xf32>, vector<8x384xf32>, vector<8x384xf32> -> vector<8x384xf32>
    %97 = arith.addf %92, %96 : vector<8x384xf32>
    %c8_69 = arith.constant 8 : index
    %c0_70 = arith.constant 0 : index
    %c0_71 = arith.constant 0 : index
    %98 = vector.load %arg4[%c8_69, %c0_70, %c0_71] : memref<9x8x8xf32, #tpu.memory_space<vmem>>, vector<1x8x8xf32>
    %99 = vector.shape_cast %98 : vector<1x8x8xf32> to vector<8x8xf32>
    %100 = vector.extract_strided_slice %56 {offsets = [0, 38], sizes = [8, 384], strides = [1, 1]} : vector<8x512xf32> to vector<8x384xf32>
    %cst_72 = arith.constant dense<0.000000e+00> : vector<8x384xf32>
    %101 = tpu.matmul %99, %100, %cst_72 {dimension_numbers = #tpu.dot_dimension_numbers<[1], [0], [0], [1], [0, 0, 1, 1], [], []>} : vector<8x8xf32>, vector<8x384xf32>, vector<8x384xf32> -> vector<8x384xf32>
    %102 = arith.addf %97, %101 : vector<8x384xf32>
    %c0_73 = arith.constant 0 : index
    %c0_74 = arith.constant 0 : index
    %103 = vector.load %arg5[%c0_73, %c0_74] : memref<8x1xf32, #tpu.memory_space<vmem>>, vector<8x1xf32>
    %104 = vector.broadcast %103 : vector<8x1xf32> to vector<8x384xf32>
    %105 = arith.addf %102, %104 : vector<8x384xf32>
    %cst_75 = arith.constant 0.000000e+00 : f32
    %106 = vector.broadcast %cst_75 : f32 to vector<8x384xf32>
    %107 = arith.maximumf %105, %106 : vector<8x384xf32>
    %c0_76 = arith.constant 0 : index
    %c0_77 = arith.constant 0 : index
    %c0_78 = arith.constant 0 : index
    %108 = vector.load %arg7[%c0_76, %c0_77, %c0_78] : memref<1x8x384xf32, #tpu.memory_space<vmem>>, vector<1x8x384xf32>
    %109 = vector.shape_cast %108 : vector<1x8x384xf32> to vector<8x384xf32>
    %110 = vector.shape_cast %107 : vector<8x384xf32> to vector<1x8x384xf32>
    tpu.vector_store %arg7[%c0_76, %c0_77, %c0_78], %110 {strides = array<i32>} : memref<1x8x384xf32, #tpu.memory_space<vmem>>, vector<1x8x384xf32>,
    return
  }
  func.func @transform_0(%arg0: i32) -> (i32, i32, i32) {
    %c0_i32 = arith.constant 0 : i32
    %c0_i32_0 = arith.constant 0 : i32
    %c0_i32_1 = arith.constant 0 : i32
    return %arg0, %c0_i32, %c0_i32_0 : i32, i32, i32
  }
  func.func @transform_1(%arg0: i32) -> (i32, i32, i32) {
    %c0_i32 = arith.constant 0 : i32
    %c0_i32_0 = arith.constant 0 : i32
    %c0_i32_1 = arith.constant 0 : i32
    %c0_i32_2 = arith.constant 0 : i32
    return %c0_i32, %c0_i32_0, %c0_i32_1 : i32, i32, i32
  }
  func.func @transform_2(%arg0: i32) -> (i32, i32) {
    %c0_i32 = arith.constant 0 : i32
    %c0_i32_0 = arith.constant 0 : i32
    %c0_i32_1 = arith.constant 0 : i32
    return %c0_i32, %c0_i32_0 : i32, i32
  }
  func.func @transform_3(%arg0: i32) -> (i32, i32, i32) {
    %c0_i32 = arith.constant 0 : i32
    %c0_i32_0 = arith.constant 0 : i32
    %c0_i32_1 = arith.constant 0 : i32
    %c0_i32_2 = arith.constant 0 : i32
    return %c0_i32, %c0_i32_0, %c0_i32_1 : i32, i32, i32
  }
  func.func @transform_4(%arg0: i32) -> (i32, i32) {
    %c0_i32 = arith.constant 0 : i32
    %c0_i32_0 = arith.constant 0 : i32
    %c0_i32_1 = arith.constant 0 : i32
    return %c0_i32, %c0_i32_0 : i32, i32
  }
  func.func @transform_5(%arg0: i32) -> (i32, i32, i32) {
    %c0_i32 = arith.constant 0 : i32
    %c0_i32_0 = arith.constant 0 : i32
    %c0_i32_1 = arith.constant 0 : i32
    %c0_i32_2 = arith.constant 0 : i32
    return %c0_i32, %c0_i32_0, %c0_i32_1 : i32, i32, i32
  }
  func.func @transform_6(%arg0: i32) -> (i32, i32, i32) {
    %c0_i32 = arith.constant 0 : i32
    %c0_i32_0 = arith.constant 0 : i32
    %c0_i32_1 = arith.constant 0 : i32
    return %arg0, %c0_i32, %c0_i32_0 : i32, i32, i32
  }
}

</mosaic_0001>

<llo_original>
// kernel: tpu_custom_call.1
$region0: #{tpu_custom_call.1}
  #allocation0 [shape = 'u32[]', space=smem, size = 0x4, offset = 0x4, fixed_abs, tag = 'smem constant byte address 0x4 - core index']
  #allocation1 [shape = 'u32[144,128]{1,0:T(1,128)}', space=vmem, size = 0x12000, scoped, tag = 'internal scratch']
  %s0 = inlined_call_operand.vmem [shape: f32[2,8,640], index: 0, kind: input, shape index: {}]
  %s1 = inlined_call_operand.vmem [shape: f32[9,8,8], index: 1, kind: input, shape index: {}]
  %s2 = inlined_call_operand.vmem [shape: f32[8,1], index: 2, kind: input, shape index: {}]
  %s3 = inlined_call_operand.vmem [shape: f32[9,8,8], index: 3, kind: input, shape index: {}]
  %s4 = inlined_call_operand.vmem [shape: f32[8,1], index: 4, kind: input, shape index: {}]
  %s5 = inlined_call_operand.vmem [shape: f32[1,1,512], index: 5, kind: input, shape index: {}]
  %s6 = inlined_call_operand.hbm [shape: f32[2,8,384], index: 6, kind: output, shape index: {}]
  %s7 = sld [smem:[#allocation0]]
  $region57: #{tpu_custom_call.1} parent=0
    _
  %s9 = ssub.s32 1, %s7
  %s10 = scalar_select 0, %s9, %s7
  $region1: #{tpu_custom_call.1} parent=0
    #allocation2 [shape = 'u8[24576]{0}', space=vmem, size = 0x6000, scoped, tag = 'output window, operand 0']
    #allocation3 [shape = 's32[2]{0}', space=sflag, size = 0x8, scoped, tag = 'scoped memory for tpu_custom_call.1']
    %11 = vsyncpa [#allocation3], 0
    %s12 = scalar_lea.sflag [#allocation3], 1
    %13 = vsyncpa %s12, 0
    loop: start=0, step=1, limit=4
    $region2: #{tpu_custom_call.1} parent=1 // loop_pre_header
      _
    $region3: #{tpu_custom_call.1} parent=1 // loop_header
      %s15 = sphi 0, %s19
      %p16 = scmp.ge.s32.totalorder %s15, 4
      %s25 = sphi 0, %s27
      %s28 = sphi 0, %s25
      %s29 = sphi 0, %s28
      %s45 = sphi 0, %s29
      %s49 = sphi 0, %s49
      %s51 = sphi 0, %s49
      %s52 = sphi 0, %s51
      %s66 = sphi 0, %s52
      %s70 = sphi 0, %s70
      %s72 = sphi 0, %s70
      %s73 = sphi 0, %s72
      %s87 = sphi 0, %s73
      %s91 = sphi 0, %s91
      %s93 = sphi 0, %s91
      %s94 = sphi 0, %s93
      %s108 = sphi 0, %s94
      %s112 = sphi 0, %s112
      %s114 = sphi 0, %s112
      %s115 = sphi 0, %s114
      %s129 = sphi 0, %s115
      %s133 = sphi 0, %s133
      %s135 = sphi 0, %s133
      %s136 = sphi 0, %s135
      %s150 = sphi 0, %s136
      %s156 = sphi 0, %s158
      %s159 = sphi 0, %s156
      %s160 = sphi 0, %s159
      %s176 = sphi 0, %s160
    $region4: #{tpu_custom_call.1} parent=1 // loop_header_branch
      %18 = sbr.rel (%p16) target = $region8
    $region5: #{tpu_custom_call.1} parent=1 // loop_body
      %s20 = ssub.s32 %s15, 1
      %s21 = ssub.s32 %s15, 2
      %s22 = sadd.s32 %s15, 1
      %s23 = ssub.s32 %s15, %s22
      %p24 = scmp.eq.s32.totalorder %s23, 0
      %s26 = sadd.s32 %s25, 1
      %s27 = scalar_select %p24, %s25, %s26
      %p30 = pneg %p24
      %p31 = scmp.eq.s32.totalorder %s15, 1
      %p32 = por %p30, %p31
      %p33 = scmp.ne.s32.totalorder %s25, %s28
      %p34 = scmp.eq.s32.totalorder %s15, 0
      %p35 = por %p33, %p34
      %p36 = scmp.ne.s32.totalorder %s25, %s28
      %p37 = scmp.eq.s32.totalorder %s20, 1
      %p38 = por %p36, %p37
      %p39 = scmp.ne.s32.totalorder %s28, %s29
      %p40 = scmp.eq.s32.totalorder %s20, 0
      %p41 = por %p39, %p40
      %p42 = scmp.ne.s32.totalorder %s28, %s29
      %p43 = scmp.eq.s32.totalorder %s21, 1
      %p44 = por %p42, %p43
      %p46 = scmp.ne.s32.totalorder %s29, %s45
      %p47 = scmp.eq.s32.totalorder %s21, 0
      %p48 = por %p46, %p47
      %s50 = sadd.s32 %s49, 1
      %p53 = scmp.eq.s32.totalorder %s15, 1
      %p54 = scmp.ne.s32.totalorder %s49, %s51
      %p55 = scmp.eq.s32.totalorder %s15, 0
      %p56 = por %p54, %p55
      %p57 = scmp.ne.s32.totalorder %s49, %s51
      %p58 = scmp.eq.s32.totalorder %s20, 1
      %p59 = por %p57, %p58
      %p60 = scmp.ne.s32.totalorder %s51, %s52
      %p61 = scmp.eq.s32.totalorder %s20, 0
      %p62 = por %p60, %p61
      %p63 = scmp.ne.s32.totalorder %s51, %s52
      %p64 = scmp.eq.s32.totalorder %s21, 1
      %p65 = por %p63, %p64
      %p67 = scmp.ne.s32.totalorder %s52, %s66
      %p68 = scmp.eq.s32.totalorder %s21, 0
      %p69 = por %p67, %p68
      %s71 = sadd.s32 %s70, 1
      %p74 = scmp.eq.s32.totalorder %s15, 1
      %p75 = scmp.ne.s32.totalorder %s70, %s72
      %p76 = scmp.eq.s32.totalorder %s15, 0
      %p77 = por %p75, %p76
      %p78 = scmp.ne.s32.totalorder %s70, %s72
      %p79 = scmp.eq.s32.totalorder %s20, 1
      %p80 = por %p78, %p79
      %p81 = scmp.ne.s32.totalorder %s72, %s73
      %p82 = scmp.eq.s32.totalorder %s20, 0
      %p83 = por %p81, %p82
      %p84 = scmp.ne.s32.totalorder %s72, %s73
      %p85 = scmp.eq.s32.totalorder %s21, 1
      %p86 = por %p84, %p85
      %p88 = scmp.ne.s32.totalorder %s73, %s87
      %p89 = scmp.eq.s32.totalorder %s21, 0
      %p90 = por %p88, %p89
      %s92 = sadd.s32 %s91, 1
      %p95 = scmp.eq.s32.totalorder %s15, 1
      %p96 = scmp.ne.s32.totalorder %s91, %s93
      %p97 = scmp.eq.s32.totalorder %s15, 0
      %p98 = por %p96, %p97
      %p99 = scmp.ne.s32.totalorder %s91, %s93
      %p100 = scmp.eq.s32.totalorder %s20, 1
      %p101 = por %p99, %p100
      %p102 = scmp.ne.s32.totalorder %s93, %s94
      %p103 = scmp.eq.s32.totalorder %s20, 0
      %p104 = por %p102, %p103
      %p105 = scmp.ne.s32.totalorder %s93, %s94
      %p106 = scmp.eq.s32.totalorder %s21, 1
      %p107 = por %p105, %p106
      %p109 = scmp.ne.s32.totalorder %s94, %s108
      %p110 = scmp.eq.s32.totalorder %s21, 0
      %p111 = por %p109, %p110
      %s113 = sadd.s32 %s112, 1
      %p116 = scmp.eq.s32.totalorder %s15, 1
      %p117 = scmp.ne.s32.totalorder %s112, %s114
      %p118 = scmp.eq.s32.totalorder %s15, 0
      %p119 = por %p117, %p118
      %p120 = scmp.ne.s32.totalorder %s112, %s114
      %p121 = scmp.eq.s32.totalorder %s20, 1
      %p122 = por %p120, %p121
      %p123 = scmp.ne.s32.totalorder %s114, %s115
      %p124 = scmp.eq.s32.totalorder %s20, 0
      %p125 = por %p123, %p124
      %p126 = scmp.ne.s32.totalorder %s114, %s115
      %p127 = scmp.eq.s32.totalorder %s21, 1
      %p128 = por %p126, %p127
      %p130 = scmp.ne.s32.totalorder %s115, %s129
      %p131 = scmp.eq.s32.totalorder %s21, 0
      %p132 = por %p130, %p131
      %s134 = sadd.s32 %s133, 1
      %p137 = scmp.eq.s32.totalorder %s15, 1
      %p138 = scmp.ne.s32.totalorder %s133, %s135
      %p139 = scmp.eq.s32.totalorder %s15, 0
      %p140 = por %p138, %p139
      %p141 = scmp.ne.s32.totalorder %s133, %s135
      %p142 = scmp.eq.s32.totalorder %s20, 1
      %p143 = por %p141, %p142
      %p144 = scmp.ne.s32.totalorder %s135, %s136
      %p145 = scmp.eq.s32.totalorder %s20, 0
      %p146 = por %p144, %p145
      %p147 = scmp.ne.s32.totalorder %s135, %s136
      %p148 = scmp.eq.s32.totalorder %s21, 1
      %p149 = por %p147, %p148
      %p151 = scmp.ne.s32.totalorder %s136, %s150
      %p152 = scmp.eq.s32.totalorder %s21, 0
      %p153 = por %p151, %p152
      %s154 = ssub.s32 %s15, %s22
      %p155 = scmp.eq.s32.totalorder %s154, 0
      %s157 = sadd.s32 %s156, 1
      %s158 = scalar_select %p155, %s156, %s157
      %p161 = pneg %p155
      %p162 = scmp.eq.s32.totalorder %s15, 1
      %p163 = por %p161, %p162
      %p164 = scmp.ne.s32.totalorder %s156, %s159
      %p165 = scmp.eq.s32.totalorder %s15, 0
      %p166 = por %p164, %p165
      %p167 = scmp.ne.s32.totalorder %s156, %s159
      %p168 = scmp.eq.s32.totalorder %s20, 1
      %p169 = por %p167, %p168
      %p170 = scmp.ne.s32.totalorder %s159, %s160
      %p171 = scmp.eq.s32.totalorder %s20, 0
      %p172 = por %p170, %p171
      %p173 = scmp.ne.s32.totalorder %s159, %s160
      %p174 = scmp.eq.s32.totalorder %s21, 1
      %p175 = por %p173, %p174
      %p177 = scmp.ne.s32.totalorder %s160, %s176
      %p178 = scmp.eq.s32.totalorder %s21, 0
      %p179 = por %p177, %p178
      %p180 = scmp.le.s32.totalorder 1, %s15
      %p181 = scmp.lt.s32.totalorder %s15, 3
      %p182 = pnand %p180, %p181
      %p183 = pneg %p182
      // Predicated region
      $region9: #{tpu_custom_call.1} parent=5 // pred_check
        _
      $region10: #{tpu_custom_call.1} parent=5 // pred_check_branch
        %185 = sbr.rel (%p182) target = $region12
      $region11: #{tpu_custom_call.1} parent=5 // pred_region
        %s186 = ssub.s32 %s15, 1
        // Predicated region
        $region13: #{tpu_custom_call.1} parent=11 // pred_check
          %p187 = pneg %p62
        $region14: #{tpu_custom_call.1} parent=11 // pred_check_branch
          %189 = sbr.rel (%p187) target = $region16
        $region15: #{tpu_custom_call.1} parent=11 // pred_region
          _
        $region16: #{tpu_custom_call.1} parent=11 // pred_fallthru
          _
        // Predicated region
        $region17: #{tpu_custom_call.1} parent=11 // pred_check
          %p190 = pneg %p83
        $region18: #{tpu_custom_call.1} parent=11 // pred_check_branch
          %192 = sbr.rel (%p190) target = $region20
        $region19: #{tpu_custom_call.1} parent=11 // pred_region
          _
        $region20: #{tpu_custom_call.1} parent=11 // pred_fallthru
          _
        // Predicated region
        $region21: #{tpu_custom_call.1} parent=11 // pred_check
          %p193 = pneg %p104
        $region22: #{tpu_custom_call.1} parent=11 // pred_check_branch
          %195 = sbr.rel (%p193) target = $region24
        $region23: #{tpu_custom_call.1} parent=11 // pred_region
          _
        $region24: #{tpu_custom_call.1} parent=11 // pred_fallthru
          _
        // Predicated region
        $region25: #{tpu_custom_call.1} parent=11 // pred_check
          %p196 = pneg %p125
        $region26: #{tpu_custom_call.1} parent=11 // pred_check_branch
          %198 = sbr.rel (%p196) target = $region28
        $region27: #{tpu_custom_call.1} parent=11 // pred_region
          _
        $region28: #{tpu_custom_call.1} parent=11 // pred_fallthru
          _
        // Predicated region
        $region29: #{tpu_custom_call.1} parent=11 // pred_check
          %p199 = pneg %p146
        $region30: #{tpu_custom_call.1} parent=11 // pred_check_branch
          %201 = sbr.rel (%p199) target = $region32
        $region31: #{tpu_custom_call.1} parent=11 // pred_region
          _
        $region32: #{tpu_custom_call.1} parent=11 // pred_fallthru
          _
      $region12: #{tpu_custom_call.1} parent=5 // pred_fallthru
        _
      %p202 = scmp.lt.s32.totalorder %s15, 2
      // Predicated region
      $region33: #{tpu_custom_call.1} parent=5 // pred_check
        %p203 = pneg %p202
      $region34: #{tpu_custom_call.1} parent=5 // pred_check_branch
        %205 = sbr.rel (%p203) target = $region36
      $region35: #{tpu_custom_call.1} parent=5 // pred_region
        // Predicated region
        $region37: #{tpu_custom_call.1} parent=35 // pred_check
          %p206 = pneg %p35
        $region38: #{tpu_custom_call.1} parent=35 // pred_check_branch
          %208 = sbr.rel (%p206) target = $region40
        $region39: #{tpu_custom_call.1} parent=35 // pred_region
          %p209 = scmp.lt.s32.totalorder %s15, 1
          %s210 = scalar_select %p209, %s15, 1
          %s211 = smul.addr %s210, 5
          %s212 = smul.addr %s211, 8
          %s213 = scalar_lea.vmem %s0, %s212
        $region40: #{tpu_custom_call.1} parent=35 // pred_fallthru
          _
      $region36: #{tpu_custom_call.1} parent=5 // pred_fallthru
        _
      %p214 = scmp.le.s32.totalorder 1, %s15
      %p215 = scmp.lt.s32.totalorder %s15, 3
      %p216 = pnand %p214, %p215
      %p217 = pneg %p216
      // Predicated region
      $region41: #{tpu_custom_call.1} parent=5 // pred_check
        _
      $region42: #{tpu_custom_call.1} parent=5 // pred_check_branch
        %219 = sbr.rel (%p216) target = $region44
      $region43: #{tpu_custom_call.1} parent=5 // pred_region
        %s220 = ssub.s32 %s15, 1
        %p221 = scmp.lt.s32.totalorder %s20, 1
        %s222 = scalar_select %p221, %s20, 1
        %s223 = smul.addr %s222, 5
        %s224 = smul.addr %s223, 8
        %s225 = scalar_lea.vmem %s0, %s224
        %p226 = pneg %p41
        %p227 = pneg %p38
        %p228 = pneg %p62
        %p229 = pneg %p59
        %p230 = pneg %p83
        %p231 = pneg %p80
        %p232 = pneg %p104
        %p233 = pneg %p101
        %p234 = pneg %p125
        %p235 = pneg %p122
        %p236 = pneg %p146
        %p237 = pneg %p143
        %p238 = pneg %p172
        %p239 = pneg %p169
        %s240 = sand.u32 %s159, 1
        %s241 = scalar_lea.sflag [#allocation3], %s240
        %s242 = sand.u32 %s159, 1
        %s243 = smul.addr %s242, 24
        %s244 = scalar_lea.vmem [#allocation2], %s243
        %p245 = scmp.lt.s32.totalorder %s20, 1
        %s246 = scalar_select %p245, %s20, 1
        %s247 = smul.addr %s246, 5
        %s248 = smul.addr %s247, 8
        %s249 = scalar_lea.vmem %s0, %s248
        %v250 = vld [vmem:[%s249] sm:$0xff]
        %v251 = vld [vmem:[%s249 + $0x8] sm:$0xff]
        %v252 = vld [vmem:[%s249 + $0x10] sm:$0xff]
        %v253 = vld [vmem:[%s249 + $0x18] sm:$0xff]
        %v254 = vld [vmem:[%s249 + $0x20] sm:$0xff]
        %v255 = vld [vmem:[%s1] sm:$0xff]
        %s256 = scalar_lea.vmem %s1, 8
        %v257 = vld [vmem:[%s256] sm:$0xff]
        %263 = vrot.lane.b32.xlu0 %v250, 127
        %v264 = vpop.permute.xlu0 %263
        %265 = vrot.lane.b32.xlu0 %v251, 127
        %v266 = vpop.permute.xlu0 %265
        %267 = vrot.lane.b32.xlu0 %v252, 127
        %v268 = vpop.permute.xlu0 %267
        %269 = vrot.lane.b32.xlu0 %v253, 127
        %v270 = vpop.permute.xlu0 %269
        %271 = vrot.lane.b32.xlu0 %v254, 127
        %v272 = vpop.permute.xlu0 %271
        %vm273 = vcmask 1039360
        %v274 = vsel %vm273, %v264, %v266
        %v275 = vsel %vm273, %v266, %v268
        %v276 = vsel %vm273, %v268, %v270
        %v277 = vsel %vm273, %v270, %v272
        %vm282 = vcmask 64512
        %v284 = vsel %vm282, %v257, 0
        %286 = vmatprep.subr.mxu0 0.0
        %287 = vmatpush1.msra.mxu0 0.0
        %288 = vmatprep.subr.mxu0 0.0
        %289 = vmatpush1.msra.mxu0 0.0
        %290 = vmatprep.subr.mxu0 0.0
        %291 = vmatpush1.msra.mxu0 0.0
        %292 = vmatprep.subr.mxu0 0.0
        %293 = vmatpush1.msra.mxu0 0.0
        %294 = vmatprep.subr.mxu0 0.0
        %295 = vmatpush1.msra.mxu0 0.0
        %296 = vmatprep.subr.mxu0 0.0
        %297 = vmatpush1.msra.mxu0 0.0
        %298 = vmatprep.subr.mxu0 0.0
        %299 = vmatpush1.msra.mxu0 0.0
        %300 = vmatprep.subr.mxu0 0.0
        %301 = vmatpush1.msra.mxu0 0.0
        %302 = vmatprep.subr.mxu0 0.0
        %303 = vmatpush1.msra.mxu0 0.0
        %304 = vmatprep.subr.mxu0 0.0
        %305 = vmatpush1.msra.mxu0 0.0
        %306 = vmatprep.subr.mxu0 0.0
        %307 = vmatpush1.msra.mxu0 0.0
        %308 = vmatprep.subr.mxu0 0.0
        %309 = vmatpush1.msra.mxu0 0.0
        %310 = vmatprep.subr.mxu0 0.0
        %311 = vmatpush1.msra.mxu0 0.0
        %312 = vmatprep.subr.mxu0 0.0
        %313 = vmatpush1.msra.mxu0 0.0
        %314 = vmatprep.subr.mxu0 0.0
        %315 = vmatpush1.msra.mxu0 0.0
        %316 = vmatprep.subr.mxu0 %v275
        %317 = vmatpush1.msra.mxu0 %v274
        %318 = vmatprep.subr.mxu0 0.0
        %319 = vmatpush2.msra.mxu0 0.0
        %320 = vmatprep.subr.mxu0 0.0
        %321 = vmatpush2.msra.mxu0 0.0
        %322 = vmatprep.subr.mxu0 0.0
        %323 = vmatpush2.msra.mxu0 0.0
        %324 = vmatprep.subr.mxu0 0.0
        %325 = vmatpush2.msra.mxu0 0.0
        %326 = vmatprep.subr.mxu0 0.0
        %327 = vmatpush2.msra.mxu0 0.0
        %328 = vmatprep.subr.mxu0 0.0
        %329 = vmatpush2.msra.mxu0 0.0
        %330 = vmatprep.subr.mxu0 0.0
        %331 = vmatpush2.msra.mxu0 0.0
        %332 = vmatprep.subr.mxu0 0.0
        %333 = vmatpush2.msra.mxu0 0.0
        %334 = vmatprep.subr.mxu0 0.0
        %335 = vmatpush2.msra.mxu0 0.0
        %336 = vmatprep.subr.mxu0 0.0
        %337 = vmatpush2.msra.mxu0 0.0
        %338 = vmatprep.subr.mxu0 0.0
        %339 = vmatpush2.msra.mxu0 0.0
        %340 = vmatprep.subr.mxu0 0.0
        %341 = vmatpush2.msra.mxu0 0.0
        %342 = vmatprep.subr.mxu0 0.0
        %343 = vmatpush2.msra.mxu0 0.0
        %344 = vmatprep.subr.mxu0 0.0
        %345 = vmatpush2.msra.mxu0 0.0
        %346 = vmatprep.subr.mxu0 0.0
        %347 = vmatpush2.msra.mxu0 0.0
        %348 = vmatprep.subr.mxu0 0.0
        %349 = vmatpush2.msra.mxu0 0.0
        %350 = vmatprep.mubr.f32.mxu0 0.0
        %351 = vmatmul.mubr.f32.gmra.mxu0 %v284
        %v352 = vpop.f32.mrf.mxu0
        %v353 = vadd.f32 0.0, %v352
        %v354 = vpop.f32.mrf.mxu0
        %v355 = vadd.f32 0.0, %v354
        %356 = vdwg.mxu0
        %357 = vmatprep.subr.mxu0 0.0
        %358 = vmatpush1.msra.mxu0 0.0
        %359 = vmatprep.subr.mxu0 0.0
        %360 = vmatpush1.msra.mxu0 0.0
        %361 = vmatprep.subr.mxu0 0.0
        %362 = vmatpush1.msra.mxu0 0.0
        %363 = vmatprep.subr.mxu0 0.0
        %364 = vmatpush1.msra.mxu0 0.0
        %365 = vmatprep.subr.mxu0 0.0
        %366 = vmatpush1.msra.mxu0 0.0
        %367 = vmatprep.subr.mxu0 0.0
        %368 = vmatpush1.msra.mxu0 0.0
        %369 = vmatprep.subr.mxu0 0.0
        %370 = vmatpush1.msra.mxu0 0.0
        %371 = vmatprep.subr.mxu0 0.0
        %372 = vmatpush1.msra.mxu0 0.0
        %373 = vmatprep.subr.mxu0 0.0
        %374 = vmatpush1.msra.mxu0 0.0
        %375 = vmatprep.subr.mxu0 0.0
        %376 = vmatpush1.msra.mxu0 0.0
        %377 = vmatprep.subr.mxu0 0.0
        %378 = vmatpush1.msra.mxu0 0.0
        %379 = vmatprep.subr.mxu0 0.0
        %380 = vmatpush1.msra.mxu0 0.0
        %381 = vmatprep.subr.mxu0 0.0
        %382 = vmatpush1.msra.mxu0 0.0
        %383 = vmatprep.subr.mxu0 0.0
        %384 = vmatpush1.msra.mxu0 0.0
        %385 = vmatprep.subr.mxu0 0.0
        %386 = vmatpush1.msra.mxu0 0.0
        %387 = vmatprep.subr.mxu0 %v277
        %388 = vmatpush1.msra.mxu0 %v276
        %389 = vmatprep.subr.mxu0 0.0
        %390 = vmatpush2.msra.mxu0 0.0
        %391 = vmatprep.subr.mxu0 0.0
        %392 = vmatpush2.msra.mxu0 0.0
        %393 = vmatprep.subr.mxu0 0.0
        %394 = vmatpush2.msra.mxu0 0.0
        %395 = vmatprep.subr.mxu0 0.0
        %396 = vmatpush2.msra.mxu0 0.0
        %397 = vmatprep.subr.mxu0 0.0
        %398 = vmatpush2.msra.mxu0 0.0
        %399 = vmatprep.subr.mxu0 0.0
        %400 = vmatpush2.msra.mxu0 0.0
        %401 = vmatprep.subr.mxu0 0.0
        %402 = vmatpush2.msra.mxu0 0.0
        %403 = vmatprep.subr.mxu0 0.0
        %404 = vmatpush2.msra.mxu0 0.0
        %405 = vmatprep.subr.mxu0 0.0
        %406 = vmatpush2.msra.mxu0 0.0
        %407 = vmatprep.subr.mxu0 0.0
        %408 = vmatpush2.msra.mxu0 0.0
        %409 = vmatprep.subr.mxu0 0.0
        %410 = vmatpush2.msra.mxu0 0.0
        %411 = vmatprep.subr.mxu0 0.0
        %412 = vmatpush2.msra.mxu0 0.0
        %413 = vmatprep.subr.mxu0 0.0
        %414 = vmatpush2.msra.mxu0 0.0
        %415 = vmatprep.subr.mxu0 0.0
        %416 = vmatpush2.msra.mxu0 0.0
        %417 = vmatprep.subr.mxu0 0.0
        %418 = vmatpush2.msra.mxu0 0.0
        %419 = vmatprep.subr.mxu0 0.0
        %420 = vmatpush2.msra.mxu0 0.0
        %421 = vmatprep.mubr.f32.mxu0 0.0
        %422 = vmatmul.mubr.f32.gmra.mxu0 %v284
        %v423 = vpop.f32.mrf.mxu0
        %v424 = vadd.f32 0.0, %v423
        %v425 = vpop.f32.mrf.mxu0
        %v426 = vadd.f32 0.0, %v425
        %427 = vdwg.mxu0
        %v429 = vsel %vm282, %v255, 0
        %431 = vmatprep.subr.mxu0 0.0
        %432 = vmatpush1.msra.mxu0 0.0
        %433 = vmatprep.subr.mxu0 0.0
        %434 = vmatpush1.msra.mxu0 0.0
        %435 = vmatprep.subr.mxu0 0.0
        %436 = vmatpush1.msra.mxu0 0.0
        %437 = vmatprep.subr.mxu0 0.0
        %438 = vmatpush1.msra.mxu0 0.0
        %439 = vmatprep.subr.mxu0 0.0
        %440 = vmatpush1.msra.mxu0 0.0
        %441 = vmatprep.subr.mxu0 0.0
        %442 = vmatpush1.msra.mxu0 0.0
        %443 = vmatprep.subr.mxu0 0.0
        %444 = vmatpush1.msra.mxu0 0.0
        %445 = vmatprep.subr.mxu0 0.0
        %446 = vmatpush1.msra.mxu0 0.0
        %447 = vmatprep.subr.mxu0 0.0
        %448 = vmatpush1.msra.mxu0 0.0
        %449 = vmatprep.subr.mxu0 0.0
        %450 = vmatpush1.msra.mxu0 0.0
        %451 = vmatprep.subr.mxu0 0.0
        %452 = vmatpush1.msra.mxu0 0.0
        %453 = vmatprep.subr.mxu0 0.0
        %454 = vmatpush1.msra.mxu0 0.0
        %455 = vmatprep.subr.mxu0 0.0
        %456 = vmatpush1.msra.mxu0 0.0
        %457 = vmatprep.subr.mxu0 0.0
        %458 = vmatpush1.msra.mxu0 0.0
        %459 = vmatprep.subr.mxu0 0.0
        %460 = vmatpush1.msra.mxu0 0.0
        %461 = vmatprep.subr.mxu0 %v251
        %462 = vmatpush1.msra.mxu0 %v250
        %463 = vmatprep.subr.mxu0 0.0
        %464 = vmatpush2.msra.mxu0 0.0
        %465 = vmatprep.subr.mxu0 0.0
        %466 = vmatpush2.msra.mxu0 0.0
        %467 = vmatprep.subr.mxu0 0.0
        %468 = vmatpush2.msra.mxu0 0.0
        %469 = vmatprep.subr.mxu0 0.0
        %470 = vmatpush2.msra.mxu0 0.0
        %471 = vmatprep.subr.mxu0 0.0
        %472 = vmatpush2.msra.mxu0 0.0
        %473 = vmatprep.subr.mxu0 0.0
        %474 = vmatpush2.msra.mxu0 0.0
        %475 = vmatprep.subr.mxu0 0.0
        %476 = vmatpush2.msra.mxu0 0.0
        %477 = vmatprep.subr.mxu0 0.0
        %478 = vmatpush2.msra.mxu0 0.0
        %479 = vmatprep.subr.mxu0 0.0
        %480 = vmatpush2.msra.mxu0 0.0
        %481 = vmatprep.subr.mxu0 0.0
        %482 = vmatpush2.msra.mxu0 0.0
        %483 = vmatprep.subr.mxu0 0.0
        %484 = vmatpush2.msra.mxu0 0.0
        %485 = vmatprep.subr.mxu0 0.0
        %486 = vmatpush2.msra.mxu0 0.0
        %487 = vmatprep.subr.mxu0 0.0
        %488 = vmatpush2.msra.mxu0 0.0
        %489 = vmatprep.subr.mxu0 0.0
        %490 = vmatpush2.msra.mxu0 0.0
        %491 = vmatprep.subr.mxu0 0.0
        %492 = vmatpush2.msra.mxu0 0.0
        %493 = vmatprep.subr.mxu0 0.0
        %494 = vmatpush2.msra.mxu0 0.0
        %495 = vmatprep.mubr.f32.mxu0 0.0
        %496 = vmatmul.mubr.f32.gmra.mxu0 %v429
        %v497 = vpop.f32.mrf.mxu0
        %v498 = vadd.f32 %v353, %v497
        %v499 = vpop.f32.mrf.mxu0
        %v500 = vadd.f32 %v355, %v499
        %501 = vdwg.mxu0
        %502 = vmatprep.subr.mxu0 0.0
        %503 = vmatpush1.msra.mxu0 0.0
        %504 = vmatprep.subr.mxu0 0.0
        %505 = vmatpush1.msra.mxu0 0.0
        %506 = vmatprep.subr.mxu0 0.0
        %507 = vmatpush1.msra.mxu0 0.0
        %508 = vmatprep.subr.mxu0 0.0
        %509 = vmatpush1.msra.mxu0 0.0
        %510 = vmatprep.subr.mxu0 0.0
        %511 = vmatpush1.msra.mxu0 0.0
        %512 = vmatprep.subr.mxu0 0.0
        %513 = vmatpush1.msra.mxu0 0.0
        %514 = vmatprep.subr.mxu0 0.0
        %515 = vmatpush1.msra.mxu0 0.0
        %516 = vmatprep.subr.mxu0 0.0
        %517 = vmatpush1.msra.mxu0 0.0
        %518 = vmatprep.subr.mxu0 0.0
        %519 = vmatpush1.msra.mxu0 0.0
        %520 = vmatprep.subr.mxu0 0.0
        %521 = vmatpush1.msra.mxu0 0.0
        %522 = vmatprep.subr.mxu0 0.0
        %523 = vmatpush1.msra.mxu0 0.0
        %524 = vmatprep.subr.mxu0 0.0
        %525 = vmatpush1.msra.mxu0 0.0
        %526 = vmatprep.subr.mxu0 0.0
        %527 = vmatpush1.msra.mxu0 0.0
        %528 = vmatprep.subr.mxu0 0.0
        %529 = vmatpush1.msra.mxu0 0.0
        %530 = vmatprep.subr.mxu0 0.0
        %531 = vmatpush1.msra.mxu0 0.0
        %532 = vmatprep.subr.mxu0 %v253
        %533 = vmatpush1.msra.mxu0 %v252
        %534 = vmatprep.subr.mxu0 0.0
        %535 = vmatpush2.msra.mxu0 0.0
        %536 = vmatprep.subr.mxu0 0.0
        %537 = vmatpush2.msra.mxu0 0.0
        %538 = vmatprep.subr.mxu0 0.0
        %539 = vmatpush2.msra.mxu0 0.0
        %540 = vmatprep.subr.mxu0 0.0
        %541 = vmatpush2.msra.mxu0 0.0
        %542 = vmatprep.subr.mxu0 0.0
        %543 = vmatpush2.msra.mxu0 0.0
        %544 = vmatprep.subr.mxu0 0.0
        %545 = vmatpush2.msra.mxu0 0.0
        %546 = vmatprep.subr.mxu0 0.0
        %547 = vmatpush2.msra.mxu0 0.0
        %548 = vmatprep.subr.mxu0 0.0
        %549 = vmatpush2.msra.mxu0 0.0
        %550 = vmatprep.subr.mxu0 0.0
        %551 = vmatpush2.msra.mxu0 0.0
        %552 = vmatprep.subr.mxu0 0.0
        %553 = vmatpush2.msra.mxu0 0.0
        %554 = vmatprep.subr.mxu0 0.0
        %555 = vmatpush2.msra.mxu0 0.0
        %556 = vmatprep.subr.mxu0 0.0
        %557 = vmatpush2.msra.mxu0 0.0
        %558 = vmatprep.subr.mxu0 0.0
        %559 = vmatpush2.msra.mxu0 0.0
        %560 = vmatprep.subr.mxu0 0.0
        %561 = vmatpush2.msra.mxu0 0.0
        %562 = vmatprep.subr.mxu0 0.0
        %563 = vmatpush2.msra.mxu0 0.0
        %564 = vmatprep.subr.mxu0 0.0
        %565 = vmatpush2.msra.mxu0 0.0
        %566 = vmatprep.mubr.f32.mxu0 0.0
        %567 = vmatmul.mubr.f32.gmra.mxu0 %v429
        %v568 = vpop.f32.mrf.mxu0
        %v569 = vadd.f32 %v424, %v568
        %v570 = vpop.f32.mrf.mxu0
        %v571 = vadd.f32 %v426, %v570
        %572 = vdwg.mxu0
        %s573 = scalar_lea.vmem %s1, 16
        %v574 = vld [vmem:[%s573] sm:$0xff]
        %575 = vrot.lane.b32.xlu0 %v250, 126
        %v576 = vpop.permute.xlu0 %575
        %577 = vrot.lane.b32.xlu0 %v251, 126
        %v578 = vpop.permute.xlu0 %577
        %579 = vrot.lane.b32.xlu0 %v252, 126
        %v580 = vpop.permute.xlu0 %579
        %581 = vrot.lane.b32.xlu0 %v253, 126
        %v582 = vpop.permute.xlu0 %581
        %583 = vrot.lane.b32.xlu0 %v254, 126
        %v584 = vpop.permute.xlu0 %583
        %vm585 = vcmask 1031168
        %v586 = vsel %vm585, %v576, %v578
        %v587 = vsel %vm585, %v578, %v580
        %v588 = vsel %vm585, %v580, %v582
        %v589 = vsel %vm585, %v582, %v584
        %v595 = vsel %vm282, %v574, 0
        %597 = vmatprep.subr.mxu0 0.0
        %598 = vmatpush1.msra.mxu0 0.0
        %599 = vmatprep.subr.mxu0 0.0
        %600 = vmatpush1.msra.mxu0 0.0
        %601 = vmatprep.subr.mxu0 0.0
        %602 = vmatpush1.msra.mxu0 0.0
        %603 = vmatprep.subr.mxu0 0.0
        %604 = vmatpush1.msra.mxu0 0.0
        %605 = vmatprep.subr.mxu0 0.0
        %606 = vmatpush1.msra.mxu0 0.0
        %607 = vmatprep.subr.mxu0 0.0
        %608 = vmatpush1.msra.mxu0 0.0
        %609 = vmatprep.subr.mxu0 0.0
        %610 = vmatpush1.msra.mxu0 0.0
        %611 = vmatprep.subr.mxu0 0.0
        %612 = vmatpush1.msra.mxu0 0.0
        %613 = vmatprep.subr.mxu0 0.0
        %614 = vmatpush1.msra.mxu0 0.0
        %615 = vmatprep.subr.mxu0 0.0
        %616 = vmatpush1.msra.mxu0 0.0
        %617 = vmatprep.subr.mxu0 0.0
        %618 = vmatpush1.msra.mxu0 0.0
        %619 = vmatprep.subr.mxu0 0.0
        %620 = vmatpush1.msra.mxu0 0.0
        %621 = vmatprep.subr.mxu0 0.0
        %622 = vmatpush1.msra.mxu0 0.0
        %623 = vmatprep.subr.mxu0 0.0
        %624 = vmatpush1.msra.mxu0 0.0
        %625 = vmatprep.subr.mxu0 0.0
        %626 = vmatpush1.msra.mxu0 0.0
        %627 = vmatprep.subr.mxu0 %v587
        %628 = vmatpush1.msra.mxu0 %v586
        %629 = vmatprep.subr.mxu0 0.0
        %630 = vmatpush2.msra.mxu0 0.0
        %631 = vmatprep.subr.mxu0 0.0
        %632 = vmatpush2.msra.mxu0 0.0
        %633 = vmatprep.subr.mxu0 0.0
        %634 = vmatpush2.msra.mxu0 0.0
        %635 = vmatprep.subr.mxu0 0.0
        %636 = vmatpush2.msra.mxu0 0.0
        %637 = vmatprep.subr.mxu0 0.0
        %638 = vmatpush2.msra.mxu0 0.0
        %639 = vmatprep.subr.mxu0 0.0
        %640 = vmatpush2.msra.mxu0 0.0
        %641 = vmatprep.subr.mxu0 0.0
        %642 = vmatpush2.msra.mxu0 0.0
        %643 = vmatprep.subr.mxu0 0.0
        %644 = vmatpush2.msra.mxu0 0.0
        %645 = vmatprep.subr.mxu0 0.0
        %646 = vmatpush2.msra.mxu0 0.0
        %647 = vmatprep.subr.mxu0 0.0
        %648 = vmatpush2.msra.mxu0 0.0
        %649 = vmatprep.subr.mxu0 0.0
        %650 = vmatpush2.msra.mxu0 0.0
        %651 = vmatprep.subr.mxu0 0.0
        %652 = vmatpush2.msra.mxu0 0.0
        %653 = vmatprep.subr.mxu0 0.0
        %654 = vmatpush2.msra.mxu0 0.0
        %655 = vmatprep.subr.mxu0 0.0
        %656 = vmatpush2.msra.mxu0 0.0
        %657 = vmatprep.subr.mxu0 0.0
        %658 = vmatpush2.msra.mxu0 0.0
        %659 = vmatprep.subr.mxu0 0.0
        %660 = vmatpush2.msra.mxu0 0.0
        %661 = vmatprep.mubr.f32.mxu0 0.0
        %662 = vmatmul.mubr.f32.gmra.mxu0 %v595
        %v663 = vpop.f32.mrf.mxu0
        %v664 = vadd.f32 0.0, %v663
        %v665 = vpop.f32.mrf.mxu0
        %v666 = vadd.f32 0.0, %v665
        %667 = vdwg.mxu0
        %668 = vmatprep.subr.mxu0 0.0
        %669 = vmatpush1.msra.mxu0 0.0
        %670 = vmatprep.subr.mxu0 0.0
        %671 = vmatpush1.msra.mxu0 0.0
        %672 = vmatprep.subr.mxu0 0.0
        %673 = vmatpush1.msra.mxu0 0.0
        %674 = vmatprep.subr.mxu0 0.0
        %675 = vmatpush1.msra.mxu0 0.0
        %676 = vmatprep.subr.mxu0 0.0
        %677 = vmatpush1.msra.mxu0 0.0
        %678 = vmatprep.subr.mxu0 0.0
        %679 = vmatpush1.msra.mxu0 0.0
        %680 = vmatprep.subr.mxu0 0.0
        %681 = vmatpush1.msra.mxu0 0.0
        %682 = vmatprep.subr.mxu0 0.0
        %683 = vmatpush1.msra.mxu0 0.0
        %684 = vmatprep.subr.mxu0 0.0
        %685 = vmatpush1.msra.mxu0 0.0
        %686 = vmatprep.subr.mxu0 0.0
        %687 = vmatpush1.msra.mxu0 0.0
        %688 = vmatprep.subr.mxu0 0.0
        %689 = vmatpush1.msra.mxu0 0.0
        %690 = vmatprep.subr.mxu0 0.0
        %691 = vmatpush1.msra.mxu0 0.0
        %692 = vmatprep.subr.mxu0 0.0
        %693 = vmatpush1.msra.mxu0 0.0
        %694 = vmatprep.subr.mxu0 0.0
        %695 = vmatpush1.msra.mxu0 0.0
        %696 = vmatprep.subr.mxu0 0.0
        %697 = vmatpush1.msra.mxu0 0.0
        %698 = vmatprep.subr.mxu0 %v589
        %699 = vmatpush1.msra.mxu0 %v588
        %700 = vmatprep.subr.mxu0 0.0
        %701 = vmatpush2.msra.mxu0 0.0
        %702 = vmatprep.subr.mxu0 0.0
        %703 = vmatpush2.msra.mxu0 0.0
        %704 = vmatprep.subr.mxu0 0.0
        %705 = vmatpush2.msra.mxu0 0.0
        %706 = vmatprep.subr.mxu0 0.0
        %707 = vmatpush2.msra.mxu0 0.0
        %708 = vmatprep.subr.mxu0 0.0
        %709 = vmatpush2.msra.mxu0 0.0
        %710 = vmatprep.subr.mxu0 0.0
        %711 = vmatpush2.msra.mxu0 0.0
        %712 = vmatprep.subr.mxu0 0.0
        %713 = vmatpush2.msra.mxu0 0.0
        %714 = vmatprep.subr.mxu0 0.0
        %715 = vmatpush2.msra.mxu0 0.0
        %716 = vmatprep.subr.mxu0 0.0
        %717 = vmatpush2.msra.mxu0 0.0
        %718 = vmatprep.subr.mxu0 0.0
        %719 = vmatpush2.msra.mxu0 0.0
        %720 = vmatprep.subr.mxu0 0.0
        %721 = vmatpush2.msra.mxu0 0.0
        %722 = vmatprep.subr.mxu0 0.0
        %723 = vmatpush2.msra.mxu0 0.0
        %724 = vmatprep.subr.mxu0 0.0
        %725 = vmatpush2.msra.mxu0 0.0
        %726 = vmatprep.subr.mxu0 0.0
        %727 = vmatpush2.msra.mxu0 0.0
        %728 = vmatprep.subr.mxu0 0.0
        %729 = vmatpush2.msra.mxu0 0.0
        %730 = vmatprep.subr.mxu0 0.0
        %731 = vmatpush2.msra.mxu0 0.0
        %732 = vmatprep.mubr.f32.mxu0 0.0
        %733 = vmatmul.mubr.f32.gmra.mxu0 %v595
        %v734 = vpop.f32.mrf.mxu0
        %v735 = vadd.f32 0.0, %v734
        %v736 = vpop.f32.mrf.mxu0
        %v737 = vadd.f32 0.0, %v736
        %738 = vdwg.mxu0
        %v739 = vadd.f32 %v498, %v664
        %v740 = vadd.f32 %v500, %v666
        %v741 = vadd.f32 %v569, %v735
        %v742 = vadd.f32 %v571, %v737
        %s743 = scalar_lea.vmem %s1, 24
        %v744 = vld [vmem:[%s743] sm:$0xff]
        %745 = vrot.lane.b32.xlu0 %v250, 110
        %v746 = vpop.permute.xlu0 %745
        %747 = vrot.lane.b32.xlu0 %v251, 110
        %v748 = vpop.permute.xlu0 %747
        %749 = vrot.lane.b32.xlu0 %v252, 110
        %v750 = vpop.permute.xlu0 %749
        %751 = vrot.lane.b32.xlu0 %v253, 110
        %v752 = vpop.permute.xlu0 %751
        %753 = vrot.lane.b32.xlu0 %v254, 110
        %v754 = vpop.permute.xlu0 %753
        %vm755 = vcmask 900096
        %v756 = vsel %vm755, %v746, %v748
        %v757 = vsel %vm755, %v748, %v750
        %v758 = vsel %vm755, %v750, %v752
        %v759 = vsel %vm755, %v752, %v754
        %v765 = vsel %vm282, %v744, 0
        %767 = vmatprep.subr.mxu0 0.0
        %768 = vmatpush1.msra.mxu0 0.0
        %769 = vmatprep.subr.mxu0 0.0
        %770 = vmatpush1.msra.mxu0 0.0
        %771 = vmatprep.subr.mxu0 0.0
        %772 = vmatpush1.msra.mxu0 0.0
        %773 = vmatprep.subr.mxu0 0.0
        %774 = vmatpush1.msra.mxu0 0.0
        %775 = vmatprep.subr.mxu0 0.0
        %776 = vmatpush1.msra.mxu0 0.0
        %777 = vmatprep.subr.mxu0 0.0
        %778 = vmatpush1.msra.mxu0 0.0
        %779 = vmatprep.subr.mxu0 0.0
        %780 = vmatpush1.msra.mxu0 0.0
        %781 = vmatprep.subr.mxu0 0.0
        %782 = vmatpush1.msra.mxu0 0.0
        %783 = vmatprep.subr.mxu0 0.0
        %784 = vmatpush1.msra.mxu0 0.0
        %785 = vmatprep.subr.mxu0 0.0
        %786 = vmatpush1.msra.mxu0 0.0
        %787 = vmatprep.subr.mxu0 0.0
        %788 = vmatpush1.msra.mxu0 0.0
        %789 = vmatprep.subr.mxu0 0.0
        %790 = vmatpush1.msra.mxu0 0.0
        %791 = vmatprep.subr.mxu0 0.0
        %792 = vmatpush1.msra.mxu0 0.0
        %793 = vmatprep.subr.mxu0 0.0
        %794 = vmatpush1.msra.mxu0 0.0
        %795 = vmatprep.subr.mxu0 0.0
        %796 = vmatpush1.msra.mxu0 0.0
        %797 = vmatprep.subr.mxu0 %v757
        %798 = vmatpush1.msra.mxu0 %v756
        %799 = vmatprep.subr.mxu0 0.0
        %800 = vmatpush2.msra.mxu0 0.0
        %801 = vmatprep.subr.mxu0 0.0
        %802 = vmatpush2.msra.mxu0 0.0
        %803 = vmatprep.subr.mxu0 0.0
        %804 = vmatpush2.msra.mxu0 0.0
        %805 = vmatprep.subr.mxu0 0.0
        %806 = vmatpush2.msra.mxu0 0.0
        %807 = vmatprep.subr.mxu0 0.0
        %808 = vmatpush2.msra.mxu0 0.0
        %809 = vmatprep.subr.mxu0 0.0
        %810 = vmatpush2.msra.mxu0 0.0
        %811 = vmatprep.subr.mxu0 0.0
        %812 = vmatpush2.msra.mxu0 0.0
        %813 = vmatprep.subr.mxu0 0.0
        %814 = vmatpush2.msra.mxu0 0.0
        %815 = vmatprep.subr.mxu0 0.0
        %816 = vmatpush2.msra.mxu0 0.0
        %817 = vmatprep.subr.mxu0 0.0
        %818 = vmatpush2.msra.mxu0 0.0
        %819 = vmatprep.subr.mxu0 0.0
        %820 = vmatpush2.msra.mxu0 0.0
        %821 = vmatprep.subr.mxu0 0.0
        %822 = vmatpush2.msra.mxu0 0.0
        %823 = vmatprep.subr.mxu0 0.0
        %824 = vmatpush2.msra.mxu0 0.0
        %825 = vmatprep.subr.mxu0 0.0
        %826 = vmatpush2.msra.mxu0 0.0
        %827 = vmatprep.subr.mxu0 0.0
        %828 = vmatpush2.msra.mxu0 0.0
        %829 = vmatprep.subr.mxu0 0.0
        %830 = vmatpush2.msra.mxu0 0.0
        %831 = vmatprep.mubr.f32.mxu0 0.0
        %832 = vmatmul.mubr.f32.gmra.mxu0 %v765
        %v833 = vpop.f32.mrf.mxu0
        %v834 = vadd.f32 0.0, %v833
        %v835 = vpop.f32.mrf.mxu0
        %v836 = vadd.f32 0.0, %v835
        %837 = vdwg.mxu0
        %838 = vmatprep.subr.mxu0 0.0
        %839 = vmatpush1.msra.mxu0 0.0
        %840 = vmatprep.subr.mxu0 0.0
        %841 = vmatpush1.msra.mxu0 0.0
        %842 = vmatprep.subr.mxu0 0.0
        %843 = vmatpush1.msra.mxu0 0.0
        %844 = vmatprep.subr.mxu0 0.0
        %845 = vmatpush1.msra.mxu0 0.0
        %846 = vmatprep.subr.mxu0 0.0
        %847 = vmatpush1.msra.mxu0 0.0
        %848 = vmatprep.subr.mxu0 0.0
        %849 = vmatpush1.msra.mxu0 0.0
        %850 = vmatprep.subr.mxu0 0.0
        %851 = vmatpush1.msra.mxu0 0.0
        %852 = vmatprep.subr.mxu0 0.0
        %853 = vmatpush1.msra.mxu0 0.0
        %854 = vmatprep.subr.mxu0 0.0
        %855 = vmatpush1.msra.mxu0 0.0
        %856 = vmatprep.subr.mxu0 0.0
        %857 = vmatpush1.msra.mxu0 0.0
        %858 = vmatprep.subr.mxu0 0.0
        %859 = vmatpush1.msra.mxu0 0.0
        %860 = vmatprep.subr.mxu0 0.0
        %861 = vmatpush1.msra.mxu0 0.0
        %862 = vmatprep.subr.mxu0 0.0
        %863 = vmatpush1.msra.mxu0 0.0
        %864 = vmatprep.subr.mxu0 0.0
        %865 = vmatpush1.msra.mxu0 0.0
        %866 = vmatprep.subr.mxu0 0.0
        %867 = vmatpush1.msra.mxu0 0.0
        %868 = vmatprep.subr.mxu0 %v759
        %869 = vmatpush1.msra.mxu0 %v758
        %870 = vmatprep.subr.mxu0 0.0
        %871 = vmatpush2.msra.mxu0 0.0
        %872 = vmatprep.subr.mxu0 0.0
        %873 = vmatpush2.msra.mxu0 0.0
        %874 = vmatprep.subr.mxu0 0.0
        %875 = vmatpush2.msra.mxu0 0.0
        %876 = vmatprep.subr.mxu0 0.0
        %877 = vmatpush2.msra.mxu0 0.0
        %878 = vmatprep.subr.mxu0 0.0
        %879 = vmatpush2.msra.mxu0 0.0
        %880 = vmatprep.subr.mxu0 0.0
        %881 = vmatpush2.msra.mxu0 0.0
        %882 = vmatprep.subr.mxu0 0.0
        %883 = vmatpush2.msra.mxu0 0.0
        %884 = vmatprep.subr.mxu0 0.0
        %885 = vmatpush2.msra.mxu0 0.0
        %886 = vmatprep.subr.mxu0 0.0
        %887 = vmatpush2.msra.mxu0 0.0
        %888 = vmatprep.subr.mxu0 0.0
        %889 = vmatpush2.msra.mxu0 0.0
        %890 = vmatprep.subr.mxu0 0.0
        %891 = vmatpush2.msra.mxu0 0.0
        %892 = vmatprep.subr.mxu0 0.0
        %893 = vmatpush2.msra.mxu0 0.0
        %894 = vmatprep.subr.mxu0 0.0
        %895 = vmatpush2.msra.mxu0 0.0
        %896 = vmatprep.subr.mxu0 0.0
        %897 = vmatpush2.msra.mxu0 0.0
        %898 = vmatprep.subr.mxu0 0.0
        %899 = vmatpush2.msra.mxu0 0.0
        %900 = vmatprep.subr.mxu0 0.0
        %901 = vmatpush2.msra.mxu0 0.0
        %902 = vmatprep.mubr.f32.mxu0 0.0
        %903 = vmatmul.mubr.f32.gmra.mxu0 %v765
        %v904 = vpop.f32.mrf.mxu0
        %v905 = vadd.f32 0.0, %v904
        %v906 = vpop.f32.mrf.mxu0
        %v907 = vadd.f32 0.0, %v906
        %908 = vdwg.mxu0
        %v909 = vadd.f32 %v739, %v834
        %v910 = vadd.f32 %v740, %v836
        %v911 = vadd.f32 %v741, %v905
        %v912 = vadd.f32 %v742, %v907
        %s913 = scalar_lea.vmem %s1, 32
        %v914 = vld [vmem:[%s913] sm:$0xff]
        %915 = vrot.lane.b32.xlu0 %v250, 109
        %v916 = vpop.permute.xlu0 %915
        %917 = vrot.lane.b32.xlu0 %v251, 109
        %v918 = vpop.permute.xlu0 %917
        %919 = vrot.lane.b32.xlu0 %v252, 109
        %v920 = vpop.permute.xlu0 %919
        %921 = vrot.lane.b32.xlu0 %v253, 109
        %v922 = vpop.permute.xlu0 %921
        %923 = vrot.lane.b32.xlu0 %v254, 109
        %v924 = vpop.permute.xlu0 %923
        %vm925 = vcmask 891904
        %v926 = vsel %vm925, %v916, %v918
        %v927 = vsel %vm925, %v918, %v920
        %v928 = vsel %vm925, %v920, %v922
        %v929 = vsel %vm925, %v922, %v924
        %v935 = vsel %vm282, %v914, 0
        %937 = vmatprep.subr.mxu0 0.0
        %938 = vmatpush1.msra.mxu0 0.0
        %939 = vmatprep.subr.mxu0 0.0
        %940 = vmatpush1.msra.mxu0 0.0
        %941 = vmatprep.subr.mxu0 0.0
        %942 = vmatpush1.msra.mxu0 0.0
        %943 = vmatprep.subr.mxu0 0.0
        %944 = vmatpush1.msra.mxu0 0.0
        %945 = vmatprep.subr.mxu0 0.0
        %946 = vmatpush1.msra.mxu0 0.0
        %947 = vmatprep.subr.mxu0 0.0
        %948 = vmatpush1.msra.mxu0 0.0
        %949 = vmatprep.subr.mxu0 0.0
        %950 = vmatpush1.msra.mxu0 0.0
        %951 = vmatprep.subr.mxu0 0.0
        %952 = vmatpush1.msra.mxu0 0.0
        %953 = vmatprep.subr.mxu0 0.0
        %954 = vmatpush1.msra.mxu0 0.0
        %955 = vmatprep.subr.mxu0 0.0
        %956 = vmatpush1.msra.mxu0 0.0
        %957 = vmatprep.subr.mxu0 0.0
        %958 = vmatpush1.msra.mxu0 0.0
        %959 = vmatprep.subr.mxu0 0.0
        %960 = vmatpush1.msra.mxu0 0.0
        %961 = vmatprep.subr.mxu0 0.0
        %962 = vmatpush1.msra.mxu0 0.0
        %963 = vmatprep.subr.mxu0 0.0
        %964 = vmatpush1.msra.mxu0 0.0
        %965 = vmatprep.subr.mxu0 0.0
        %966 = vmatpush1.msra.mxu0 0.0
        %967 = vmatprep.subr.mxu0 %v927
        %968 = vmatpush1.msra.mxu0 %v926
        %969 = vmatprep.subr.mxu0 0.0
        %970 = vmatpush2.msra.mxu0 0.0
        %971 = vmatprep.subr.mxu0 0.0
        %972 = vmatpush2.msra.mxu0 0.0
        %973 = vmatprep.subr.mxu0 0.0
        %974 = vmatpush2.msra.mxu0 0.0
        %975 = vmatprep.subr.mxu0 0.0
        %976 = vmatpush2.msra.mxu0 0.0
        %977 = vmatprep.subr.mxu0 0.0
        %978 = vmatpush2.msra.mxu0 0.0
        %979 = vmatprep.subr.mxu0 0.0
        %980 = vmatpush2.msra.mxu0 0.0
        %981 = vmatprep.subr.mxu0 0.0
        %982 = vmatpush2.msra.mxu0 0.0
        %983 = vmatprep.subr.mxu0 0.0
        %984 = vmatpush2.msra.mxu0 0.0
        %985 = vmatprep.subr.mxu0 0.0
        %986 = vmatpush2.msra.mxu0 0.0
        %987 = vmatprep.subr.mxu0 0.0
        %988 = vmatpush2.msra.mxu0 0.0
        %989 = vmatprep.subr.mxu0 0.0
        %990 = vmatpush2.msra.mxu0 0.0
        %991 = vmatprep.subr.mxu0 0.0
        %992 = vmatpush2.msra.mxu0 0.0
        %993 = vmatprep.subr.mxu0 0.0
        %994 = vmatpush2.msra.mxu0 0.0
        %995 = vmatprep.subr.mxu0 0.0
        %996 = vmatpush2.msra.mxu0 0.0
        %997 = vmatprep.subr.mxu0 0.0
        %998 = vmatpush2.msra.mxu0 0.0
        %999 = vmatprep.subr.mxu0 0.0
        %1000 = vmatpush2.msra.mxu0 0.0
        %1001 = vmatprep.mubr.f32.mxu0 0.0
        %1002 = vmatmul.mubr.f32.gmra.mxu0 %v935
        %v1003 = vpop.f32.mrf.mxu0
        %v1004 = vadd.f32 0.0, %v1003
        %v1005 = vpop.f32.mrf.mxu0
        %v1006 = vadd.f32 0.0, %v1005
        %1007 = vdwg.mxu0
        %1008 = vmatprep.subr.mxu0 0.0
        %1009 = vmatpush1.msra.mxu0 0.0
        %1010 = vmatprep.subr.mxu0 0.0
        %1011 = vmatpush1.msra.mxu0 0.0
        %1012 = vmatprep.subr.mxu0 0.0
        %1013 = vmatpush1.msra.mxu0 0.0
        %1014 = vmatprep.subr.mxu0 0.0
        %1015 = vmatpush1.msra.mxu0 0.0
        %1016 = vmatprep.subr.mxu0 0.0
        %1017 = vmatpush1.msra.mxu0 0.0
        %1018 = vmatprep.subr.mxu0 0.0
        %1019 = vmatpush1.msra.mxu0 0.0
        %1020 = vmatprep.subr.mxu0 0.0
        %1021 = vmatpush1.msra.mxu0 0.0
        %1022 = vmatprep.subr.mxu0 0.0
        %1023 = vmatpush1.msra.mxu0 0.0
        %1024 = vmatprep.subr.mxu0 0.0
        %1025 = vmatpush1.msra.mxu0 0.0
        %1026 = vmatprep.subr.mxu0 0.0
        %1027 = vmatpush1.msra.mxu0 0.0
        %1028 = vmatprep.subr.mxu0 0.0
        %1029 = vmatpush1.msra.mxu0 0.0
        %1030 = vmatprep.subr.mxu0 0.0
        %1031 = vmatpush1.msra.mxu0 0.0
        %1032 = vmatprep.subr.mxu0 0.0
        %1033 = vmatpush1.msra.mxu0 0.0
        %1034 = vmatprep.subr.mxu0 0.0
        %1035 = vmatpush1.msra.mxu0 0.0
        %1036 = vmatprep.subr.mxu0 0.0
        %1037 = vmatpush1.msra.mxu0 0.0
        %1038 = vmatprep.subr.mxu0 %v929
        %1039 = vmatpush1.msra.mxu0 %v928
        %1040 = vmatprep.subr.mxu0 0.0
        %1041 = vmatpush2.msra.mxu0 0.0
        %1042 = vmatprep.subr.mxu0 0.0
        %1043 = vmatpush2.msra.mxu0 0.0
        %1044 = vmatprep.subr.mxu0 0.0
        %1045 = vmatpush2.msra.mxu0 0.0
        %1046 = vmatprep.subr.mxu0 0.0
        %1047 = vmatpush2.msra.mxu0 0.0
        %1048 = vmatprep.subr.mxu0 0.0
        %1049 = vmatpush2.msra.mxu0 0.0
        %1050 = vmatprep.subr.mxu0 0.0
        %1051 = vmatpush2.msra.mxu0 0.0
        %1052 = vmatprep.subr.mxu0 0.0
        %1053 = vmatpush2.msra.mxu0 0.0
        %1054 = vmatprep.subr.mxu0 0.0
        %1055 = vmatpush2.msra.mxu0 0.0
        %1056 = vmatprep.subr.mxu0 0.0
        %1057 = vmatpush2.msra.mxu0 0.0
        %1058 = vmatprep.subr.mxu0 0.0
        %1059 = vmatpush2.msra.mxu0 0.0
        %1060 = vmatprep.subr.mxu0 0.0
        %1061 = vmatpush2.msra.mxu0 0.0
        %1062 = vmatprep.subr.mxu0 0.0
        %1063 = vmatpush2.msra.mxu0 0.0
        %1064 = vmatprep.subr.mxu0 0.0
        %1065 = vmatpush2.msra.mxu0 0.0
        %1066 = vmatprep.subr.mxu0 0.0
        %1067 = vmatpush2.msra.mxu0 0.0
        %1068 = vmatprep.subr.mxu0 0.0
        %1069 = vmatpush2.msra.mxu0 0.0
        %1070 = vmatprep.subr.mxu0 0.0
        %1071 = vmatpush2.msra.mxu0 0.0
        %1072 = vmatprep.mubr.f32.mxu0 0.0
        %1073 = vmatmul.mubr.f32.gmra.mxu0 %v935
        %v1074 = vpop.f32.mrf.mxu0
        %v1075 = vadd.f32 0.0, %v1074
        %v1076 = vpop.f32.mrf.mxu0
        %v1077 = vadd.f32 0.0, %v1076
        %1078 = vdwg.mxu0
        %v1079 = vadd.f32 %v909, %v1004
        %v1080 = vadd.f32 %v910, %v1006
        %v1081 = vadd.f32 %v911, %v1075
        %v1082 = vadd.f32 %v912, %v1077
        %s1083 = scalar_lea.vmem %s1, 40
        %v1084 = vld [vmem:[%s1083] sm:$0xff]
        %1085 = vrot.lane.b32.xlu0 %v250, 108
        %v1086 = vpop.permute.xlu0 %1085
        %1087 = vrot.lane.b32.xlu0 %v251, 108
        %v1088 = vpop.permute.xlu0 %1087
        %1089 = vrot.lane.b32.xlu0 %v252, 108
        %v1090 = vpop.permute.xlu0 %1089
        %1091 = vrot.lane.b32.xlu0 %v253, 108
        %v1092 = vpop.permute.xlu0 %1091
        %1093 = vrot.lane.b32.xlu0 %v254, 108
        %v1094 = vpop.permute.xlu0 %1093
        %vm1095 = vcmask 883712
        %v1096 = vsel %vm1095, %v1086, %v1088
        %v1097 = vsel %vm1095, %v1088, %v1090
        %v1098 = vsel %vm1095, %v1090, %v1092
        %v1099 = vsel %vm1095, %v1092, %v1094
        %v1105 = vsel %vm282, %v1084, 0
        %1107 = vmatprep.subr.mxu0 0.0
        %1108 = vmatpush1.msra.mxu0 0.0
        %1109 = vmatprep.subr.mxu0 0.0
        %1110 = vmatpush1.msra.mxu0 0.0
        %1111 = vmatprep.subr.mxu0 0.0
        %1112 = vmatpush1.msra.mxu0 0.0
        %1113 = vmatprep.subr.mxu0 0.0
        %1114 = vmatpush1.msra.mxu0 0.0
        %1115 = vmatprep.subr.mxu0 0.0
        %1116 = vmatpush1.msra.mxu0 0.0
        %1117 = vmatprep.subr.mxu0 0.0
        %1118 = vmatpush1.msra.mxu0 0.0
        %1119 = vmatprep.subr.mxu0 0.0
        %1120 = vmatpush1.msra.mxu0 0.0
        %1121 = vmatprep.subr.mxu0 0.0
        %1122 = vmatpush1.msra.mxu0 0.0
        %1123 = vmatprep.subr.mxu0 0.0
        %1124 = vmatpush1.msra.mxu0 0.0
        %1125 = vmatprep.subr.mxu0 0.0
        %1126 = vmatpush1.msra.mxu0 0.0
        %1127 = vmatprep.subr.mxu0 0.0
        %1128 = vmatpush1.msra.mxu0 0.0
        %1129 = vmatprep.subr.mxu0 0.0
        %1130 = vmatpush1.msra.mxu0 0.0
        %1131 = vmatprep.subr.mxu0 0.0
        %1132 = vmatpush1.msra.mxu0 0.0
        %1133 = vmatprep.subr.mxu0 0.0
        %1134 = vmatpush1.msra.mxu0 0.0
        %1135 = vmatprep.subr.mxu0 0.0
        %1136 = vmatpush1.msra.mxu0 0.0
        %1137 = vmatprep.subr.mxu0 %v1097
        %1138 = vmatpush1.msra.mxu0 %v1096
        %1139 = vmatprep.subr.mxu0 0.0
        %1140 = vmatpush2.msra.mxu0 0.0
        %1141 = vmatprep.subr.mxu0 0.0
        %1142 = vmatpush2.msra.mxu0 0.0
        %1143 = vmatprep.subr.mxu0 0.0
        %1144 = vmatpush2.msra.mxu0 0.0
        %1145 = vmatprep.subr.mxu0 0.0
        %1146 = vmatpush2.msra.mxu0 0.0
        %1147 = vmatprep.subr.mxu0 0.0
        %1148 = vmatpush2.msra.mxu0 0.0
        %1149 = vmatprep.subr.mxu0 0.0
        %1150 = vmatpush2.msra.mxu0 0.0
        %1151 = vmatprep.subr.mxu0 0.0
        %1152 = vmatpush2.msra.mxu0 0.0
        %1153 = vmatprep.subr.mxu0 0.0
        %1154 = vmatpush2.msra.mxu0 0.0
        %1155 = vmatprep.subr.mxu0 0.0
        %1156 = vmatpush2.msra.mxu0 0.0
        %1157 = vmatprep.subr.mxu0 0.0
        %1158 = vmatpush2.msra.mxu0 0.0
        %1159 = vmatprep.subr.mxu0 0.0
        %1160 = vmatpush2.msra.mxu0 0.0
        %1161 = vmatprep.subr.mxu0 0.0
        %1162 = vmatpush2.msra.mxu0 0.0
        %1163 = vmatprep.subr.mxu0 0.0
        %1164 = vmatpush2.msra.mxu0 0.0
        %1165 = vmatprep.subr.mxu0 0.0
        %1166 = vmatpush2.msra.mxu0 0.0
        %1167 = vmatprep.subr.mxu0 0.0
        %1168 = vmatpush2.msra.mxu0 0.0
        %1169 = vmatprep.subr.mxu0 0.0
        %1170 = vmatpush2.msra.mxu0 0.0
        %1171 = vmatprep.mubr.f32.mxu0 0.0
        %1172 = vmatmul.mubr.f32.gmra.mxu0 %v1105
        %v1173 = vpop.f32.mrf.mxu0
        %v1174 = vadd.f32 0.0, %v1173
        %v1175 = vpop.f32.mrf.mxu0
        %v1176 = vadd.f32 0.0, %v1175
        %1177 = vdwg.mxu0
        %1178 = vmatprep.subr.mxu0 0.0
        %1179 = vmatpush1.msra.mxu0 0.0
        %1180 = vmatprep.subr.mxu0 0.0
        %1181 = vmatpush1.msra.mxu0 0.0
        %1182 = vmatprep.subr.mxu0 0.0
        %1183 = vmatpush1.msra.mxu0 0.0
        %1184 = vmatprep.subr.mxu0 0.0
        %1185 = vmatpush1.msra.mxu0 0.0
        %1186 = vmatprep.subr.mxu0 0.0
        %1187 = vmatpush1.msra.mxu0 0.0
        %1188 = vmatprep.subr.mxu0 0.0
        %1189 = vmatpush1.msra.mxu0 0.0
        %1190 = vmatprep.subr.mxu0 0.0
        %1191 = vmatpush1.msra.mxu0 0.0
        %1192 = vmatprep.subr.mxu0 0.0
        %1193 = vmatpush1.msra.mxu0 0.0
        %1194 = vmatprep.subr.mxu0 0.0
        %1195 = vmatpush1.msra.mxu0 0.0
        %1196 = vmatprep.subr.mxu0 0.0
        %1197 = vmatpush1.msra.mxu0 0.0
        %1198 = vmatprep.subr.mxu0 0.0
        %1199 = vmatpush1.msra.mxu0 0.0
        %1200 = vmatprep.subr.mxu0 0.0
        %1201 = vmatpush1.msra.mxu0 0.0
        %1202 = vmatprep.subr.mxu0 0.0
        %1203 = vmatpush1.msra.mxu0 0.0
        %1204 = vmatprep.subr.mxu0 0.0
        %1205 = vmatpush1.msra.mxu0 0.0
        %1206 = vmatprep.subr.mxu0 0.0
        %1207 = vmatpush1.msra.mxu0 0.0
        %1208 = vmatprep.subr.mxu0 %v1099
        %1209 = vmatpush1.msra.mxu0 %v1098
        %1210 = vmatprep.subr.mxu0 0.0
        %1211 = vmatpush2.msra.mxu0 0.0
        %1212 = vmatprep.subr.mxu0 0.0
        %1213 = vmatpush2.msra.mxu0 0.0
        %1214 = vmatprep.subr.mxu0 0.0
        %1215 = vmatpush2.msra.mxu0 0.0
        %1216 = vmatprep.subr.mxu0 0.0
        %1217 = vmatpush2.msra.mxu0 0.0
        %1218 = vmatprep.subr.mxu0 0.0
        %1219 = vmatpush2.msra.mxu0 0.0
        %1220 = vmatprep.subr.mxu0 0.0
        %1221 = vmatpush2.msra.mxu0 0.0
        %1222 = vmatprep.subr.mxu0 0.0
        %1223 = vmatpush2.msra.mxu0 0.0
        %1224 = vmatprep.subr.mxu0 0.0
        %1225 = vmatpush2.msra.mxu0 0.0
        %1226 = vmatprep.subr.mxu0 0.0
        %1227 = vmatpush2.msra.mxu0 0.0
        %1228 = vmatprep.subr.mxu0 0.0
        %1229 = vmatpush2.msra.mxu0 0.0
        %1230 = vmatprep.subr.mxu0 0.0
        %1231 = vmatpush2.msra.mxu0 0.0
        %1232 = vmatprep.subr.mxu0 0.0
        %1233 = vmatpush2.msra.mxu0 0.0
        %1234 = vmatprep.subr.mxu0 0.0
        %1235 = vmatpush2.msra.mxu0 0.0
        %1236 = vmatprep.subr.mxu0 0.0
        %1237 = vmatpush2.msra.mxu0 0.0
        %1238 = vmatprep.subr.mxu0 0.0
        %1239 = vmatpush2.msra.mxu0 0.0
        %1240 = vmatprep.subr.mxu0 0.0
        %1241 = vmatpush2.msra.mxu0 0.0
        %1242 = vmatprep.mubr.f32.mxu0 0.0
        %1243 = vmatmul.mubr.f32.gmra.mxu0 %v1105
        %v1244 = vpop.f32.mrf.mxu0
        %v1245 = vadd.f32 0.0, %v1244
        %v1246 = vpop.f32.mrf.mxu0
        %v1247 = vadd.f32 0.0, %v1246
        %1248 = vdwg.mxu0
        %v1249 = vadd.f32 %v1079, %v1174
        %v1250 = vadd.f32 %v1080, %v1176
        %v1251 = vadd.f32 %v1081, %v1245
        %v1252 = vadd.f32 %v1082, %v1247
        %s1253 = scalar_lea.vmem %s1, 48
        %v1254 = vld [vmem:[%s1253] sm:$0xff]
        %1255 = vrot.lane.b32.xlu0 %v250, 92
        %v1256 = vpop.permute.xlu0 %1255
        %1257 = vrot.lane.b32.xlu0 %v251, 92
        %v1258 = vpop.permute.xlu0 %1257
        %1259 = vrot.lane.b32.xlu0 %v252, 92
        %v1260 = vpop.permute.xlu0 %1259
        %1261 = vrot.lane.b32.xlu0 %v253, 92
        %v1262 = vpop.permute.xlu0 %1261
        %1263 = vrot.lane.b32.xlu0 %v254, 92
        %v1264 = vpop.permute.xlu0 %1263
        %vm1265 = vcmask 752640
        %v1266 = vsel %vm1265, %v1256, %v1258
        %v1267 = vsel %vm1265, %v1258, %v1260
        %v1268 = vsel %vm1265, %v1260, %v1262
        %v1269 = vsel %vm1265, %v1262, %v1264
        %v1275 = vsel %vm282, %v1254, 0
        %1277 = vmatprep.subr.mxu0 0.0
        %1278 = vmatpush1.msra.mxu0 0.0
        %1279 = vmatprep.subr.mxu0 0.0
        %1280 = vmatpush1.msra.mxu0 0.0
        %1281 = vmatprep.subr.mxu0 0.0
        %1282 = vmatpush1.msra.mxu0 0.0
        %1283 = vmatprep.subr.mxu0 0.0
        %1284 = vmatpush1.msra.mxu0 0.0
        %1285 = vmatprep.subr.mxu0 0.0
        %1286 = vmatpush1.msra.mxu0 0.0
        %1287 = vmatprep.subr.mxu0 0.0
        %1288 = vmatpush1.msra.mxu0 0.0
        %1289 = vmatprep.subr.mxu0 0.0
        %1290 = vmatpush1.msra.mxu0 0.0
        %1291 = vmatprep.subr.mxu0 0.0
        %1292 = vmatpush1.msra.mxu0 0.0
        %1293 = vmatprep.subr.mxu0 0.0
        %1294 = vmatpush1.msra.mxu0 0.0
        %1295 = vmatprep.subr.mxu0 0.0
        %1296 = vmatpush1.msra.mxu0 0.0
        %1297 = vmatprep.subr.mxu0 0.0
        %1298 = vmatpush1.msra.mxu0 0.0
        %1299 = vmatprep.subr.mxu0 0.0
        %1300 = vmatpush1.msra.mxu0 0.0
        %1301 = vmatprep.subr.mxu0 0.0
        %1302 = vmatpush1.msra.mxu0 0.0
        %1303 = vmatprep.subr.mxu0 0.0
        %1304 = vmatpush1.msra.mxu0 0.0
        %1305 = vmatprep.subr.mxu0 0.0
        %1306 = vmatpush1.msra.mxu0 0.0
        %1307 = vmatprep.subr.mxu0 %v1267
        %1308 = vmatpush1.msra.mxu0 %v1266
        %1309 = vmatprep.subr.mxu0 0.0
        %1310 = vmatpush2.msra.mxu0 0.0
        %1311 = vmatprep.subr.mxu0 0.0
        %1312 = vmatpush2.msra.mxu0 0.0
        %1313 = vmatprep.subr.mxu0 0.0
        %1314 = vmatpush2.msra.mxu0 0.0
        %1315 = vmatprep.subr.mxu0 0.0
        %1316 = vmatpush2.msra.mxu0 0.0
        %1317 = vmatprep.subr.mxu0 0.0
        %1318 = vmatpush2.msra.mxu0 0.0
        %1319 = vmatprep.subr.mxu0 0.0
        %1320 = vmatpush2.msra.mxu0 0.0
        %1321 = vmatprep.subr.mxu0 0.0
        %1322 = vmatpush2.msra.mxu0 0.0
        %1323 = vmatprep.subr.mxu0 0.0
        %1324 = vmatpush2.msra.mxu0 0.0
        %1325 = vmatprep.subr.mxu0 0.0
        %1326 = vmatpush2.msra.mxu0 0.0
        %1327 = vmatprep.subr.mxu0 0.0
        %1328 = vmatpush2.msra.mxu0 0.0
        %1329 = vmatprep.subr.mxu0 0.0
        %1330 = vmatpush2.msra.mxu0 0.0
        %1331 = vmatprep.subr.mxu0 0.0
        %1332 = vmatpush2.msra.mxu0 0.0
        %1333 = vmatprep.subr.mxu0 0.0
        %1334 = vmatpush2.msra.mxu0 0.0
        %1335 = vmatprep.subr.mxu0 0.0
        %1336 = vmatpush2.msra.mxu0 0.0
        %1337 = vmatprep.subr.mxu0 0.0
        %1338 = vmatpush2.msra.mxu0 0.0
        %1339 = vmatprep.subr.mxu0 0.0
        %1340 = vmatpush2.msra.mxu0 0.0
        %1341 = vmatprep.mubr.f32.mxu0 0.0
        %1342 = vmatmul.mubr.f32.gmra.mxu0 %v1275
        %v1343 = vpop.f32.mrf.mxu0
        %v1344 = vadd.f32 0.0, %v1343
        %v1345 = vpop.f32.mrf.mxu0
        %v1346 = vadd.f32 0.0, %v1345
        %1347 = vdwg.mxu0
        %1348 = vmatprep.subr.mxu0 0.0
        %1349 = vmatpush1.msra.mxu0 0.0
        %1350 = vmatprep.subr.mxu0 0.0
        %1351 = vmatpush1.msra.mxu0 0.0
        %1352 = vmatprep.subr.mxu0 0.0
        %1353 = vmatpush1.msra.mxu0 0.0
        %1354 = vmatprep.subr.mxu0 0.0
        %1355 = vmatpush1.msra.mxu0 0.0
        %1356 = vmatprep.subr.mxu0 0.0
        %1357 = vmatpush1.msra.mxu0 0.0
        %1358 = vmatprep.subr.mxu0 0.0
        %1359 = vmatpush1.msra.mxu0 0.0
        %1360 = vmatprep.subr.mxu0 0.0
        %1361 = vmatpush1.msra.mxu0 0.0
        %1362 = vmatprep.subr.mxu0 0.0
        %1363 = vmatpush1.msra.mxu0 0.0
        %1364 = vmatprep.subr.mxu0 0.0
        %1365 = vmatpush1.msra.mxu0 0.0
        %1366 = vmatprep.subr.mxu0 0.0
        %1367 = vmatpush1.msra.mxu0 0.0
        %1368 = vmatprep.subr.mxu0 0.0
        %1369 = vmatpush1.msra.mxu0 0.0
        %1370 = vmatprep.subr.mxu0 0.0
        %1371 = vmatpush1.msra.mxu0 0.0
        %1372 = vmatprep.subr.mxu0 0.0
        %1373 = vmatpush1.msra.mxu0 0.0
        %1374 = vmatprep.subr.mxu0 0.0
        %1375 = vmatpush1.msra.mxu0 0.0
        %1376 = vmatprep.subr.mxu0 0.0
        %1377 = vmatpush1.msra.mxu0 0.0
        %1378 = vmatprep.subr.mxu0 %v1269
        %1379 = vmatpush1.msra.mxu0 %v1268
        %1380 = vmatprep.subr.mxu0 0.0
        %1381 = vmatpush2.msra.mxu0 0.0
        %1382 = vmatprep.subr.mxu0 0.0
        %1383 = vmatpush2.msra.mxu0 0.0
        %1384 = vmatprep.subr.mxu0 0.0
        %1385 = vmatpush2.msra.mxu0 0.0
        %1386 = vmatprep.subr.mxu0 0.0
        %1387 = vmatpush2.msra.mxu0 0.0
        %1388 = vmatprep.subr.mxu0 0.0
        %1389 = vmatpush2.msra.mxu0 0.0
        %1390 = vmatprep.subr.mxu0 0.0
        %1391 = vmatpush2.msra.mxu0 0.0
        %1392 = vmatprep.subr.mxu0 0.0
        %1393 = vmatpush2.msra.mxu0 0.0
        %1394 = vmatprep.subr.mxu0 0.0
        %1395 = vmatpush2.msra.mxu0 0.0
        %1396 = vmatprep.subr.mxu0 0.0
        %1397 = vmatpush2.msra.mxu0 0.0
        %1398 = vmatprep.subr.mxu0 0.0
        %1399 = vmatpush2.msra.mxu0 0.0
        %1400 = vmatprep.subr.mxu0 0.0
        %1401 = vmatpush2.msra.mxu0 0.0
        %1402 = vmatprep.subr.mxu0 0.0
        %1403 = vmatpush2.msra.mxu0 0.0
        %1404 = vmatprep.subr.mxu0 0.0
        %1405 = vmatpush2.msra.mxu0 0.0
        %1406 = vmatprep.subr.mxu0 0.0
        %1407 = vmatpush2.msra.mxu0 0.0
        %1408 = vmatprep.subr.mxu0 0.0
        %1409 = vmatpush2.msra.mxu0 0.0
        %1410 = vmatprep.subr.mxu0 0.0
        %1411 = vmatpush2.msra.mxu0 0.0
        %1412 = vmatprep.mubr.f32.mxu0 0.0
        %1413 = vmatmul.mubr.f32.gmra.mxu0 %v1275
        %v1414 = vpop.f32.mrf.mxu0
        %v1415 = vadd.f32 0.0, %v1414
        %v1416 = vpop.f32.mrf.mxu0
        %v1417 = vadd.f32 0.0, %v1416
        %1418 = vdwg.mxu0
        %v1419 = vadd.f32 %v1249, %v1344
        %v1420 = vadd.f32 %v1250, %v1346
        %v1421 = vadd.f32 %v1251, %v1415
        %v1422 = vadd.f32 %v1252, %v1417
        %s1423 = scalar_lea.vmem %s1, 56
        %v1424 = vld [vmem:[%s1423] sm:$0xff]
        %1425 = vrot.lane.b32.xlu0 %v250, 91
        %v1426 = vpop.permute.xlu0 %1425
        %1427 = vrot.lane.b32.xlu0 %v251, 91
        %v1428 = vpop.permute.xlu0 %1427
        %1429 = vrot.lane.b32.xlu0 %v252, 91
        %v1430 = vpop.permute.xlu0 %1429
        %1431 = vrot.lane.b32.xlu0 %v253, 91
        %v1432 = vpop.permute.xlu0 %1431
        %1433 = vrot.lane.b32.xlu0 %v254, 91
        %v1434 = vpop.permute.xlu0 %1433
        %vm1435 = vcmask 744448
        %v1436 = vsel %vm1435, %v1426, %v1428
        %v1437 = vsel %vm1435, %v1428, %v1430
        %v1438 = vsel %vm1435, %v1430, %v1432
        %v1439 = vsel %vm1435, %v1432, %v1434
        %v1445 = vsel %vm282, %v1424, 0
        %1447 = vmatprep.subr.mxu0 0.0
        %1448 = vmatpush1.msra.mxu0 0.0
        %1449 = vmatprep.subr.mxu0 0.0
        %1450 = vmatpush1.msra.mxu0 0.0
        %1451 = vmatprep.subr.mxu0 0.0
        %1452 = vmatpush1.msra.mxu0 0.0
        %1453 = vmatprep.subr.mxu0 0.0
        %1454 = vmatpush1.msra.mxu0 0.0
        %1455 = vmatprep.subr.mxu0 0.0
        %1456 = vmatpush1.msra.mxu0 0.0
        %1457 = vmatprep.subr.mxu0 0.0
        %1458 = vmatpush1.msra.mxu0 0.0
        %1459 = vmatprep.subr.mxu0 0.0
        %1460 = vmatpush1.msra.mxu0 0.0
        %1461 = vmatprep.subr.mxu0 0.0
        %1462 = vmatpush1.msra.mxu0 0.0
        %1463 = vmatprep.subr.mxu0 0.0
        %1464 = vmatpush1.msra.mxu0 0.0
        %1465 = vmatprep.subr.mxu0 0.0
        %1466 = vmatpush1.msra.mxu0 0.0
        %1467 = vmatprep.subr.mxu0 0.0
        %1468 = vmatpush1.msra.mxu0 0.0
        %1469 = vmatprep.subr.mxu0 0.0
        %1470 = vmatpush1.msra.mxu0 0.0
        %1471 = vmatprep.subr.mxu0 0.0
        %1472 = vmatpush1.msra.mxu0 0.0
        %1473 = vmatprep.subr.mxu0 0.0
        %1474 = vmatpush1.msra.mxu0 0.0
        %1475 = vmatprep.subr.mxu0 0.0
        %1476 = vmatpush1.msra.mxu0 0.0
        %1477 = vmatprep.subr.mxu0 %v1437
        %1478 = vmatpush1.msra.mxu0 %v1436
        %1479 = vmatprep.subr.mxu0 0.0
        %1480 = vmatpush2.msra.mxu0 0.0
        %1481 = vmatprep.subr.mxu0 0.0
        %1482 = vmatpush2.msra.mxu0 0.0
        %1483 = vmatprep.subr.mxu0 0.0
        %1484 = vmatpush2.msra.mxu0 0.0
        %1485 = vmatprep.subr.mxu0 0.0
        %1486 = vmatpush2.msra.mxu0 0.0
        %1487 = vmatprep.subr.mxu0 0.0
        %1488 = vmatpush2.msra.mxu0 0.0
        %1489 = vmatprep.subr.mxu0 0.0
        %1490 = vmatpush2.msra.mxu0 0.0
        %1491 = vmatprep.subr.mxu0 0.0
        %1492 = vmatpush2.msra.mxu0 0.0
        %1493 = vmatprep.subr.mxu0 0.0
        %1494 = vmatpush2.msra.mxu0 0.0
        %1495 = vmatprep.subr.mxu0 0.0
        %1496 = vmatpush2.msra.mxu0 0.0
        %1497 = vmatprep.subr.mxu0 0.0
        %1498 = vmatpush2.msra.mxu0 0.0
        %1499 = vmatprep.subr.mxu0 0.0
        %1500 = vmatpush2.msra.mxu0 0.0
        %1501 = vmatprep.subr.mxu0 0.0
        %1502 = vmatpush2.msra.mxu0 0.0
        %1503 = vmatprep.subr.mxu0 0.0
        %1504 = vmatpush2.msra.mxu0 0.0
        %1505 = vmatprep.subr.mxu0 0.0
        %1506 = vmatpush2.msra.mxu0 0.0
        %1507 = vmatprep.subr.mxu0 0.0
        %1508 = vmatpush2.msra.mxu0 0.0
        %1509 = vmatprep.subr.mxu0 0.0
        %1510 = vmatpush2.msra.mxu0 0.0
        %1511 = vmatprep.mubr.f32.mxu0 0.0
        %1512 = vmatmul.mubr.f32.gmra.mxu0 %v1445
        %v1513 = vpop.f32.mrf.mxu0
        %v1514 = vadd.f32 0.0, %v1513
        %v1515 = vpop.f32.mrf.mxu0
        %v1516 = vadd.f32 0.0, %v1515
        %1517 = vdwg.mxu0
        %1518 = vmatprep.subr.mxu0 0.0
        %1519 = vmatpush1.msra.mxu0 0.0
        %1520 = vmatprep.subr.mxu0 0.0
        %1521 = vmatpush1.msra.mxu0 0.0
        %1522 = vmatprep.subr.mxu0 0.0
        %1523 = vmatpush1.msra.mxu0 0.0
        %1524 = vmatprep.subr.mxu0 0.0
        %1525 = vmatpush1.msra.mxu0 0.0
        %1526 = vmatprep.subr.mxu0 0.0
        %1527 = vmatpush1.msra.mxu0 0.0
        %1528 = vmatprep.subr.mxu0 0.0
        %1529 = vmatpush1.msra.mxu0 0.0
        %1530 = vmatprep.subr.mxu0 0.0
        %1531 = vmatpush1.msra.mxu0 0.0
        %1532 = vmatprep.subr.mxu0 0.0
        %1533 = vmatpush1.msra.mxu0 0.0
        %1534 = vmatprep.subr.mxu0 0.0
        %1535 = vmatpush1.msra.mxu0 0.0
        %1536 = vmatprep.subr.mxu0 0.0
        %1537 = vmatpush1.msra.mxu0 0.0
        %1538 = vmatprep.subr.mxu0 0.0
        %1539 = vmatpush1.msra.mxu0 0.0
        %1540 = vmatprep.subr.mxu0 0.0
        %1541 = vmatpush1.msra.mxu0 0.0
        %1542 = vmatprep.subr.mxu0 0.0
        %1543 = vmatpush1.msra.mxu0 0.0
        %1544 = vmatprep.subr.mxu0 0.0
        %1545 = vmatpush1.msra.mxu0 0.0
        %1546 = vmatprep.subr.mxu0 0.0
        %1547 = vmatpush1.msra.mxu0 0.0
        %1548 = vmatprep.subr.mxu0 %v1439
        %1549 = vmatpush1.msra.mxu0 %v1438
        %1550 = vmatprep.subr.mxu0 0.0
        %1551 = vmatpush2.msra.mxu0 0.0
        %1552 = vmatprep.subr.mxu0 0.0
        %1553 = vmatpush2.msra.mxu0 0.0
        %1554 = vmatprep.subr.mxu0 0.0
        %1555 = vmatpush2.msra.mxu0 0.0
        %1556 = vmatprep.subr.mxu0 0.0
        %1557 = vmatpush2.msra.mxu0 0.0
        %1558 = vmatprep.subr.mxu0 0.0
        %1559 = vmatpush2.msra.mxu0 0.0
        %1560 = vmatprep.subr.mxu0 0.0
        %1561 = vmatpush2.msra.mxu0 0.0
        %1562 = vmatprep.subr.mxu0 0.0
        %1563 = vmatpush2.msra.mxu0 0.0
        %1564 = vmatprep.subr.mxu0 0.0
        %1565 = vmatpush2.msra.mxu0 0.0
        %1566 = vmatprep.subr.mxu0 0.0
        %1567 = vmatpush2.msra.mxu0 0.0
        %1568 = vmatprep.subr.mxu0 0.0
        %1569 = vmatpush2.msra.mxu0 0.0
        %1570 = vmatprep.subr.mxu0 0.0
        %1571 = vmatpush2.msra.mxu0 0.0
        %1572 = vmatprep.subr.mxu0 0.0
        %1573 = vmatpush2.msra.mxu0 0.0
        %1574 = vmatprep.subr.mxu0 0.0
        %1575 = vmatpush2.msra.mxu0 0.0
        %1576 = vmatprep.subr.mxu0 0.0
        %1577 = vmatpush2.msra.mxu0 0.0
        %1578 = vmatprep.subr.mxu0 0.0
        %1579 = vmatpush2.msra.mxu0 0.0
        %1580 = vmatprep.subr.mxu0 0.0
        %1581 = vmatpush2.msra.mxu0 0.0
        %1582 = vmatprep.mubr.f32.mxu0 0.0
        %1583 = vmatmul.mubr.f32.gmra.mxu0 %v1445
        %v1584 = vpop.f32.mrf.mxu0
        %v1585 = vadd.f32 0.0, %v1584
        %v1586 = vpop.f32.mrf.mxu0
        %v1587 = vadd.f32 0.0, %v1586
        %1588 = vdwg.mxu0
        %v1589 = vadd.f32 %v1419, %v1514
        %v1590 = vadd.f32 %v1420, %v1516
        %v1591 = vadd.f32 %v1421, %v1585
        %v1592 = vadd.f32 %v1422, %v1587
        %s1593 = scalar_lea.vmem %s1, 64
        %v1594 = vld [vmem:[%s1593] sm:$0xff]
        %1595 = vrot.lane.b32.xlu0 %v250, 90
        %v1596 = vpop.permute.xlu0 %1595
        %1597 = vrot.lane.b32.xlu0 %v251, 90
        %v1598 = vpop.permute.xlu0 %1597
        %1599 = vrot.lane.b32.xlu0 %v252, 90
        %v1600 = vpop.permute.xlu0 %1599
        %1601 = vrot.lane.b32.xlu0 %v253, 90
        %v1602 = vpop.permute.xlu0 %1601
        %1603 = vrot.lane.b32.xlu0 %v254, 90
        %v1604 = vpop.permute.xlu0 %1603
        %vm1605 = vcmask 736256
        %v1606 = vsel %vm1605, %v1596, %v1598
        %v1607 = vsel %vm1605, %v1598, %v1600
        %v1608 = vsel %vm1605, %v1600, %v1602
        %v1609 = vsel %vm1605, %v1602, %v1604
        %v1615 = vsel %vm282, %v1594, 0
        %1617 = vmatprep.subr.mxu0 0.0
        %1618 = vmatpush1.msra.mxu0 0.0
        %1619 = vmatprep.subr.mxu0 0.0
        %1620 = vmatpush1.msra.mxu0 0.0
        %1621 = vmatprep.subr.mxu0 0.0
        %1622 = vmatpush1.msra.mxu0 0.0
        %1623 = vmatprep.subr.mxu0 0.0
        %1624 = vmatpush1.msra.mxu0 0.0
        %1625 = vmatprep.subr.mxu0 0.0
        %1626 = vmatpush1.msra.mxu0 0.0
        %1627 = vmatprep.subr.mxu0 0.0
        %1628 = vmatpush1.msra.mxu0 0.0
        %1629 = vmatprep.subr.mxu0 0.0
        %1630 = vmatpush1.msra.mxu0 0.0
        %1631 = vmatprep.subr.mxu0 0.0
        %1632 = vmatpush1.msra.mxu0 0.0
        %1633 = vmatprep.subr.mxu0 0.0
        %1634 = vmatpush1.msra.mxu0 0.0
        %1635 = vmatprep.subr.mxu0 0.0
        %1636 = vmatpush1.msra.mxu0 0.0
        %1637 = vmatprep.subr.mxu0 0.0
        %1638 = vmatpush1.msra.mxu0 0.0
        %1639 = vmatprep.subr.mxu0 0.0
        %1640 = vmatpush1.msra.mxu0 0.0
        %1641 = vmatprep.subr.mxu0 0.0
        %1642 = vmatpush1.msra.mxu0 0.0
        %1643 = vmatprep.subr.mxu0 0.0
        %1644 = vmatpush1.msra.mxu0 0.0
        %1645 = vmatprep.subr.mxu0 0.0
        %1646 = vmatpush1.msra.mxu0 0.0
        %1647 = vmatprep.subr.mxu0 %v1607
        %1648 = vmatpush1.msra.mxu0 %v1606
        %1649 = vmatprep.subr.mxu0 0.0
        %1650 = vmatpush2.msra.mxu0 0.0
        %1651 = vmatprep.subr.mxu0 0.0
        %1652 = vmatpush2.msra.mxu0 0.0
        %1653 = vmatprep.subr.mxu0 0.0
        %1654 = vmatpush2.msra.mxu0 0.0
        %1655 = vmatprep.subr.mxu0 0.0
        %1656 = vmatpush2.msra.mxu0 0.0
        %1657 = vmatprep.subr.mxu0 0.0
        %1658 = vmatpush2.msra.mxu0 0.0
        %1659 = vmatprep.subr.mxu0 0.0
        %1660 = vmatpush2.msra.mxu0 0.0
        %1661 = vmatprep.subr.mxu0 0.0
        %1662 = vmatpush2.msra.mxu0 0.0
        %1663 = vmatprep.subr.mxu0 0.0
        %1664 = vmatpush2.msra.mxu0 0.0
        %1665 = vmatprep.subr.mxu0 0.0
        %1666 = vmatpush2.msra.mxu0 0.0
        %1667 = vmatprep.subr.mxu0 0.0
        %1668 = vmatpush2.msra.mxu0 0.0
        %1669 = vmatprep.subr.mxu0 0.0
        %1670 = vmatpush2.msra.mxu0 0.0
        %1671 = vmatprep.subr.mxu0 0.0
        %1672 = vmatpush2.msra.mxu0 0.0
        %1673 = vmatprep.subr.mxu0 0.0
        %1674 = vmatpush2.msra.mxu0 0.0
        %1675 = vmatprep.subr.mxu0 0.0
        %1676 = vmatpush2.msra.mxu0 0.0
        %1677 = vmatprep.subr.mxu0 0.0
        %1678 = vmatpush2.msra.mxu0 0.0
        %1679 = vmatprep.subr.mxu0 0.0
        %1680 = vmatpush2.msra.mxu0 0.0
        %1681 = vmatprep.mubr.f32.mxu0 0.0
        %1682 = vmatmul.mubr.f32.gmra.mxu0 %v1615
        %v1683 = vpop.f32.mrf.mxu0
        %v1684 = vadd.f32 0.0, %v1683
        %v1685 = vpop.f32.mrf.mxu0
        %v1686 = vadd.f32 0.0, %v1685
        %1687 = vdwg.mxu0
        %1688 = vmatprep.subr.mxu0 0.0
        %1689 = vmatpush1.msra.mxu0 0.0
        %1690 = vmatprep.subr.mxu0 0.0
        %1691 = vmatpush1.msra.mxu0 0.0
        %1692 = vmatprep.subr.mxu0 0.0
        %1693 = vmatpush1.msra.mxu0 0.0
        %1694 = vmatprep.subr.mxu0 0.0
        %1695 = vmatpush1.msra.mxu0 0.0
        %1696 = vmatprep.subr.mxu0 0.0
        %1697 = vmatpush1.msra.mxu0 0.0
        %1698 = vmatprep.subr.mxu0 0.0
        %1699 = vmatpush1.msra.mxu0 0.0
        %1700 = vmatprep.subr.mxu0 0.0
        %1701 = vmatpush1.msra.mxu0 0.0
        %1702 = vmatprep.subr.mxu0 0.0
        %1703 = vmatpush1.msra.mxu0 0.0
        %1704 = vmatprep.subr.mxu0 0.0
        %1705 = vmatpush1.msra.mxu0 0.0
        %1706 = vmatprep.subr.mxu0 0.0
        %1707 = vmatpush1.msra.mxu0 0.0
        %1708 = vmatprep.subr.mxu0 0.0
        %1709 = vmatpush1.msra.mxu0 0.0
        %1710 = vmatprep.subr.mxu0 0.0
        %1711 = vmatpush1.msra.mxu0 0.0
        %1712 = vmatprep.subr.mxu0 0.0
        %1713 = vmatpush1.msra.mxu0 0.0
        %1714 = vmatprep.subr.mxu0 0.0
        %1715 = vmatpush1.msra.mxu0 0.0
        %1716 = vmatprep.subr.mxu0 0.0
        %1717 = vmatpush1.msra.mxu0 0.0
        %1718 = vmatprep.subr.mxu0 %v1609
        %1719 = vmatpush1.msra.mxu0 %v1608
        %1720 = vmatprep.subr.mxu0 0.0
        %1721 = vmatpush2.msra.mxu0 0.0
        %1722 = vmatprep.subr.mxu0 0.0
        %1723 = vmatpush2.msra.mxu0 0.0
        %1724 = vmatprep.subr.mxu0 0.0
        %1725 = vmatpush2.msra.mxu0 0.0
        %1726 = vmatprep.subr.mxu0 0.0
        %1727 = vmatpush2.msra.mxu0 0.0
        %1728 = vmatprep.subr.mxu0 0.0
        %1729 = vmatpush2.msra.mxu0 0.0
        %1730 = vmatprep.subr.mxu0 0.0
        %1731 = vmatpush2.msra.mxu0 0.0
        %1732 = vmatprep.subr.mxu0 0.0
        %1733 = vmatpush2.msra.mxu0 0.0
        %1734 = vmatprep.subr.mxu0 0.0
        %1735 = vmatpush2.msra.mxu0 0.0
        %1736 = vmatprep.subr.mxu0 0.0
        %1737 = vmatpush2.msra.mxu0 0.0
        %1738 = vmatprep.subr.mxu0 0.0
        %1739 = vmatpush2.msra.mxu0 0.0
        %1740 = vmatprep.subr.mxu0 0.0
        %1741 = vmatpush2.msra.mxu0 0.0
        %1742 = vmatprep.subr.mxu0 0.0
        %1743 = vmatpush2.msra.mxu0 0.0
        %1744 = vmatprep.subr.mxu0 0.0
        %1745 = vmatpush2.msra.mxu0 0.0
        %1746 = vmatprep.subr.mxu0 0.0
        %1747 = vmatpush2.msra.mxu0 0.0
        %1748 = vmatprep.subr.mxu0 0.0
        %1749 = vmatpush2.msra.mxu0 0.0
        %1750 = vmatprep.subr.mxu0 0.0
        %1751 = vmatpush2.msra.mxu0 0.0
        %1752 = vmatprep.mubr.f32.mxu0 0.0
        %1753 = vmatmul.mubr.f32.gmra.mxu0 %v1615
        %v1754 = vpop.f32.mrf.mxu0
        %v1755 = vadd.f32 0.0, %v1754
        %v1756 = vpop.f32.mrf.mxu0
        %v1757 = vadd.f32 0.0, %v1756
        %1758 = vdwg.mxu0
        %v1759 = vadd.f32 %v1589, %v1684
        %v1760 = vadd.f32 %v1590, %v1686
        %v1761 = vadd.f32 %v1591, %v1755
        %v1762 = vadd.f32 %v1592, %v1757
        %v1763 = vld [vmem:[%s2] sm:$0xff]
        %1765 = vset.pattern.permute.xlu0 0
        %1766 = vperm.xlu0 %1765, %v1763
        %v1767 = vpop.permute.xlu0 %1766
        %v1769 = vadd.f32 %v1759, %v1767
        %v1770 = vadd.f32 %v1760, %v1767
        %v1771 = vadd.f32 %v1761, %v1767
        %v1772 = vadd.f32 %v1762, %v1767
        %v1773 = vmax.f32 %v1769, 0.0
        %v1774 = vmax.f32 %v1770, 0.0
        %v1775 = vmax.f32 %v1771, 0.0
        %v1776 = vmax.f32 %v1772, 0.0
        %v1777 = vld [vmem:[%s5] sm:$0xf]
        %v1779 = vlaneseq
        %v1780 = vshrl.u32 %v1779, 7
        %v1781 = vsub.s32 0, %v1780
        %v1782 = vrot.slane %v1777, %v1781
        %v1783 = vlaneseq
        %v1784 = vshrl.u32 %v1783, 7
        %v1785 = vsub.s32 1, %v1784
        %v1786 = vrot.slane %v1777, %v1785
        %v1787 = vlaneseq
        %v1788 = vshrl.u32 %v1787, 7
        %v1789 = vsub.s32 2, %v1788
        %v1790 = vrot.slane %v1777, %v1789
        %v1791 = vlaneseq
        %v1792 = vshrl.u32 %v1791, 7
        %v1793 = vsub.s32 3, %v1792
        %v1794 = vrot.slane %v1777, %v1793
        %v1799 = vmul.f32 %v1773, %v1782
        %v1800 = vmul.f32 %v1774, %v1786
        %v1801 = vmul.f32 %v1775, %v1790
        %v1802 = vmul.f32 %v1776, %v1794
        %v1803 = vld [vmem:[%s3] sm:$0xff]
        %s1804 = scalar_lea.vmem %s3, 8
        %v1805 = vld [vmem:[%s1804] sm:$0xff]
        %1810 = vrot.lane.b32.xlu0 %v1799, 127
        %v1811 = vpop.permute.xlu0 %1810
        %1812 = vrot.lane.b32.xlu0 %v1800, 127
        %v1813 = vpop.permute.xlu0 %1812
        %1814 = vrot.lane.b32.xlu0 %v1801, 127
        %v1815 = vpop.permute.xlu0 %1814
        %1816 = vrot.lane.b32.xlu0 %v1802, 127
        %v1817 = vpop.permute.xlu0 %1816
        %v1818 = vsel %vm273, %v1811, %v1813
        %v1819 = vsel %vm273, %v1813, %v1815
        %v1820 = vsel %vm273, %v1815, %v1817
        %v1825 = vsel %vm282, %v1805, 0
        %1827 = vmatprep.subr.mxu0 0.0
        %1828 = vmatpush1.msra.mxu0 0.0
        %1829 = vmatprep.subr.mxu0 0.0
        %1830 = vmatpush1.msra.mxu0 0.0
        %1831 = vmatprep.subr.mxu0 0.0
        %1832 = vmatpush1.msra.mxu0 0.0
        %1833 = vmatprep.subr.mxu0 0.0
        %1834 = vmatpush1.msra.mxu0 0.0
        %1835 = vmatprep.subr.mxu0 0.0
        %1836 = vmatpush1.msra.mxu0 0.0
        %1837 = vmatprep.subr.mxu0 0.0
        %1838 = vmatpush1.msra.mxu0 0.0
        %1839 = vmatprep.subr.mxu0 0.0
        %1840 = vmatpush1.msra.mxu0 0.0
        %1841 = vmatprep.subr.mxu0 0.0
        %1842 = vmatpush1.msra.mxu0 0.0
        %1843 = vmatprep.subr.mxu0 0.0
        %1844 = vmatpush1.msra.mxu0 0.0
        %1845 = vmatprep.subr.mxu0 0.0
        %1846 = vmatpush1.msra.mxu0 0.0
        %1847 = vmatprep.subr.mxu0 0.0
        %1848 = vmatpush1.msra.mxu0 0.0
        %1849 = vmatprep.subr.mxu0 0.0
        %1850 = vmatpush1.msra.mxu0 0.0
        %1851 = vmatprep.subr.mxu0 0.0
        %1852 = vmatpush1.msra.mxu0 0.0
        %1853 = vmatprep.subr.mxu0 0.0
        %1854 = vmatpush1.msra.mxu0 0.0
        %1855 = vmatprep.subr.mxu0 0.0
        %1856 = vmatpush1.msra.mxu0 0.0
        %1857 = vmatprep.subr.mxu0 %v1819
        %1858 = vmatpush1.msra.mxu0 %v1818
        %1859 = vmatprep.subr.mxu0 0.0
        %1860 = vmatpush2.msra.mxu0 0.0
        %1861 = vmatprep.subr.mxu0 0.0
        %1862 = vmatpush2.msra.mxu0 0.0
        %1863 = vmatprep.subr.mxu0 0.0
        %1864 = vmatpush2.msra.mxu0 0.0
        %1865 = vmatprep.subr.mxu0 0.0
        %1866 = vmatpush2.msra.mxu0 0.0
        %1867 = vmatprep.subr.mxu0 0.0
        %1868 = vmatpush2.msra.mxu0 0.0
        %1869 = vmatprep.subr.mxu0 0.0
        %1870 = vmatpush2.msra.mxu0 0.0
        %1871 = vmatprep.subr.mxu0 0.0
        %1872 = vmatpush2.msra.mxu0 0.0
        %1873 = vmatprep.subr.mxu0 0.0
        %1874 = vmatpush2.msra.mxu0 0.0
        %1875 = vmatprep.subr.mxu0 0.0
        %1876 = vmatpush2.msra.mxu0 0.0
        %1877 = vmatprep.subr.mxu0 0.0
        %1878 = vmatpush2.msra.mxu0 0.0
        %1879 = vmatprep.subr.mxu0 0.0
        %1880 = vmatpush2.msra.mxu0 0.0
        %1881 = vmatprep.subr.mxu0 0.0
        %1882 = vmatpush2.msra.mxu0 0.0
        %1883 = vmatprep.subr.mxu0 0.0
        %1884 = vmatpush2.msra.mxu0 0.0
        %1885 = vmatprep.subr.mxu0 0.0
        %1886 = vmatpush2.msra.mxu0 0.0
        %1887 = vmatprep.subr.mxu0 0.0
        %1888 = vmatpush2.msra.mxu0 0.0
        %1889 = vmatprep.subr.mxu0 0.0
        %1890 = vmatpush2.msra.mxu0 0.0
        %1891 = vmatprep.mubr.f32.mxu0 0.0
        %1892 = vmatmul.mubr.f32.gmra.mxu0 %v1825
        %v1893 = vpop.f32.mrf.mxu0
        %v1894 = vadd.f32 0.0, %v1893
        %v1895 = vpop.f32.mrf.mxu0
        %v1896 = vadd.f32 0.0, %v1895
        %1897 = vdwg.mxu0
        %1898 = vmatprep.subr.mxu0 0.0
        %1899 = vmatpush1.msra.mxu0 0.0
        %1900 = vmatprep.subr.mxu0 0.0
        %1901 = vmatpush1.msra.mxu0 0.0
        %1902 = vmatprep.subr.mxu0 0.0
        %1903 = vmatpush1.msra.mxu0 0.0
        %1904 = vmatprep.subr.mxu0 0.0
        %1905 = vmatpush1.msra.mxu0 0.0
        %1906 = vmatprep.subr.mxu0 0.0
        %1907 = vmatpush1.msra.mxu0 0.0
        %1908 = vmatprep.subr.mxu0 0.0
        %1909 = vmatpush1.msra.mxu0 0.0
        %1910 = vmatprep.subr.mxu0 0.0
        %1911 = vmatpush1.msra.mxu0 0.0
        %1912 = vmatprep.subr.mxu0 0.0
        %1913 = vmatpush1.msra.mxu0 0.0
        %1914 = vmatprep.subr.mxu0 0.0
        %1915 = vmatpush1.msra.mxu0 0.0
        %1916 = vmatprep.subr.mxu0 0.0
        %1917 = vmatpush1.msra.mxu0 0.0
        %1918 = vmatprep.subr.mxu0 0.0
        %1919 = vmatpush1.msra.mxu0 0.0
        %1920 = vmatprep.subr.mxu0 0.0
        %1921 = vmatpush1.msra.mxu0 0.0
        %1922 = vmatprep.subr.mxu0 0.0
        %1923 = vmatpush1.msra.mxu0 0.0
        %1924 = vmatprep.subr.mxu0 0.0
        %1925 = vmatpush1.msra.mxu0 0.0
        %1926 = vmatprep.subr.mxu0 0.0
        %1927 = vmatpush1.msra.mxu0 0.0
        %1928 = vmatprep.subr.mxu0 0.0
        %1929 = vmatpush1.msra.mxu0 %v1820
        %1930 = vmatprep.subr.mxu0 0.0
        %1931 = vmatpush2.msra.mxu0 0.0
        %1932 = vmatprep.subr.mxu0 0.0
        %1933 = vmatpush2.msra.mxu0 0.0
        %1934 = vmatprep.subr.mxu0 0.0
        %1935 = vmatpush2.msra.mxu0 0.0
        %1936 = vmatprep.subr.mxu0 0.0
        %1937 = vmatpush2.msra.mxu0 0.0
        %1938 = vmatprep.subr.mxu0 0.0
        %1939 = vmatpush2.msra.mxu0 0.0
        %1940 = vmatprep.subr.mxu0 0.0
        %1941 = vmatpush2.msra.mxu0 0.0
        %1942 = vmatprep.subr.mxu0 0.0
        %1943 = vmatpush2.msra.mxu0 0.0
        %1944 = vmatprep.subr.mxu0 0.0
        %1945 = vmatpush2.msra.mxu0 0.0
        %1946 = vmatprep.subr.mxu0 0.0
        %1947 = vmatpush2.msra.mxu0 0.0
        %1948 = vmatprep.subr.mxu0 0.0
        %1949 = vmatpush2.msra.mxu0 0.0
        %1950 = vmatprep.subr.mxu0 0.0
        %1951 = vmatpush2.msra.mxu0 0.0
        %1952 = vmatprep.subr.mxu0 0.0
        %1953 = vmatpush2.msra.mxu0 0.0
        %1954 = vmatprep.subr.mxu0 0.0
        %1955 = vmatpush2.msra.mxu0 0.0
        %1956 = vmatprep.subr.mxu0 0.0
        %1957 = vmatpush2.msra.mxu0 0.0
        %1958 = vmatprep.subr.mxu0 0.0
        %1959 = vmatpush2.msra.mxu0 0.0
        %1960 = vmatprep.subr.mxu0 0.0
        %1961 = vmatpush2.msra.mxu0 0.0
        %1962 = vmatprep.mubr.f32.mxu0 0.0
        %1963 = vmatmul.mubr.f32.gmra.mxu0 %v1825
        %v1964 = vpop.f32.mrf.mxu0
        %v1965 = vadd.f32 0.0, %v1964
        %v1966 = vpop.f32.mrf.mxu0
        %1967 = vdwg.mxu0
        %v1969 = vsel %vm282, %v1803, 0
        %1971 = vmatprep.subr.mxu0 0.0
        %1972 = vmatpush1.msra.mxu0 0.0
        %1973 = vmatprep.subr.mxu0 0.0
        %1974 = vmatpush1.msra.mxu0 0.0
        %1975 = vmatprep.subr.mxu0 0.0
        %1976 = vmatpush1.msra.mxu0 0.0
        %1977 = vmatprep.subr.mxu0 0.0
        %1978 = vmatpush1.msra.mxu0 0.0
        %1979 = vmatprep.subr.mxu0 0.0
        %1980 = vmatpush1.msra.mxu0 0.0
        %1981 = vmatprep.subr.mxu0 0.0
        %1982 = vmatpush1.msra.mxu0 0.0
        %1983 = vmatprep.subr.mxu0 0.0
        %1984 = vmatpush1.msra.mxu0 0.0
        %1985 = vmatprep.subr.mxu0 0.0
        %1986 = vmatpush1.msra.mxu0 0.0
        %1987 = vmatprep.subr.mxu0 0.0
        %1988 = vmatpush1.msra.mxu0 0.0
        %1989 = vmatprep.subr.mxu0 0.0
        %1990 = vmatpush1.msra.mxu0 0.0
        %1991 = vmatprep.subr.mxu0 0.0
        %1992 = vmatpush1.msra.mxu0 0.0
        %1993 = vmatprep.subr.mxu0 0.0
        %1994 = vmatpush1.msra.mxu0 0.0
        %1995 = vmatprep.subr.mxu0 0.0
        %1996 = vmatpush1.msra.mxu0 0.0
        %1997 = vmatprep.subr.mxu0 0.0
        %1998 = vmatpush1.msra.mxu0 0.0
        %1999 = vmatprep.subr.mxu0 0.0
        %2000 = vmatpush1.msra.mxu0 0.0
        %2001 = vmatprep.subr.mxu0 %v1800
        %2002 = vmatpush1.msra.mxu0 %v1799
        %2003 = vmatprep.subr.mxu0 0.0
        %2004 = vmatpush2.msra.mxu0 0.0
        %2005 = vmatprep.subr.mxu0 0.0
        %2006 = vmatpush2.msra.mxu0 0.0
        %2007 = vmatprep.subr.mxu0 0.0
        %2008 = vmatpush2.msra.mxu0 0.0
        %2009 = vmatprep.subr.mxu0 0.0
        %2010 = vmatpush2.msra.mxu0 0.0
        %2011 = vmatprep.subr.mxu0 0.0
        %2012 = vmatpush2.msra.mxu0 0.0
        %2013 = vmatprep.subr.mxu0 0.0
        %2014 = vmatpush2.msra.mxu0 0.0
        %2015 = vmatprep.subr.mxu0 0.0
        %2016 = vmatpush2.msra.mxu0 0.0
        %2017 = vmatprep.subr.mxu0 0.0
        %2018 = vmatpush2.msra.mxu0 0.0
        %2019 = vmatprep.subr.mxu0 0.0
        %2020 = vmatpush2.msra.mxu0 0.0
        %2021 = vmatprep.subr.mxu0 0.0
        %2022 = vmatpush2.msra.mxu0 0.0
        %2023 = vmatprep.subr.mxu0 0.0
        %2024 = vmatpush2.msra.mxu0 0.0
        %2025 = vmatprep.subr.mxu0 0.0
        %2026 = vmatpush2.msra.mxu0 0.0
        %2027 = vmatprep.subr.mxu0 0.0
        %2028 = vmatpush2.msra.mxu0 0.0
        %2029 = vmatprep.subr.mxu0 0.0
        %2030 = vmatpush2.msra.mxu0 0.0
        %2031 = vmatprep.subr.mxu0 0.0
        %2032 = vmatpush2.msra.mxu0 0.0
        %2033 = vmatprep.subr.mxu0 0.0
        %2034 = vmatpush2.msra.mxu0 0.0
        %2035 = vmatprep.mubr.f32.mxu0 0.0
        %2036 = vmatmul.mubr.f32.gmra.mxu0 %v1969
        %v2037 = vpop.f32.mrf.mxu0
        %v2038 = vadd.f32 %v1894, %v2037
        %v2039 = vpop.f32.mrf.mxu0
        %v2040 = vadd.f32 %v1896, %v2039
        %2041 = vdwg.mxu0
        %2042 = vmatprep.subr.mxu0 0.0
        %2043 = vmatpush1.msra.mxu0 0.0
        %2044 = vmatprep.subr.mxu0 0.0
        %2045 = vmatpush1.msra.mxu0 0.0
        %2046 = vmatprep.subr.mxu0 0.0
        %2047 = vmatpush1.msra.mxu0 0.0
        %2048 = vmatprep.subr.mxu0 0.0
        %2049 = vmatpush1.msra.mxu0 0.0
        %2050 = vmatprep.subr.mxu0 0.0
        %2051 = vmatpush1.msra.mxu0 0.0
        %2052 = vmatprep.subr.mxu0 0.0
        %2053 = vmatpush1.msra.mxu0 0.0
        %2054 = vmatprep.subr.mxu0 0.0
        %2055 = vmatpush1.msra.mxu0 0.0
        %2056 = vmatprep.subr.mxu0 0.0
        %2057 = vmatpush1.msra.mxu0 0.0
        %2058 = vmatprep.subr.mxu0 0.0
        %2059 = vmatpush1.msra.mxu0 0.0
        %2060 = vmatprep.subr.mxu0 0.0
        %2061 = vmatpush1.msra.mxu0 0.0
        %2062 = vmatprep.subr.mxu0 0.0
        %2063 = vmatpush1.msra.mxu0 0.0
        %2064 = vmatprep.subr.mxu0 0.0
        %2065 = vmatpush1.msra.mxu0 0.0
        %2066 = vmatprep.subr.mxu0 0.0
        %2067 = vmatpush1.msra.mxu0 0.0
        %2068 = vmatprep.subr.mxu0 0.0
        %2069 = vmatpush1.msra.mxu0 0.0
        %2070 = vmatprep.subr.mxu0 0.0
        %2071 = vmatpush1.msra.mxu0 0.0
        %2072 = vmatprep.subr.mxu0 0.0
        %2073 = vmatpush1.msra.mxu0 %v1801
        %2074 = vmatprep.subr.mxu0 0.0
        %2075 = vmatpush2.msra.mxu0 0.0
        %2076 = vmatprep.subr.mxu0 0.0
        %2077 = vmatpush2.msra.mxu0 0.0
        %2078 = vmatprep.subr.mxu0 0.0
        %2079 = vmatpush2.msra.mxu0 0.0
        %2080 = vmatprep.subr.mxu0 0.0
        %2081 = vmatpush2.msra.mxu0 0.0
        %2082 = vmatprep.subr.mxu0 0.0
        %2083 = vmatpush2.msra.mxu0 0.0
        %2084 = vmatprep.subr.mxu0 0.0
        %2085 = vmatpush2.msra.mxu0 0.0
        %2086 = vmatprep.subr.mxu0 0.0
        %2087 = vmatpush2.msra.mxu0 0.0
        %2088 = vmatprep.subr.mxu0 0.0
        %2089 = vmatpush2.msra.mxu0 0.0
        %2090 = vmatprep.subr.mxu0 0.0
        %2091 = vmatpush2.msra.mxu0 0.0
        %2092 = vmatprep.subr.mxu0 0.0
        %2093 = vmatpush2.msra.mxu0 0.0
        %2094 = vmatprep.subr.mxu0 0.0
        %2095 = vmatpush2.msra.mxu0 0.0
        %2096 = vmatprep.subr.mxu0 0.0
        %2097 = vmatpush2.msra.mxu0 0.0
        %2098 = vmatprep.subr.mxu0 0.0
        %2099 = vmatpush2.msra.mxu0 0.0
        %2100 = vmatprep.subr.mxu0 0.0
        %2101 = vmatpush2.msra.mxu0 0.0
        %2102 = vmatprep.subr.mxu0 0.0
        %2103 = vmatpush2.msra.mxu0 0.0
        %2104 = vmatprep.subr.mxu0 0.0
        %2105 = vmatpush2.msra.mxu0 0.0
        %2106 = vmatprep.mubr.f32.mxu0 0.0
        %2107 = vmatmul.mubr.f32.gmra.mxu0 %v1969
        %v2108 = vpop.f32.mrf.mxu0
        %v2109 = vadd.f32 %v1965, %v2108
        %v2110 = vpop.f32.mrf.mxu0
        %2111 = vdwg.mxu0
        %s2112 = scalar_lea.vmem %s3, 16
        %v2113 = vld [vmem:[%s2112] sm:$0xff]
        %2114 = vrot.lane.b32.xlu0 %v1799, 126
        %v2115 = vpop.permute.xlu0 %2114
        %2116 = vrot.lane.b32.xlu0 %v1800, 126
        %v2117 = vpop.permute.xlu0 %2116
        %2118 = vrot.lane.b32.xlu0 %v1801, 126
        %v2119 = vpop.permute.xlu0 %2118
        %2120 = vrot.lane.b32.xlu0 %v1802, 126
        %v2121 = vpop.permute.xlu0 %2120
        %v2122 = vsel %vm585, %v2115, %v2117
        %v2123 = vsel %vm585, %v2117, %v2119
        %v2124 = vsel %vm585, %v2119, %v2121
        %v2129 = vsel %vm282, %v2113, 0
        %2131 = vmatprep.subr.mxu0 0.0
        %2132 = vmatpush1.msra.mxu0 0.0
        %2133 = vmatprep.subr.mxu0 0.0
        %2134 = vmatpush1.msra.mxu0 0.0
        %2135 = vmatprep.subr.mxu0 0.0
        %2136 = vmatpush1.msra.mxu0 0.0
        %2137 = vmatprep.subr.mxu0 0.0
        %2138 = vmatpush1.msra.mxu0 0.0
        %2139 = vmatprep.subr.mxu0 0.0
        %2140 = vmatpush1.msra.mxu0 0.0
        %2141 = vmatprep.subr.mxu0 0.0
        %2142 = vmatpush1.msra.mxu0 0.0
        %2143 = vmatprep.subr.mxu0 0.0
        %2144 = vmatpush1.msra.mxu0 0.0
        %2145 = vmatprep.subr.mxu0 0.0
        %2146 = vmatpush1.msra.mxu0 0.0
        %2147 = vmatprep.subr.mxu0 0.0
        %2148 = vmatpush1.msra.mxu0 0.0
        %2149 = vmatprep.subr.mxu0 0.0
        %2150 = vmatpush1.msra.mxu0 0.0
        %2151 = vmatprep.subr.mxu0 0.0
        %2152 = vmatpush1.msra.mxu0 0.0
        %2153 = vmatprep.subr.mxu0 0.0
        %2154 = vmatpush1.msra.mxu0 0.0
        %2155 = vmatprep.subr.mxu0 0.0
        %2156 = vmatpush1.msra.mxu0 0.0
        %2157 = vmatprep.subr.mxu0 0.0
        %2158 = vmatpush1.msra.mxu0 0.0
        %2159 = vmatprep.subr.mxu0 0.0
        %2160 = vmatpush1.msra.mxu0 0.0
        %2161 = vmatprep.subr.mxu0 %v2123
        %2162 = vmatpush1.msra.mxu0 %v2122
        %2163 = vmatprep.subr.mxu0 0.0
        %2164 = vmatpush2.msra.mxu0 0.0
        %2165 = vmatprep.subr.mxu0 0.0
        %2166 = vmatpush2.msra.mxu0 0.0
        %2167 = vmatprep.subr.mxu0 0.0
        %2168 = vmatpush2.msra.mxu0 0.0
        %2169 = vmatprep.subr.mxu0 0.0
        %2170 = vmatpush2.msra.mxu0 0.0
        %2171 = vmatprep.subr.mxu0 0.0
        %2172 = vmatpush2.msra.mxu0 0.0
        %2173 = vmatprep.subr.mxu0 0.0
        %2174 = vmatpush2.msra.mxu0 0.0
        %2175 = vmatprep.subr.mxu0 0.0
        %2176 = vmatpush2.msra.mxu0 0.0
        %2177 = vmatprep.subr.mxu0 0.0
        %2178 = vmatpush2.msra.mxu0 0.0
        %2179 = vmatprep.subr.mxu0 0.0
        %2180 = vmatpush2.msra.mxu0 0.0
        %2181 = vmatprep.subr.mxu0 0.0
        %2182 = vmatpush2.msra.mxu0 0.0
        %2183 = vmatprep.subr.mxu0 0.0
        %2184 = vmatpush2.msra.mxu0 0.0
        %2185 = vmatprep.subr.mxu0 0.0
        %2186 = vmatpush2.msra.mxu0 0.0
        %2187 = vmatprep.subr.mxu0 0.0
        %2188 = vmatpush2.msra.mxu0 0.0
        %2189 = vmatprep.subr.mxu0 0.0
        %2190 = vmatpush2.msra.mxu0 0.0
        %2191 = vmatprep.subr.mxu0 0.0
        %2192 = vmatpush2.msra.mxu0 0.0
        %2193 = vmatprep.subr.mxu0 0.0
        %2194 = vmatpush2.msra.mxu0 0.0
        %2195 = vmatprep.mubr.f32.mxu0 0.0
        %2196 = vmatmul.mubr.f32.gmra.mxu0 %v2129
        %v2197 = vpop.f32.mrf.mxu0
        %v2198 = vadd.f32 0.0, %v2197
        %v2199 = vpop.f32.mrf.mxu0
        %v2200 = vadd.f32 0.0, %v2199
        %2201 = vdwg.mxu0
        %2202 = vmatprep.subr.mxu0 0.0
        %2203 = vmatpush1.msra.mxu0 0.0
        %2204 = vmatprep.subr.mxu0 0.0
        %2205 = vmatpush1.msra.mxu0 0.0
        %2206 = vmatprep.subr.mxu0 0.0
        %2207 = vmatpush1.msra.mxu0 0.0
        %2208 = vmatprep.subr.mxu0 0.0
        %2209 = vmatpush1.msra.mxu0 0.0
        %2210 = vmatprep.subr.mxu0 0.0
        %2211 = vmatpush1.msra.mxu0 0.0
        %2212 = vmatprep.subr.mxu0 0.0
        %2213 = vmatpush1.msra.mxu0 0.0
        %2214 = vmatprep.subr.mxu0 0.0
        %2215 = vmatpush1.msra.mxu0 0.0
        %2216 = vmatprep.subr.mxu0 0.0
        %2217 = vmatpush1.msra.mxu0 0.0
        %2218 = vmatprep.subr.mxu0 0.0
        %2219 = vmatpush1.msra.mxu0 0.0
        %2220 = vmatprep.subr.mxu0 0.0
        %2221 = vmatpush1.msra.mxu0 0.0
        %2222 = vmatprep.subr.mxu0 0.0
        %2223 = vmatpush1.msra.mxu0 0.0
        %2224 = vmatprep.subr.mxu0 0.0
        %2225 = vmatpush1.msra.mxu0 0.0
        %2226 = vmatprep.subr.mxu0 0.0
        %2227 = vmatpush1.msra.mxu0 0.0
        %2228 = vmatprep.subr.mxu0 0.0
        %2229 = vmatpush1.msra.mxu0 0.0
        %2230 = vmatprep.subr.mxu0 0.0
        %2231 = vmatpush1.msra.mxu0 0.0
        %2232 = vmatprep.subr.mxu0 0.0
        %2233 = vmatpush1.msra.mxu0 %v2124
        %2234 = vmatprep.subr.mxu0 0.0
        %2235 = vmatpush2.msra.mxu0 0.0
        %2236 = vmatprep.subr.mxu0 0.0
        %2237 = vmatpush2.msra.mxu0 0.0
        %2238 = vmatprep.subr.mxu0 0.0
        %2239 = vmatpush2.msra.mxu0 0.0
        %2240 = vmatprep.subr.mxu0 0.0
        %2241 = vmatpush2.msra.mxu0 0.0
        %2242 = vmatprep.subr.mxu0 0.0
        %2243 = vmatpush2.msra.mxu0 0.0
        %2244 = vmatprep.subr.mxu0 0.0
        %2245 = vmatpush2.msra.mxu0 0.0
        %2246 = vmatprep.subr.mxu0 0.0
        %2247 = vmatpush2.msra.mxu0 0.0
        %2248 = vmatprep.subr.mxu0 0.0
        %2249 = vmatpush2.msra.mxu0 0.0
        %2250 = vmatprep.subr.mxu0 0.0
        %2251 = vmatpush2.msra.mxu0 0.0
        %2252 = vmatprep.subr.mxu0 0.0
        %2253 = vmatpush2.msra.mxu0 0.0
        %2254 = vmatprep.subr.mxu0 0.0
        %2255 = vmatpush2.msra.mxu0 0.0
        %2256 = vmatprep.subr.mxu0 0.0
        %2257 = vmatpush2.msra.mxu0 0.0
        %2258 = vmatprep.subr.mxu0 0.0
        %2259 = vmatpush2.msra.mxu0 0.0
        %2260 = vmatprep.subr.mxu0 0.0
        %2261 = vmatpush2.msra.mxu0 0.0
        %2262 = vmatprep.subr.mxu0 0.0
        %2263 = vmatpush2.msra.mxu0 0.0
        %2264 = vmatprep.subr.mxu0 0.0
        %2265 = vmatpush2.msra.mxu0 0.0
        %2266 = vmatprep.mubr.f32.mxu0 0.0
        %2267 = vmatmul.mubr.f32.gmra.mxu0 %v2129
        %v2268 = vpop.f32.mrf.mxu0
        %v2269 = vadd.f32 0.0, %v2268
        %v2270 = vpop.f32.mrf.mxu0
        %2271 = vdwg.mxu0
        %v2272 = vadd.f32 %v2038, %v2198
        %v2273 = vadd.f32 %v2040, %v2200
        %v2274 = vadd.f32 %v2109, %v2269
        %s2275 = scalar_lea.vmem %s3, 24
        %v2276 = vld [vmem:[%s2275] sm:$0xff]
        %2277 = vrot.lane.b32.xlu0 %v1799, 110
        %v2278 = vpop.permute.xlu0 %2277
        %2279 = vrot.lane.b32.xlu0 %v1800, 110
        %v2280 = vpop.permute.xlu0 %2279
        %2281 = vrot.lane.b32.xlu0 %v1801, 110
        %v2282 = vpop.permute.xlu0 %2281
        %2283 = vrot.lane.b32.xlu0 %v1802, 110
        %v2284 = vpop.permute.xlu0 %2283
        %v2285 = vsel %vm755, %v2278, %v2280
        %v2286 = vsel %vm755, %v2280, %v2282
        %v2287 = vsel %vm755, %v2282, %v2284
        %v2292 = vsel %vm282, %v2276, 0
        %2294 = vmatprep.subr.mxu0 0.0
        %2295 = vmatpush1.msra.mxu0 0.0
        %2296 = vmatprep.subr.mxu0 0.0
        %2297 = vmatpush1.msra.mxu0 0.0
        %2298 = vmatprep.subr.mxu0 0.0
        %2299 = vmatpush1.msra.mxu0 0.0
        %2300 = vmatprep.subr.mxu0 0.0
        %2301 = vmatpush1.msra.mxu0 0.0
        %2302 = vmatprep.subr.mxu0 0.0
        %2303 = vmatpush1.msra.mxu0 0.0
        %2304 = vmatprep.subr.mxu0 0.0
        %2305 = vmatpush1.msra.mxu0 0.0
        %2306 = vmatprep.subr.mxu0 0.0
        %2307 = vmatpush1.msra.mxu0 0.0
        %2308 = vmatprep.subr.mxu0 0.0
        %2309 = vmatpush1.msra.mxu0 0.0
        %2310 = vmatprep.subr.mxu0 0.0
        %2311 = vmatpush1.msra.mxu0 0.0
        %2312 = vmatprep.subr.mxu0 0.0
        %2313 = vmatpush1.msra.mxu0 0.0
        %2314 = vmatprep.subr.mxu0 0.0
        %2315 = vmatpush1.msra.mxu0 0.0
        %2316 = vmatprep.subr.mxu0 0.0
        %2317 = vmatpush1.msra.mxu0 0.0
        %2318 = vmatprep.subr.mxu0 0.0
        %2319 = vmatpush1.msra.mxu0 0.0
        %2320 = vmatprep.subr.mxu0 0.0
        %2321 = vmatpush1.msra.mxu0 0.0
        %2322 = vmatprep.subr.mxu0 0.0
        %2323 = vmatpush1.msra.mxu0 0.0
        %2324 = vmatprep.subr.mxu0 %v2286
        %2325 = vmatpush1.msra.mxu0 %v2285
        %2326 = vmatprep.subr.mxu0 0.0
        %2327 = vmatpush2.msra.mxu0 0.0
        %2328 = vmatprep.subr.mxu0 0.0
        %2329 = vmatpush2.msra.mxu0 0.0
        %2330 = vmatprep.subr.mxu0 0.0
        %2331 = vmatpush2.msra.mxu0 0.0
        %2332 = vmatprep.subr.mxu0 0.0
        %2333 = vmatpush2.msra.mxu0 0.0
        %2334 = vmatprep.subr.mxu0 0.0
        %2335 = vmatpush2.msra.mxu0 0.0
        %2336 = vmatprep.subr.mxu0 0.0
        %2337 = vmatpush2.msra.mxu0 0.0
        %2338 = vmatprep.subr.mxu0 0.0
        %2339 = vmatpush2.msra.mxu0 0.0
        %2340 = vmatprep.subr.mxu0 0.0
        %2341 = vmatpush2.msra.mxu0 0.0
        %2342 = vmatprep.subr.mxu0 0.0
        %2343 = vmatpush2.msra.mxu0 0.0
        %2344 = vmatprep.subr.mxu0 0.0
        %2345 = vmatpush2.msra.mxu0 0.0
        %2346 = vmatprep.subr.mxu0 0.0
        %2347 = vmatpush2.msra.mxu0 0.0
        %2348 = vmatprep.subr.mxu0 0.0
        %2349 = vmatpush2.msra.mxu0 0.0
        %2350 = vmatprep.subr.mxu0 0.0
        %2351 = vmatpush2.msra.mxu0 0.0
        %2352 = vmatprep.subr.mxu0 0.0
        %2353 = vmatpush2.msra.mxu0 0.0
        %2354 = vmatprep.subr.mxu0 0.0
        %2355 = vmatpush2.msra.mxu0 0.0
        %2356 = vmatprep.subr.mxu0 0.0
        %2357 = vmatpush2.msra.mxu0 0.0
        %2358 = vmatprep.mubr.f32.mxu0 0.0
        %2359 = vmatmul.mubr.f32.gmra.mxu0 %v2292
        %v2360 = vpop.f32.mrf.mxu0
        %v2361 = vadd.f32 0.0, %v2360
        %v2362 = vpop.f32.mrf.mxu0
        %v2363 = vadd.f32 0.0, %v2362
        %2364 = vdwg.mxu0
        %2365 = vmatprep.subr.mxu0 0.0
        %2366 = vmatpush1.msra.mxu0 0.0
        %2367 = vmatprep.subr.mxu0 0.0
        %2368 = vmatpush1.msra.mxu0 0.0
        %2369 = vmatprep.subr.mxu0 0.0
        %2370 = vmatpush1.msra.mxu0 0.0
        %2371 = vmatprep.subr.mxu0 0.0
        %2372 = vmatpush1.msra.mxu0 0.0
        %2373 = vmatprep.subr.mxu0 0.0
        %2374 = vmatpush1.msra.mxu0 0.0
        %2375 = vmatprep.subr.mxu0 0.0
        %2376 = vmatpush1.msra.mxu0 0.0
        %2377 = vmatprep.subr.mxu0 0.0
        %2378 = vmatpush1.msra.mxu0 0.0
        %2379 = vmatprep.subr.mxu0 0.0
        %2380 = vmatpush1.msra.mxu0 0.0
        %2381 = vmatprep.subr.mxu0 0.0
        %2382 = vmatpush1.msra.mxu0 0.0
        %2383 = vmatprep.subr.mxu0 0.0
        %2384 = vmatpush1.msra.mxu0 0.0
        %2385 = vmatprep.subr.mxu0 0.0
        %2386 = vmatpush1.msra.mxu0 0.0
        %2387 = vmatprep.subr.mxu0 0.0
        %2388 = vmatpush1.msra.mxu0 0.0
        %2389 = vmatprep.subr.mxu0 0.0
        %2390 = vmatpush1.msra.mxu0 0.0
        %2391 = vmatprep.subr.mxu0 0.0
        %2392 = vmatpush1.msra.mxu0 0.0
        %2393 = vmatprep.subr.mxu0 0.0
        %2394 = vmatpush1.msra.mxu0 0.0
        %2395 = vmatprep.subr.mxu0 0.0
        %2396 = vmatpush1.msra.mxu0 %v2287
        %2397 = vmatprep.subr.mxu0 0.0
        %2398 = vmatpush2.msra.mxu0 0.0
        %2399 = vmatprep.subr.mxu0 0.0
        %2400 = vmatpush2.msra.mxu0 0.0
        %2401 = vmatprep.subr.mxu0 0.0
        %2402 = vmatpush2.msra.mxu0 0.0
        %2403 = vmatprep.subr.mxu0 0.0
        %2404 = vmatpush2.msra.mxu0 0.0
        %2405 = vmatprep.subr.mxu0 0.0
        %2406 = vmatpush2.msra.mxu0 0.0
        %2407 = vmatprep.subr.mxu0 0.0
        %2408 = vmatpush2.msra.mxu0 0.0
        %2409 = vmatprep.subr.mxu0 0.0
        %2410 = vmatpush2.msra.mxu0 0.0
        %2411 = vmatprep.subr.mxu0 0.0
        %2412 = vmatpush2.msra.mxu0 0.0
        %2413 = vmatprep.subr.mxu0 0.0
        %2414 = vmatpush2.msra.mxu0 0.0
        %2415 = vmatprep.subr.mxu0 0.0
        %2416 = vmatpush2.msra.mxu0 0.0
        %2417 = vmatprep.subr.mxu0 0.0
        %2418 = vmatpush2.msra.mxu0 0.0
        %2419 = vmatprep.subr.mxu0 0.0
        %2420 = vmatpush2.msra.mxu0 0.0
        %2421 = vmatprep.subr.mxu0 0.0
        %2422 = vmatpush2.msra.mxu0 0.0
        %2423 = vmatprep.subr.mxu0 0.0
        %2424 = vmatpush2.msra.mxu0 0.0
        %2425 = vmatprep.subr.mxu0 0.0
        %2426 = vmatpush2.msra.mxu0 0.0
        %2427 = vmatprep.subr.mxu0 0.0
        %2428 = vmatpush2.msra.mxu0 0.0
        %2429 = vmatprep.mubr.f32.mxu0 0.0
        %2430 = vmatmul.mubr.f32.gmra.mxu0 %v2292
        %v2431 = vpop.f32.mrf.mxu0
        %v2432 = vadd.f32 0.0, %v2431
        %v2433 = vpop.f32.mrf.mxu0
        %2434 = vdwg.mxu0
        %v2435 = vadd.f32 %v2272, %v2361
        %v2436 = vadd.f32 %v2273, %v2363
        %v2437 = vadd.f32 %v2274, %v2432
        %s2438 = scalar_lea.vmem %s3, 32
        %v2439 = vld [vmem:[%s2438] sm:$0xff]
        %2440 = vrot.lane.b32.xlu0 %v1799, 109
        %v2441 = vpop.permute.xlu0 %2440
        %2442 = vrot.lane.b32.xlu0 %v1800, 109
        %v2443 = vpop.permute.xlu0 %2442
        %2444 = vrot.lane.b32.xlu0 %v1801, 109
        %v2445 = vpop.permute.xlu0 %2444
        %2446 = vrot.lane.b32.xlu0 %v1802, 109
        %v2447 = vpop.permute.xlu0 %2446
        %v2448 = vsel %vm925, %v2441, %v2443
        %v2449 = vsel %vm925, %v2443, %v2445
        %v2450 = vsel %vm925, %v2445, %v2447
        %v2455 = vsel %vm282, %v2439, 0
        %2457 = vmatprep.subr.mxu0 0.0
        %2458 = vmatpush1.msra.mxu0 0.0
        %2459 = vmatprep.subr.mxu0 0.0
        %2460 = vmatpush1.msra.mxu0 0.0
        %2461 = vmatprep.subr.mxu0 0.0
        %2462 = vmatpush1.msra.mxu0 0.0
        %2463 = vmatprep.subr.mxu0 0.0
        %2464 = vmatpush1.msra.mxu0 0.0
        %2465 = vmatprep.subr.mxu0 0.0
        %2466 = vmatpush1.msra.mxu0 0.0
        %2467 = vmatprep.subr.mxu0 0.0
        %2468 = vmatpush1.msra.mxu0 0.0
        %2469 = vmatprep.subr.mxu0 0.0
        %2470 = vmatpush1.msra.mxu0 0.0
        %2471 = vmatprep.subr.mxu0 0.0
        %2472 = vmatpush1.msra.mxu0 0.0
        %2473 = vmatprep.subr.mxu0 0.0
        %2474 = vmatpush1.msra.mxu0 0.0
        %2475 = vmatprep.subr.mxu0 0.0
        %2476 = vmatpush1.msra.mxu0 0.0
        %2477 = vmatprep.subr.mxu0 0.0
        %2478 = vmatpush1.msra.mxu0 0.0
        %2479 = vmatprep.subr.mxu0 0.0
        %2480 = vmatpush1.msra.mxu0 0.0
        %2481 = vmatprep.subr.mxu0 0.0
        %2482 = vmatpush1.msra.mxu0 0.0
        %2483 = vmatprep.subr.mxu0 0.0
        %2484 = vmatpush1.msra.mxu0 0.0
        %2485 = vmatprep.subr.mxu0 0.0
        %2486 = vmatpush1.msra.mxu0 0.0
        %2487 = vmatprep.subr.mxu0 %v2449
        %2488 = vmatpush1.msra.mxu0 %v2448
        %2489 = vmatprep.subr.mxu0 0.0
        %2490 = vmatpush2.msra.mxu0 0.0
        %2491 = vmatprep.subr.mxu0 0.0
        %2492 = vmatpush2.msra.mxu0 0.0
        %2493 = vmatprep.subr.mxu0 0.0
        %2494 = vmatpush2.msra.mxu0 0.0
        %2495 = vmatprep.subr.mxu0 0.0
        %2496 = vmatpush2.msra.mxu0 0.0
        %2497 = vmatprep.subr.mxu0 0.0
        %2498 = vmatpush2.msra.mxu0 0.0
        %2499 = vmatprep.subr.mxu0 0.0
        %2500 = vmatpush2.msra.mxu0 0.0
        %2501 = vmatprep.subr.mxu0 0.0
        %2502 = vmatpush2.msra.mxu0 0.0
        %2503 = vmatprep.subr.mxu0 0.0
        %2504 = vmatpush2.msra.mxu0 0.0
        %2505 = vmatprep.subr.mxu0 0.0
        %2506 = vmatpush2.msra.mxu0 0.0
        %2507 = vmatprep.subr.mxu0 0.0
        %2508 = vmatpush2.msra.mxu0 0.0
        %2509 = vmatprep.subr.mxu0 0.0
        %2510 = vmatpush2.msra.mxu0 0.0
        %2511 = vmatprep.subr.mxu0 0.0
        %2512 = vmatpush2.msra.mxu0 0.0
        %2513 = vmatprep.subr.mxu0 0.0
        %2514 = vmatpush2.msra.mxu0 0.0
        %2515 = vmatprep.subr.mxu0 0.0
        %2516 = vmatpush2.msra.mxu0 0.0
        %2517 = vmatprep.subr.mxu0 0.0
        %2518 = vmatpush2.msra.mxu0 0.0
        %2519 = vmatprep.subr.mxu0 0.0
        %2520 = vmatpush2.msra.mxu0 0.0
        %2521 = vmatprep.mubr.f32.mxu0 0.0
        %2522 = vmatmul.mubr.f32.gmra.mxu0 %v2455
        %v2523 = vpop.f32.mrf.mxu0
        %v2524 = vadd.f32 0.0, %v2523
        %v2525 = vpop.f32.mrf.mxu0
        %v2526 = vadd.f32 0.0, %v2525
        %2527 = vdwg.mxu0
        %2528 = vmatprep.subr.mxu0 0.0
        %2529 = vmatpush1.msra.mxu0 0.0
        %2530 = vmatprep.subr.mxu0 0.0
        %2531 = vmatpush1.msra.mxu0 0.0
        %2532 = vmatprep.subr.mxu0 0.0
        %2533 = vmatpush1.msra.mxu0 0.0
        %2534 = vmatprep.subr.mxu0 0.0
        %2535 = vmatpush1.msra.mxu0 0.0
        %2536 = vmatprep.subr.mxu0 0.0
        %2537 = vmatpush1.msra.mxu0 0.0
        %2538 = vmatprep.subr.mxu0 0.0
        %2539 = vmatpush1.msra.mxu0 0.0
        %2540 = vmatprep.subr.mxu0 0.0
        %2541 = vmatpush1.msra.mxu0 0.0
        %2542 = vmatprep.subr.mxu0 0.0
        %2543 = vmatpush1.msra.mxu0 0.0
        %2544 = vmatprep.subr.mxu0 0.0
        %2545 = vmatpush1.msra.mxu0 0.0
        %2546 = vmatprep.subr.mxu0 0.0
        %2547 = vmatpush1.msra.mxu0 0.0
        %2548 = vmatprep.subr.mxu0 0.0
        %2549 = vmatpush1.msra.mxu0 0.0
        %2550 = vmatprep.subr.mxu0 0.0
        %2551 = vmatpush1.msra.mxu0 0.0
        %2552 = vmatprep.subr.mxu0 0.0
        %2553 = vmatpush1.msra.mxu0 0.0
        %2554 = vmatprep.subr.mxu0 0.0
        %2555 = vmatpush1.msra.mxu0 0.0
        %2556 = vmatprep.subr.mxu0 0.0
        %2557 = vmatpush1.msra.mxu0 0.0
        %2558 = vmatprep.subr.mxu0 0.0
        %2559 = vmatpush1.msra.mxu0 %v2450
        %2560 = vmatprep.subr.mxu0 0.0
        %2561 = vmatpush2.msra.mxu0 0.0
        %2562 = vmatprep.subr.mxu0 0.0
        %2563 = vmatpush2.msra.mxu0 0.0
        %2564 = vmatprep.subr.mxu0 0.0
        %2565 = vmatpush2.msra.mxu0 0.0
        %2566 = vmatprep.subr.mxu0 0.0
        %2567 = vmatpush2.msra.mxu0 0.0
        %2568 = vmatprep.subr.mxu0 0.0
        %2569 = vmatpush2.msra.mxu0 0.0
        %2570 = vmatprep.subr.mxu0 0.0
        %2571 = vmatpush2.msra.mxu0 0.0
        %2572 = vmatprep.subr.mxu0 0.0
        %2573 = vmatpush2.msra.mxu0 0.0
        %2574 = vmatprep.subr.mxu0 0.0
        %2575 = vmatpush2.msra.mxu0 0.0
        %2576 = vmatprep.subr.mxu0 0.0
        %2577 = vmatpush2.msra.mxu0 0.0
        %2578 = vmatprep.subr.mxu0 0.0
        %2579 = vmatpush2.msra.mxu0 0.0
        %2580 = vmatprep.subr.mxu0 0.0
        %2581 = vmatpush2.msra.mxu0 0.0
        %2582 = vmatprep.subr.mxu0 0.0
        %2583 = vmatpush2.msra.mxu0 0.0
        %2584 = vmatprep.subr.mxu0 0.0
        %2585 = vmatpush2.msra.mxu0 0.0
        %2586 = vmatprep.subr.mxu0 0.0
        %2587 = vmatpush2.msra.mxu0 0.0
        %2588 = vmatprep.subr.mxu0 0.0
        %2589 = vmatpush2.msra.mxu0 0.0
        %2590 = vmatprep.subr.mxu0 0.0
        %2591 = vmatpush2.msra.mxu0 0.0
        %2592 = vmatprep.mubr.f32.mxu0 0.0
        %2593 = vmatmul.mubr.f32.gmra.mxu0 %v2455
        %v2594 = vpop.f32.mrf.mxu0
        %v2595 = vadd.f32 0.0, %v2594
        %v2596 = vpop.f32.mrf.mxu0
        %2597 = vdwg.mxu0
        %v2598 = vadd.f32 %v2435, %v2524
        %v2599 = vadd.f32 %v2436, %v2526
        %v2600 = vadd.f32 %v2437, %v2595
        %s2601 = scalar_lea.vmem %s3, 40
        %v2602 = vld [vmem:[%s2601] sm:$0xff]
        %2603 = vrot.lane.b32.xlu0 %v1799, 108
        %v2604 = vpop.permute.xlu0 %2603
        %2605 = vrot.lane.b32.xlu0 %v1800, 108
        %v2606 = vpop.permute.xlu0 %2605
        %2607 = vrot.lane.b32.xlu0 %v1801, 108
        %v2608 = vpop.permute.xlu0 %2607
        %2609 = vrot.lane.b32.xlu0 %v1802, 108
        %v2610 = vpop.permute.xlu0 %2609
        %v2611 = vsel %vm1095, %v2604, %v2606
        %v2612 = vsel %vm1095, %v2606, %v2608
        %v2613 = vsel %vm1095, %v2608, %v2610
        %v2618 = vsel %vm282, %v2602, 0
        %2620 = vmatprep.subr.mxu0 0.0
        %2621 = vmatpush1.msra.mxu0 0.0
        %2622 = vmatprep.subr.mxu0 0.0
        %2623 = vmatpush1.msra.mxu0 0.0
        %2624 = vmatprep.subr.mxu0 0.0
        %2625 = vmatpush1.msra.mxu0 0.0
        %2626 = vmatprep.subr.mxu0 0.0
        %2627 = vmatpush1.msra.mxu0 0.0
        %2628 = vmatprep.subr.mxu0 0.0
        %2629 = vmatpush1.msra.mxu0 0.0
        %2630 = vmatprep.subr.mxu0 0.0
        %2631 = vmatpush1.msra.mxu0 0.0
        %2632 = vmatprep.subr.mxu0 0.0
        %2633 = vmatpush1.msra.mxu0 0.0
        %2634 = vmatprep.subr.mxu0 0.0
        %2635 = vmatpush1.msra.mxu0 0.0
        %2636 = vmatprep.subr.mxu0 0.0
        %2637 = vmatpush1.msra.mxu0 0.0
        %2638 = vmatprep.subr.mxu0 0.0
        %2639 = vmatpush1.msra.mxu0 0.0
        %2640 = vmatprep.subr.mxu0 0.0
        %2641 = vmatpush1.msra.mxu0 0.0
        %2642 = vmatprep.subr.mxu0 0.0
        %2643 = vmatpush1.msra.mxu0 0.0
        %2644 = vmatprep.subr.mxu0 0.0
        %2645 = vmatpush1.msra.mxu0 0.0
        %2646 = vmatprep.subr.mxu0 0.0
        %2647 = vmatpush1.msra.mxu0 0.0
        %2648 = vmatprep.subr.mxu0 0.0
        %2649 = vmatpush1.msra.mxu0 0.0
        %2650 = vmatprep.subr.mxu0 %v2612
        %2651 = vmatpush1.msra.mxu0 %v2611
        %2652 = vmatprep.subr.mxu0 0.0
        %2653 = vmatpush2.msra.mxu0 0.0
        %2654 = vmatprep.subr.mxu0 0.0
        %2655 = vmatpush2.msra.mxu0 0.0
        %2656 = vmatprep.subr.mxu0 0.0
        %2657 = vmatpush2.msra.mxu0 0.0
        %2658 = vmatprep.subr.mxu0 0.0
        %2659 = vmatpush2.msra.mxu0 0.0
        %2660 = vmatprep.subr.mxu0 0.0
        %2661 = vmatpush2.msra.mxu0 0.0
        %2662 = vmatprep.subr.mxu0 0.0
        %2663 = vmatpush2.msra.mxu0 0.0
        %2664 = vmatprep.subr.mxu0 0.0
        %2665 = vmatpush2.msra.mxu0 0.0
        %2666 = vmatprep.subr.mxu0 0.0
        %2667 = vmatpush2.msra.mxu0 0.0
        %2668 = vmatprep.subr.mxu0 0.0
        %2669 = vmatpush2.msra.mxu0 0.0
        %2670 = vmatprep.subr.mxu0 0.0
        %2671 = vmatpush2.msra.mxu0 0.0
        %2672 = vmatprep.subr.mxu0 0.0
        %2673 = vmatpush2.msra.mxu0 0.0
        %2674 = vmatprep.subr.mxu0 0.0
        %2675 = vmatpush2.msra.mxu0 0.0
        %2676 = vmatprep.subr.mxu0 0.0
        %2677 = vmatpush2.msra.mxu0 0.0
        %2678 = vmatprep.subr.mxu0 0.0
        %2679 = vmatpush2.msra.mxu0 0.0
        %2680 = vmatprep.subr.mxu0 0.0
        %2681 = vmatpush2.msra.mxu0 0.0
        %2682 = vmatprep.subr.mxu0 0.0
        %2683 = vmatpush2.msra.mxu0 0.0
        %2684 = vmatprep.mubr.f32.mxu0 0.0
        %2685 = vmatmul.mubr.f32.gmra.mxu0 %v2618
        %v2686 = vpop.f32.mrf.mxu0
        %v2687 = vadd.f32 0.0, %v2686
        %v2688 = vpop.f32.mrf.mxu0
        %v2689 = vadd.f32 0.0, %v2688
        %2690 = vdwg.mxu0
        %2691 = vmatprep.subr.mxu0 0.0
        %2692 = vmatpush1.msra.mxu0 0.0
        %2693 = vmatprep.subr.mxu0 0.0
        %2694 = vmatpush1.msra.mxu0 0.0
        %2695 = vmatprep.subr.mxu0 0.0
        %2696 = vmatpush1.msra.mxu0 0.0
        %2697 = vmatprep.subr.mxu0 0.0
        %2698 = vmatpush1.msra.mxu0 0.0
        %2699 = vmatprep.subr.mxu0 0.0
        %2700 = vmatpush1.msra.mxu0 0.0
        %2701 = vmatprep.subr.mxu0 0.0
        %2702 = vmatpush1.msra.mxu0 0.0
        %2703 = vmatprep.subr.mxu0 0.0
        %2704 = vmatpush1.msra.mxu0 0.0
        %2705 = vmatprep.subr.mxu0 0.0
        %2706 = vmatpush1.msra.mxu0 0.0
        %2707 = vmatprep.subr.mxu0 0.0
        %2708 = vmatpush1.msra.mxu0 0.0
        %2709 = vmatprep.subr.mxu0 0.0
        %2710 = vmatpush1.msra.mxu0 0.0
        %2711 = vmatprep.subr.mxu0 0.0
        %2712 = vmatpush1.msra.mxu0 0.0
        %2713 = vmatprep.subr.mxu0 0.0
        %2714 = vmatpush1.msra.mxu0 0.0
        %2715 = vmatprep.subr.mxu0 0.0
        %2716 = vmatpush1.msra.mxu0 0.0
        %2717 = vmatprep.subr.mxu0 0.0
        %2718 = vmatpush1.msra.mxu0 0.0
        %2719 = vmatprep.subr.mxu0 0.0
        %2720 = vmatpush1.msra.mxu0 0.0
        %2721 = vmatprep.subr.mxu0 0.0
        %2722 = vmatpush1.msra.mxu0 %v2613
        %2723 = vmatprep.subr.mxu0 0.0
        %2724 = vmatpush2.msra.mxu0 0.0
        %2725 = vmatprep.subr.mxu0 0.0
        %2726 = vmatpush2.msra.mxu0 0.0
        %2727 = vmatprep.subr.mxu0 0.0
        %2728 = vmatpush2.msra.mxu0 0.0
        %2729 = vmatprep.subr.mxu0 0.0
        %2730 = vmatpush2.msra.mxu0 0.0
        %2731 = vmatprep.subr.mxu0 0.0
        %2732 = vmatpush2.msra.mxu0 0.0
        %2733 = vmatprep.subr.mxu0 0.0
        %2734 = vmatpush2.msra.mxu0 0.0
        %2735 = vmatprep.subr.mxu0 0.0
        %2736 = vmatpush2.msra.mxu0 0.0
        %2737 = vmatprep.subr.mxu0 0.0
        %2738 = vmatpush2.msra.mxu0 0.0
        %2739 = vmatprep.subr.mxu0 0.0
        %2740 = vmatpush2.msra.mxu0 0.0
        %2741 = vmatprep.subr.mxu0 0.0
        %2742 = vmatpush2.msra.mxu0 0.0
        %2743 = vmatprep.subr.mxu0 0.0
        %2744 = vmatpush2.msra.mxu0 0.0
        %2745 = vmatprep.subr.mxu0 0.0
        %2746 = vmatpush2.msra.mxu0 0.0
        %2747 = vmatprep.subr.mxu0 0.0
        %2748 = vmatpush2.msra.mxu0 0.0
        %2749 = vmatprep.subr.mxu0 0.0
        %2750 = vmatpush2.msra.mxu0 0.0
        %2751 = vmatprep.subr.mxu0 0.0
        %2752 = vmatpush2.msra.mxu0 0.0
        %2753 = vmatprep.subr.mxu0 0.0
        %2754 = vmatpush2.msra.mxu0 0.0
        %2755 = vmatprep.mubr.f32.mxu0 0.0
        %2756 = vmatmul.mubr.f32.gmra.mxu0 %v2618
        %v2757 = vpop.f32.mrf.mxu0
        %v2758 = vadd.f32 0.0, %v2757
        %v2759 = vpop.f32.mrf.mxu0
        %2760 = vdwg.mxu0
        %v2761 = vadd.f32 %v2598, %v2687
        %v2762 = vadd.f32 %v2599, %v2689
        %v2763 = vadd.f32 %v2600, %v2758
        %s2764 = scalar_lea.vmem %s3, 48
        %v2765 = vld [vmem:[%s2764] sm:$0xff]
        %2766 = vrot.lane.b32.xlu0 %v1799, 92
        %v2767 = vpop.permute.xlu0 %2766
        %2768 = vrot.lane.b32.xlu0 %v1800, 92
        %v2769 = vpop.permute.xlu0 %2768
        %2770 = vrot.lane.b32.xlu0 %v1801, 92
        %v2771 = vpop.permute.xlu0 %2770
        %2772 = vrot.lane.b32.xlu0 %v1802, 92
        %v2773 = vpop.permute.xlu0 %2772
        %v2774 = vsel %vm1265, %v2767, %v2769
        %v2775 = vsel %vm1265, %v2769, %v2771
        %v2776 = vsel %vm1265, %v2771, %v2773
        %v2781 = vsel %vm282, %v2765, 0
        %2783 = vmatprep.subr.mxu0 0.0
        %2784 = vmatpush1.msra.mxu0 0.0
        %2785 = vmatprep.subr.mxu0 0.0
        %2786 = vmatpush1.msra.mxu0 0.0
        %2787 = vmatprep.subr.mxu0 0.0
        %2788 = vmatpush1.msra.mxu0 0.0
        %2789 = vmatprep.subr.mxu0 0.0
        %2790 = vmatpush1.msra.mxu0 0.0
        %2791 = vmatprep.subr.mxu0 0.0
        %2792 = vmatpush1.msra.mxu0 0.0
        %2793 = vmatprep.subr.mxu0 0.0
        %2794 = vmatpush1.msra.mxu0 0.0
        %2795 = vmatprep.subr.mxu0 0.0
        %2796 = vmatpush1.msra.mxu0 0.0
        %2797 = vmatprep.subr.mxu0 0.0
        %2798 = vmatpush1.msra.mxu0 0.0
        %2799 = vmatprep.subr.mxu0 0.0
        %2800 = vmatpush1.msra.mxu0 0.0
        %2801 = vmatprep.subr.mxu0 0.0
        %2802 = vmatpush1.msra.mxu0 0.0
        %2803 = vmatprep.subr.mxu0 0.0
        %2804 = vmatpush1.msra.mxu0 0.0
        %2805 = vmatprep.subr.mxu0 0.0
        %2806 = vmatpush1.msra.mxu0 0.0
        %2807 = vmatprep.subr.mxu0 0.0
        %2808 = vmatpush1.msra.mxu0 0.0
        %2809 = vmatprep.subr.mxu0 0.0
        %2810 = vmatpush1.msra.mxu0 0.0
        %2811 = vmatprep.subr.mxu0 0.0
        %2812 = vmatpush1.msra.mxu0 0.0
        %2813 = vmatprep.subr.mxu0 %v2775
        %2814 = vmatpush1.msra.mxu0 %v2774
        %2815 = vmatprep.subr.mxu0 0.0
        %2816 = vmatpush2.msra.mxu0 0.0
        %2817 = vmatprep.subr.mxu0 0.0
        %2818 = vmatpush2.msra.mxu0 0.0
        %2819 = vmatprep.subr.mxu0 0.0
        %2820 = vmatpush2.msra.mxu0 0.0
        %2821 = vmatprep.subr.mxu0 0.0
        %2822 = vmatpush2.msra.mxu0 0.0
        %2823 = vmatprep.subr.mxu0 0.0
        %2824 = vmatpush2.msra.mxu0 0.0
        %2825 = vmatprep.subr.mxu0 0.0
        %2826 = vmatpush2.msra.mxu0 0.0
        %2827 = vmatprep.subr.mxu0 0.0
        %2828 = vmatpush2.msra.mxu0 0.0
        %2829 = vmatprep.subr.mxu0 0.0
        %2830 = vmatpush2.msra.mxu0 0.0
        %2831 = vmatprep.subr.mxu0 0.0
        %2832 = vmatpush2.msra.mxu0 0.0
        %2833 = vmatprep.subr.mxu0 0.0
        %2834 = vmatpush2.msra.mxu0 0.0
        %2835 = vmatprep.subr.mxu0 0.0
        %2836 = vmatpush2.msra.mxu0 0.0
        %2837 = vmatprep.subr.mxu0 0.0
        %2838 = vmatpush2.msra.mxu0 0.0
        %2839 = vmatprep.subr.mxu0 0.0
        %2840 = vmatpush2.msra.mxu0 0.0
        %2841 = vmatprep.subr.mxu0 0.0
        %2842 = vmatpush2.msra.mxu0 0.0
        %2843 = vmatprep.subr.mxu0 0.0
        %2844 = vmatpush2.msra.mxu0 0.0
        %2845 = vmatprep.subr.mxu0 0.0
        %2846 = vmatpush2.msra.mxu0 0.0
        %2847 = vmatprep.mubr.f32.mxu0 0.0
        %2848 = vmatmul.mubr.f32.gmra.mxu0 %v2781
        %v2849 = vpop.f32.mrf.mxu0
        %v2850 = vadd.f32 0.0, %v2849
        %v2851 = vpop.f32.mrf.mxu0
        %v2852 = vadd.f32 0.0, %v2851
        %2853 = vdwg.mxu0
        %2854 = vmatprep.subr.mxu0 0.0
        %2855 = vmatpush1.msra.mxu0 0.0
        %2856 = vmatprep.subr.mxu0 0.0
        %2857 = vmatpush1.msra.mxu0 0.0
        %2858 = vmatprep.subr.mxu0 0.0
        %2859 = vmatpush1.msra.mxu0 0.0
        %2860 = vmatprep.subr.mxu0 0.0
        %2861 = vmatpush1.msra.mxu0 0.0
        %2862 = vmatprep.subr.mxu0 0.0
        %2863 = vmatpush1.msra.mxu0 0.0
        %2864 = vmatprep.subr.mxu0 0.0
        %2865 = vmatpush1.msra.mxu0 0.0
        %2866 = vmatprep.subr.mxu0 0.0
        %2867 = vmatpush1.msra.mxu0 0.0
        %2868 = vmatprep.subr.mxu0 0.0
        %2869 = vmatpush1.msra.mxu0 0.0
        %2870 = vmatprep.subr.mxu0 0.0
        %2871 = vmatpush1.msra.mxu0 0.0
        %2872 = vmatprep.subr.mxu0 0.0
        %2873 = vmatpush1.msra.mxu0 0.0
        %2874 = vmatprep.subr.mxu0 0.0
        %2875 = vmatpush1.msra.mxu0 0.0
        %2876 = vmatprep.subr.mxu0 0.0
        %2877 = vmatpush1.msra.mxu0 0.0
        %2878 = vmatprep.subr.mxu0 0.0
        %2879 = vmatpush1.msra.mxu0 0.0
        %2880 = vmatprep.subr.mxu0 0.0
        %2881 = vmatpush1.msra.mxu0 0.0
        %2882 = vmatprep.subr.mxu0 0.0
        %2883 = vmatpush1.msra.mxu0 0.0
        %2884 = vmatprep.subr.mxu0 0.0
        %2885 = vmatpush1.msra.mxu0 %v2776
        %2886 = vmatprep.subr.mxu0 0.0
        %2887 = vmatpush2.msra.mxu0 0.0
        %2888 = vmatprep.subr.mxu0 0.0
        %2889 = vmatpush2.msra.mxu0 0.0
        %2890 = vmatprep.subr.mxu0 0.0
        %2891 = vmatpush2.msra.mxu0 0.0
        %2892 = vmatprep.subr.mxu0 0.0
        %2893 = vmatpush2.msra.mxu0 0.0
        %2894 = vmatprep.subr.mxu0 0.0
        %2895 = vmatpush2.msra.mxu0 0.0
        %2896 = vmatprep.subr.mxu0 0.0
        %2897 = vmatpush2.msra.mxu0 0.0
        %2898 = vmatprep.subr.mxu0 0.0
        %2899 = vmatpush2.msra.mxu0 0.0
        %2900 = vmatprep.subr.mxu0 0.0
        %2901 = vmatpush2.msra.mxu0 0.0
        %2902 = vmatprep.subr.mxu0 0.0
        %2903 = vmatpush2.msra.mxu0 0.0
        %2904 = vmatprep.subr.mxu0 0.0
        %2905 = vmatpush2.msra.mxu0 0.0
        %2906 = vmatprep.subr.mxu0 0.0
        %2907 = vmatpush2.msra.mxu0 0.0
        %2908 = vmatprep.subr.mxu0 0.0
        %2909 = vmatpush2.msra.mxu0 0.0
        %2910 = vmatprep.subr.mxu0 0.0
        %2911 = vmatpush2.msra.mxu0 0.0
        %2912 = vmatprep.subr.mxu0 0.0
        %2913 = vmatpush2.msra.mxu0 0.0
        %2914 = vmatprep.subr.mxu0 0.0
        %2915 = vmatpush2.msra.mxu0 0.0
        %2916 = vmatprep.subr.mxu0 0.0
        %2917 = vmatpush2.msra.mxu0 0.0
        %2918 = vmatprep.mubr.f32.mxu0 0.0
        %2919 = vmatmul.mubr.f32.gmra.mxu0 %v2781
        %v2920 = vpop.f32.mrf.mxu0
        %v2921 = vadd.f32 0.0, %v2920
        %v2922 = vpop.f32.mrf.mxu0
        %2923 = vdwg.mxu0
        %v2924 = vadd.f32 %v2761, %v2850
        %v2925 = vadd.f32 %v2762, %v2852
        %v2926 = vadd.f32 %v2763, %v2921
        %s2927 = scalar_lea.vmem %s3, 56
        %v2928 = vld [vmem:[%s2927] sm:$0xff]
        %2929 = vrot.lane.b32.xlu0 %v1799, 91
        %v2930 = vpop.permute.xlu0 %2929
        %2931 = vrot.lane.b32.xlu0 %v1800, 91
        %v2932 = vpop.permute.xlu0 %2931
        %2933 = vrot.lane.b32.xlu0 %v1801, 91
        %v2934 = vpop.permute.xlu0 %2933
        %2935 = vrot.lane.b32.xlu0 %v1802, 91
        %v2936 = vpop.permute.xlu0 %2935
        %v2937 = vsel %vm1435, %v2930, %v2932
        %v2938 = vsel %vm1435, %v2932, %v2934
        %v2939 = vsel %vm1435, %v2934, %v2936
        %v2944 = vsel %vm282, %v2928, 0
        %2946 = vmatprep.subr.mxu0 0.0
        %2947 = vmatpush1.msra.mxu0 0.0
        %2948 = vmatprep.subr.mxu0 0.0
        %2949 = vmatpush1.msra.mxu0 0.0
        %2950 = vmatprep.subr.mxu0 0.0
        %2951 = vmatpush1.msra.mxu0 0.0
        %2952 = vmatprep.subr.mxu0 0.0
        %2953 = vmatpush1.msra.mxu0 0.0
        %2954 = vmatprep.subr.mxu0 0.0
        %2955 = vmatpush1.msra.mxu0 0.0
        %2956 = vmatprep.subr.mxu0 0.0
        %2957 = vmatpush1.msra.mxu0 0.0
        %2958 = vmatprep.subr.mxu0 0.0
        %2959 = vmatpush1.msra.mxu0 0.0
        %2960 = vmatprep.subr.mxu0 0.0
        %2961 = vmatpush1.msra.mxu0 0.0
        %2962 = vmatprep.subr.mxu0 0.0
        %2963 = vmatpush1.msra.mxu0 0.0
        %2964 = vmatprep.subr.mxu0 0.0
        %2965 = vmatpush1.msra.mxu0 0.0
        %2966 = vmatprep.subr.mxu0 0.0
        %2967 = vmatpush1.msra.mxu0 0.0
        %2968 = vmatprep.subr.mxu0 0.0
        %2969 = vmatpush1.msra.mxu0 0.0
        %2970 = vmatprep.subr.mxu0 0.0
        %2971 = vmatpush1.msra.mxu0 0.0
        %2972 = vmatprep.subr.mxu0 0.0
        %2973 = vmatpush1.msra.mxu0 0.0
        %2974 = vmatprep.subr.mxu0 0.0
        %2975 = vmatpush1.msra.mxu0 0.0
        %2976 = vmatprep.subr.mxu0 %v2938
        %2977 = vmatpush1.msra.mxu0 %v2937
        %2978 = vmatprep.subr.mxu0 0.0
        %2979 = vmatpush2.msra.mxu0 0.0
        %2980 = vmatprep.subr.mxu0 0.0
        %2981 = vmatpush2.msra.mxu0 0.0
        %2982 = vmatprep.subr.mxu0 0.0
        %2983 = vmatpush2.msra.mxu0 0.0
        %2984 = vmatprep.subr.mxu0 0.0
        %2985 = vmatpush2.msra.mxu0 0.0
        %2986 = vmatprep.subr.mxu0 0.0
        %2987 = vmatpush2.msra.mxu0 0.0
        %2988 = vmatprep.subr.mxu0 0.0
        %2989 = vmatpush2.msra.mxu0 0.0
        %2990 = vmatprep.subr.mxu0 0.0
        %2991 = vmatpush2.msra.mxu0 0.0
        %2992 = vmatprep.subr.mxu0 0.0
        %2993 = vmatpush2.msra.mxu0 0.0
        %2994 = vmatprep.subr.mxu0 0.0
        %2995 = vmatpush2.msra.mxu0 0.0
        %2996 = vmatprep.subr.mxu0 0.0
        %2997 = vmatpush2.msra.mxu0 0.0
        %2998 = vmatprep.subr.mxu0 0.0
        %2999 = vmatpush2.msra.mxu0 0.0
        %3000 = vmatprep.subr.mxu0 0.0
        %3001 = vmatpush2.msra.mxu0 0.0
        %3002 = vmatprep.subr.mxu0 0.0
        %3003 = vmatpush2.msra.mxu0 0.0
        %3004 = vmatprep.subr.mxu0 0.0
        %3005 = vmatpush2.msra.mxu0 0.0
        %3006 = vmatprep.subr.mxu0 0.0
        %3007 = vmatpush2.msra.mxu0 0.0
        %3008 = vmatprep.subr.mxu0 0.0
        %3009 = vmatpush2.msra.mxu0 0.0
        %3010 = vmatprep.mubr.f32.mxu0 0.0
        %3011 = vmatmul.mubr.f32.gmra.mxu0 %v2944
        %v3012 = vpop.f32.mrf.mxu0
        %v3013 = vadd.f32 0.0, %v3012
        %v3014 = vpop.f32.mrf.mxu0
        %v3015 = vadd.f32 0.0, %v3014
        %3016 = vdwg.mxu0
        %3017 = vmatprep.subr.mxu0 0.0
        %3018 = vmatpush1.msra.mxu0 0.0
        %3019 = vmatprep.subr.mxu0 0.0
        %3020 = vmatpush1.msra.mxu0 0.0
        %3021 = vmatprep.subr.mxu0 0.0
        %3022 = vmatpush1.msra.mxu0 0.0
        %3023 = vmatprep.subr.mxu0 0.0
        %3024 = vmatpush1.msra.mxu0 0.0
        %3025 = vmatprep.subr.mxu0 0.0
        %3026 = vmatpush1.msra.mxu0 0.0
        %3027 = vmatprep.subr.mxu0 0.0
        %3028 = vmatpush1.msra.mxu0 0.0
        %3029 = vmatprep.subr.mxu0 0.0
        %3030 = vmatpush1.msra.mxu0 0.0
        %3031 = vmatprep.subr.mxu0 0.0
        %3032 = vmatpush1.msra.mxu0 0.0
        %3033 = vmatprep.subr.mxu0 0.0
        %3034 = vmatpush1.msra.mxu0 0.0
        %3035 = vmatprep.subr.mxu0 0.0
        %3036 = vmatpush1.msra.mxu0 0.0
        %3037 = vmatprep.subr.mxu0 0.0
        %3038 = vmatpush1.msra.mxu0 0.0
        %3039 = vmatprep.subr.mxu0 0.0
        %3040 = vmatpush1.msra.mxu0 0.0
        %3041 = vmatprep.subr.mxu0 0.0
        %3042 = vmatpush1.msra.mxu0 0.0
        %3043 = vmatprep.subr.mxu0 0.0
        %3044 = vmatpush1.msra.mxu0 0.0
        %3045 = vmatprep.subr.mxu0 0.0
        %3046 = vmatpush1.msra.mxu0 0.0
        %3047 = vmatprep.subr.mxu0 0.0
        %3048 = vmatpush1.msra.mxu0 %v2939
        %3049 = vmatprep.subr.mxu0 0.0
        %3050 = vmatpush2.msra.mxu0 0.0
        %3051 = vmatprep.subr.mxu0 0.0
        %3052 = vmatpush2.msra.mxu0 0.0
        %3053 = vmatprep.subr.mxu0 0.0
        %3054 = vmatpush2.msra.mxu0 0.0
        %3055 = vmatprep.subr.mxu0 0.0
        %3056 = vmatpush2.msra.mxu0 0.0
        %3057 = vmatprep.subr.mxu0 0.0
        %3058 = vmatpush2.msra.mxu0 0.0
        %3059 = vmatprep.subr.mxu0 0.0
        %3060 = vmatpush2.msra.mxu0 0.0
        %3061 = vmatprep.subr.mxu0 0.0
        %3062 = vmatpush2.msra.mxu0 0.0
        %3063 = vmatprep.subr.mxu0 0.0
        %3064 = vmatpush2.msra.mxu0 0.0
        %3065 = vmatprep.subr.mxu0 0.0
        %3066 = vmatpush2.msra.mxu0 0.0
        %3067 = vmatprep.subr.mxu0 0.0
        %3068 = vmatpush2.msra.mxu0 0.0
        %3069 = vmatprep.subr.mxu0 0.0
        %3070 = vmatpush2.msra.mxu0 0.0
        %3071 = vmatprep.subr.mxu0 0.0
        %3072 = vmatpush2.msra.mxu0 0.0
        %3073 = vmatprep.subr.mxu0 0.0
        %3074 = vmatpush2.msra.mxu0 0.0
        %3075 = vmatprep.subr.mxu0 0.0
        %3076 = vmatpush2.msra.mxu0 0.0
        %3077 = vmatprep.subr.mxu0 0.0
        %3078 = vmatpush2.msra.mxu0 0.0
        %3079 = vmatprep.subr.mxu0 0.0
        %3080 = vmatpush2.msra.mxu0 0.0
        %3081 = vmatprep.mubr.f32.mxu0 0.0
        %3082 = vmatmul.mubr.f32.gmra.mxu0 %v2944
        %v3083 = vpop.f32.mrf.mxu0
        %v3084 = vadd.f32 0.0, %v3083
        %v3085 = vpop.f32.mrf.mxu0
        %3086 = vdwg.mxu0
        %v3087 = vadd.f32 %v2924, %v3013
        %v3088 = vadd.f32 %v2925, %v3015
        %v3089 = vadd.f32 %v2926, %v3084
        %s3090 = scalar_lea.vmem %s3, 64
        %v3091 = vld [vmem:[%s3090] sm:$0xff]
        %3092 = vrot.lane.b32.xlu0 %v1799, 90
        %v3093 = vpop.permute.xlu0 %3092
        %3094 = vrot.lane.b32.xlu0 %v1800, 90
        %v3095 = vpop.permute.xlu0 %3094
        %3096 = vrot.lane.b32.xlu0 %v1801, 90
        %v3097 = vpop.permute.xlu0 %3096
        %3098 = vrot.lane.b32.xlu0 %v1802, 90
        %v3099 = vpop.permute.xlu0 %3098
        %v3100 = vsel %vm1605, %v3093, %v3095
        %v3101 = vsel %vm1605, %v3095, %v3097
        %v3102 = vsel %vm1605, %v3097, %v3099
        %v3107 = vsel %vm282, %v3091, 0
        %3109 = vmatprep.subr.mxu0 0.0
        %3110 = vmatpush1.msra.mxu0 0.0
        %3111 = vmatprep.subr.mxu0 0.0
        %3112 = vmatpush1.msra.mxu0 0.0
        %3113 = vmatprep.subr.mxu0 0.0
        %3114 = vmatpush1.msra.mxu0 0.0
        %3115 = vmatprep.subr.mxu0 0.0
        %3116 = vmatpush1.msra.mxu0 0.0
        %3117 = vmatprep.subr.mxu0 0.0
        %3118 = vmatpush1.msra.mxu0 0.0
        %3119 = vmatprep.subr.mxu0 0.0
        %3120 = vmatpush1.msra.mxu0 0.0
        %3121 = vmatprep.subr.mxu0 0.0
        %3122 = vmatpush1.msra.mxu0 0.0
        %3123 = vmatprep.subr.mxu0 0.0
        %3124 = vmatpush1.msra.mxu0 0.0
        %3125 = vmatprep.subr.mxu0 0.0
        %3126 = vmatpush1.msra.mxu0 0.0
        %3127 = vmatprep.subr.mxu0 0.0
        %3128 = vmatpush1.msra.mxu0 0.0
        %3129 = vmatprep.subr.mxu0 0.0
        %3130 = vmatpush1.msra.mxu0 0.0
        %3131 = vmatprep.subr.mxu0 0.0
        %3132 = vmatpush1.msra.mxu0 0.0
        %3133 = vmatprep.subr.mxu0 0.0
        %3134 = vmatpush1.msra.mxu0 0.0
        %3135 = vmatprep.subr.mxu0 0.0
        %3136 = vmatpush1.msra.mxu0 0.0
        %3137 = vmatprep.subr.mxu0 0.0
        %3138 = vmatpush1.msra.mxu0 0.0
        %3139 = vmatprep.subr.mxu0 %v3101
        %3140 = vmatpush1.msra.mxu0 %v3100
        %3141 = vmatprep.subr.mxu0 0.0
        %3142 = vmatpush2.msra.mxu0 0.0
        %3143 = vmatprep.subr.mxu0 0.0
        %3144 = vmatpush2.msra.mxu0 0.0
        %3145 = vmatprep.subr.mxu0 0.0
        %3146 = vmatpush2.msra.mxu0 0.0
        %3147 = vmatprep.subr.mxu0 0.0
        %3148 = vmatpush2.msra.mxu0 0.0
        %3149 = vmatprep.subr.mxu0 0.0
        %3150 = vmatpush2.msra.mxu0 0.0
        %3151 = vmatprep.subr.mxu0 0.0
        %3152 = vmatpush2.msra.mxu0 0.0
        %3153 = vmatprep.subr.mxu0 0.0
        %3154 = vmatpush2.msra.mxu0 0.0
        %3155 = vmatprep.subr.mxu0 0.0
        %3156 = vmatpush2.msra.mxu0 0.0
        %3157 = vmatprep.subr.mxu0 0.0
        %3158 = vmatpush2.msra.mxu0 0.0
        %3159 = vmatprep.subr.mxu0 0.0
        %3160 = vmatpush2.msra.mxu0 0.0
        %3161 = vmatprep.subr.mxu0 0.0
        %3162 = vmatpush2.msra.mxu0 0.0
        %3163 = vmatprep.subr.mxu0 0.0
        %3164 = vmatpush2.msra.mxu0 0.0
        %3165 = vmatprep.subr.mxu0 0.0
        %3166 = vmatpush2.msra.mxu0 0.0
        %3167 = vmatprep.subr.mxu0 0.0
        %3168 = vmatpush2.msra.mxu0 0.0
        %3169 = vmatprep.subr.mxu0 0.0
        %3170 = vmatpush2.msra.mxu0 0.0
        %3171 = vmatprep.subr.mxu0 0.0
        %3172 = vmatpush2.msra.mxu0 0.0
        %3173 = vmatprep.mubr.f32.mxu0 0.0
        %3174 = vmatmul.mubr.f32.gmra.mxu0 %v3107
        %v3175 = vpop.f32.mrf.mxu0
        %v3176 = vadd.f32 0.0, %v3175
        %v3177 = vpop.f32.mrf.mxu0
        %v3178 = vadd.f32 0.0, %v3177
        %3179 = vdwg.mxu0
        %3180 = vmatprep.subr.mxu0 0.0
        %3181 = vmatpush1.msra.mxu0 0.0
        %3182 = vmatprep.subr.mxu0 0.0
        %3183 = vmatpush1.msra.mxu0 0.0
        %3184 = vmatprep.subr.mxu0 0.0
        %3185 = vmatpush1.msra.mxu0 0.0
        %3186 = vmatprep.subr.mxu0 0.0
        %3187 = vmatpush1.msra.mxu0 0.0
        %3188 = vmatprep.subr.mxu0 0.0
        %3189 = vmatpush1.msra.mxu0 0.0
        %3190 = vmatprep.subr.mxu0 0.0
        %3191 = vmatpush1.msra.mxu0 0.0
        %3192 = vmatprep.subr.mxu0 0.0
        %3193 = vmatpush1.msra.mxu0 0.0
        %3194 = vmatprep.subr.mxu0 0.0
        %3195 = vmatpush1.msra.mxu0 0.0
        %3196 = vmatprep.subr.mxu0 0.0
        %3197 = vmatpush1.msra.mxu0 0.0
        %3198 = vmatprep.subr.mxu0 0.0
        %3199 = vmatpush1.msra.mxu0 0.0
        %3200 = vmatprep.subr.mxu0 0.0
        %3201 = vmatpush1.msra.mxu0 0.0
        %3202 = vmatprep.subr.mxu0 0.0
        %3203 = vmatpush1.msra.mxu0 0.0
        %3204 = vmatprep.subr.mxu0 0.0
        %3205 = vmatpush1.msra.mxu0 0.0
        %3206 = vmatprep.subr.mxu0 0.0
        %3207 = vmatpush1.msra.mxu0 0.0
        %3208 = vmatprep.subr.mxu0 0.0
        %3209 = vmatpush1.msra.mxu0 0.0
        %3210 = vmatprep.subr.mxu0 0.0
        %3211 = vmatpush1.msra.mxu0 %v3102
        %3212 = vmatprep.subr.mxu0 0.0
        %3213 = vmatpush2.msra.mxu0 0.0
        %3214 = vmatprep.subr.mxu0 0.0
        %3215 = vmatpush2.msra.mxu0 0.0
        %3216 = vmatprep.subr.mxu0 0.0
        %3217 = vmatpush2.msra.mxu0 0.0
        %3218 = vmatprep.subr.mxu0 0.0
        %3219 = vmatpush2.msra.mxu0 0.0
        %3220 = vmatprep.subr.mxu0 0.0
        %3221 = vmatpush2.msra.mxu0 0.0
        %3222 = vmatprep.subr.mxu0 0.0
        %3223 = vmatpush2.msra.mxu0 0.0
        %3224 = vmatprep.subr.mxu0 0.0
        %3225 = vmatpush2.msra.mxu0 0.0
        %3226 = vmatprep.subr.mxu0 0.0
        %3227 = vmatpush2.msra.mxu0 0.0
        %3228 = vmatprep.subr.mxu0 0.0
        %3229 = vmatpush2.msra.mxu0 0.0
        %3230 = vmatprep.subr.mxu0 0.0
        %3231 = vmatpush2.msra.mxu0 0.0
        %3232 = vmatprep.subr.mxu0 0.0
        %3233 = vmatpush2.msra.mxu0 0.0
        %3234 = vmatprep.subr.mxu0 0.0
        %3235 = vmatpush2.msra.mxu0 0.0
        %3236 = vmatprep.subr.mxu0 0.0
        %3237 = vmatpush2.msra.mxu0 0.0
        %3238 = vmatprep.subr.mxu0 0.0
        %3239 = vmatpush2.msra.mxu0 0.0
        %3240 = vmatprep.subr.mxu0 0.0
        %3241 = vmatpush2.msra.mxu0 0.0
        %3242 = vmatprep.subr.mxu0 0.0
        %3243 = vmatpush2.msra.mxu0 0.0
        %3244 = vmatprep.mubr.f32.mxu0 0.0
        %3245 = vmatmul.mubr.f32.gmra.mxu0 %v3107
        %v3246 = vpop.f32.mrf.mxu0
        %v3247 = vadd.f32 0.0, %v3246
        %v3248 = vpop.f32.mrf.mxu0
        %3249 = vdwg.mxu0
        %v3250 = vadd.f32 %v3087, %v3176
        %v3251 = vadd.f32 %v3088, %v3178
        %v3252 = vadd.f32 %v3089, %v3247
        %v3253 = vld [vmem:[%s4] sm:$0xff]
        %3255 = vset.pattern.permute.xlu0 0
        %3256 = vperm.xlu0 %3255, %v3253
        %v3257 = vpop.permute.xlu0 %3256
        %v3259 = vadd.f32 %v3250, %v3257
        %v3260 = vadd.f32 %v3251, %v3257
        %v3261 = vadd.f32 %v3252, %v3257
        %v3262 = vmax.f32 %v3259, 0.0
        %v3263 = vmax.f32 %v3260, 0.0
        %v3264 = vmax.f32 %v3261, 0.0
        %3265 = vst [vmem:[%s244] sm:$0xff] %v3262
        %3266 = vst [vmem:[%s244 + $0x8] sm:$0xff] %v3263
        %3267 = vst [vmem:[%s244 + $0x10] sm:$0xff] %v3264
        %s3268 = sand.u32 %s159, 1
        %s3269 = scalar_lea.sflag [#allocation3], %s3268
        %s3270 = sand.u32 %s159, 1
        %s3271 = smul.addr %s3270, 24
        %s3272 = scalar_lea.vmem [#allocation2], %s3271
        // Predicated region
        $region45: #{tpu_custom_call.1} parent=43 // pred_check
          %p3273 = pneg %p169
        $region46: #{tpu_custom_call.1} parent=43 // pred_check_branch
          %3275 = sbr.rel (%p3273) target = $region48
        $region47: #{tpu_custom_call.1} parent=43 // pred_region
          %s3277 = ssub.s32 384, 384
          %3278 = vsyncadd %s3269, %s3277
          %s3279 = smul.addr %s20, 3
          %s3280 = smul.addr %s3279, 128
          %s3281 = scalar_lea.hbm %s6, %s3280
          %s3283 = sshll.u32 %s3272, 4
          %s3284 = int_to_ptr.vmem [resolvable:$true] %s3283
          %3286 = dma.vmem_to_hbm [thread:$0]  %s3284, 384, %s3281, %s3269
        $region48: #{tpu_custom_call.1} parent=43 // pred_fallthru
          _
      $region44: #{tpu_custom_call.1} parent=5 // pred_fallthru
        _
      %p3287 = scmp.le.s32.totalorder 2, %s15
      // Predicated region
      $region49: #{tpu_custom_call.1} parent=5 // pred_check
        %p3288 = pneg %p3287
      $region50: #{tpu_custom_call.1} parent=5 // pred_check_branch
        %3290 = sbr.rel (%p3288) target = $region52
      $region51: #{tpu_custom_call.1} parent=5 // pred_region
        %s3291 = ssub.s32 %s15, 2
        // Predicated region
        $region53: #{tpu_custom_call.1} parent=51 // pred_check
          %p3292 = pneg %p175
        $region54: #{tpu_custom_call.1} parent=51 // pred_check_branch
          %3294 = sbr.rel (%p3292) target = $region56
        $region55: #{tpu_custom_call.1} parent=51 // pred_region
          %s3295 = sand.u32 %s160, 1
          %s3296 = scalar_lea.sflag [#allocation3], %s3295
          %s3297 = sand.u32 %s160, 1
          %s3298 = smul.addr %s3297, 24
          %s3299 = scalar_lea.vmem [#allocation2], %s3298
          %3300 = dma.done %s3296, 384
        $region56: #{tpu_custom_call.1} parent=51 // pred_fallthru
          _
      $region52: #{tpu_custom_call.1} parent=5 // pred_fallthru
        _
    $region6: #{tpu_custom_call.1} parent=1 // loop_footer
      %s19 = sadd.s32 1, %s15
    $region7: #{tpu_custom_call.1} parent=1 // loop_footer_branch
      %14 = sbr.rel target = $region3
    $region8: #{tpu_custom_call.1} parent=1 // loop_exit
      _
    %3301 = vsyncpa [#allocation3], 1
    %s3302 = scalar_lea.sflag [#allocation3], 1
    %3303 = vsyncpa %s3302, 1

</llo_original>
